<compile_context>
chip_gen: v6e
topology: v6e:2x2x1
jax: 0.10.0
libtpu: 0.0.40
codegen_flags: <defaults>
</compile_context>

<pallas_src>
import functools
import math

import jax
import jax.numpy as jnp
from jax.experimental import pallas as pl
from jax.experimental.pallas import tpu as pltpu


# ---------------------------------------------------------------------------
# Kernel 1: QKV projection + rotary embedding
#   grid = (B, H // heads_per_block, S // ts); weight blocks (D, hpb*Hd) stay
#   resident across the inner seq axis.
# ---------------------------------------------------------------------------
def qkv_rope_kernel(x_ref, wq_ref, wk_ref, wv_ref, cos_ref, sin_ref,
                    q_ref, k_ref, v_ref, *, head_dim, half, heads_per_block):
    x = x_ref[...]                                                    # (ts, D) bf16
    q = jnp.dot(x, wq_ref[...], preferred_element_type=jnp.float32)  # (ts, hpb*Hd)
    k = jnp.dot(x, wk_ref[...], preferred_element_type=jnp.float32)
    v = jnp.dot(x, wv_ref[...], preferred_element_type=jnp.float32)

    cos = cos_ref[...]            # (ts, Hd) f32 : [cos | cos]
    sin = sin_ref[...]            # (ts, Hd) f32 : [-sin | sin]

    # rotate-half RoPE per head (static loop; Hd-aligned lane slices are free).
    for hh in range(heads_per_block):
        lo, hi = hh * head_dim, (hh + 1) * head_dim
        q_h = q[:, lo:hi]
        k_h = k[:, lo:hi]
        q_rot = pltpu.roll(q_h, shift=half, axis=1)                  # XLU, no MXU
        k_rot = pltpu.roll(k_h, shift=half, axis=1)
        q_ref[:, lo:hi] = (q_h * cos + q_rot * sin).astype(q_ref.dtype)
        k_ref[:, lo:hi] = (k_h * cos + k_rot * sin).astype(k_ref.dtype)
    v_ref[...] = v.astype(v_ref.dtype)


# ---------------------------------------------------------------------------
# Kernel 2: flash-style causal attention fused with the output projection
#   grid = (B, S/tq, H, S/tk); the (tq, D) output block is resident across
#   (h, kv) and accumulated in an f32 scratch, written back as bf16 once.
# ---------------------------------------------------------------------------
def attn_out_kernel(q_ref, k_ref, v_ref, wo_ref, o_ref,
                    m_ref, l_ref, acc_ref, out_acc_ref, *, tq, tk):
    h = pl.program_id(2)
    kv = pl.program_id(3)
    n_h = pl.num_programs(2)
    n_kv = pl.num_programs(3)

    q_start = pl.program_id(1) * tq
    k_start = kv * tk

    @pl.when((h == 0) & (kv == 0))
    def _init_out_acc():
        out_acc_ref[...] = jnp.zeros_like(out_acc_ref)

    @pl.when(kv == 0)
    def _init_stats():
        m_ref[...] = jnp.full(m_ref.shape, -jnp.inf, jnp.float32)
        l_ref[...] = jnp.zeros_like(l_ref)
        acc_ref[...] = jnp.zeros_like(acc_ref)

    def step(apply_mask):
        # q is pre-scaled by 1/sqrt(Hd) (folded into Wq in the wrapper).
        s = jax.lax.dot_general(q_ref[...], k_ref[...], (((1,), (1,)), ((), ())),
                                preferred_element_type=jnp.float32)   # (tq, tk)
        if apply_mask:
            row = q_start + jax.lax.broadcasted_iota(jnp.int32, (tq, tk), 0)
            col = k_start + jax.lax.broadcasted_iota(jnp.int32, (tq, tk), 1)
            s = jnp.where(col <= row, s, -1e30)
        m_prev = m_ref[...]
        m_new = jnp.maximum(m_prev, jnp.max(s, axis=-1, keepdims=True))
        alpha = jnp.exp(m_prev - m_new)
        p = jnp.exp(s - m_new)
        l_ref[...] = alpha * l_ref[...] + jnp.sum(p, axis=-1, keepdims=True)
        acc_ref[...] = alpha * acc_ref[...] + jnp.dot(
            p.astype(v_ref.dtype), v_ref[...], preferred_element_type=jnp.float32)
        m_ref[...] = m_new

    # KV tile fully at/below the causal diagonal: no mask work at all.
    @pl.when(k_start + (tk - 1) <= q_start)
    def _unmasked():
        step(apply_mask=False)

    # KV tile straddling the diagonal: build and apply the causal mask.
    @pl.when((k_start + (tk - 1) > q_start) & (k_start <= q_start + (tq - 1)))
    def _masked():
        step(apply_mask=True)

    # Tiles fully above the diagonal do no compute; their K/V DMAs are also
    # skipped because the kv index_map in the wrapper clamps the block index.

    @pl.when(kv == n_kv - 1)
    def _finalize_head():
        # TODO(synk): use approx=False here if this path ever feeds training.
        attn_h = acc_ref[...] * pl.reciprocal(l_ref[...], approx=True)  # (tq, Hd)
        out_acc_ref[...] += jnp.dot(attn_h.astype(wo_ref.dtype), wo_ref[...],
                                    preferred_element_type=jnp.float32)

    @pl.when((kv == n_kv - 1) & (h == n_h - 1))
    def _write_out():
        o_ref[...] = out_acc_ref[...].astype(o_ref.dtype)


# ---------------------------------------------------------------------------
# Wrapper (layout plumbing only: column permutation, cos/sin expansion, casts)
# ---------------------------------------------------------------------------
def attention_forward(x, wq_t, wk_t, wv_t, wo_t, cos, sin, n_heads, *,
                      ts=256, tq=128, tk=128, heads_per_block=None,
                      compute_dtype=jnp.bfloat16):
    # Tile notes (perf review):
    #   * tk=256 fills the 256-wide MXU on v6e/v7x; keep tk=128 on v5e.
    #   * tq can be raised to 256 on v6e (128 MiB VMEM); keep 128 on v7x (64 MiB).
    B, S, D = x.shape
    H = n_heads
    Hd = D // H
    half = Hd // 2
    scale = 1.0 / math.sqrt(Hd)

    ts, tq, tk = min(ts, S), min(tq, S), min(tk, S)
    assert S % ts == 0 and S % tq == 0 and S % tk == 0, "S must divide tile sizes"
    assert Hd % 128 == 0, "head_dim must be a multiple of 128 (lane width)"

    if heads_per_block is None:
        heads_per_block = max(1, min(H, 256 // Hd))
        while H % heads_per_block:
            heads_per_block -= 1
    hpb = heads_per_block
    HB = H // hpb
    wblk = hpb * Hd

    # per-head column permutation: interleaved (r0,i0,r1,i1,...) -> [r... | i...]
    p_idx = jnp.arange(half)
    within = jnp.concatenate([2 * p_idx, 2 * p_idx + 1])                  # (Hd,)
    col_perm = (jnp.arange(H)[:, None] * Hd + within[None, :]).reshape(-1)

    x_c = x.astype(compute_dtype)
    # Fold 1/sqrt(Hd) into Wq: RoPE is linear, so rope(scale*q) == scale*rope(q).
    wq_rh = (wq_t[:, col_perm] * scale).astype(compute_dtype)
    wk_rh = wk_t[:, col_perm].astype(compute_dtype)
    wv_c = wv_t.astype(compute_dtype)
    wo_c = wo_t.astype(compute_dtype)

    cos_rh = jnp.concatenate([cos, cos], axis=1).astype(jnp.float32)      # (S, Hd)
    sin_rh = jnp.concatenate([-sin, sin], axis=1).astype(jnp.float32)     # (S, Hd)

    # ---- kernel 1: QKV projection + RoPE ----------------------------------
    qkv_cost = pl.CostEstimate(
        flops=int(6 * B * S * D * D),
        transcendentals=0,
        bytes_accessed=int(2 * (HB * B * S * D + 3 * B * D * D + 3 * B * S * D)),
    )
    q, k, v = pl.pallas_call(
        functools.partial(qkv_rope_kernel, head_dim=Hd, half=half,
                          heads_per_block=hpb),
        out_shape=(jax.ShapeDtypeStruct((B, S, D), compute_dtype),) * 3,
        grid=(B, HB, S // ts),
        in_specs=[
            pl.BlockSpec((None, ts, D), lambda b, hb, s: (b, s, 0)),
            pl.BlockSpec((D, wblk), lambda b, hb, s: (0, hb)),
            pl.BlockSpec((D, wblk), lambda b, hb, s: (0, hb)),
            pl.BlockSpec((D, wblk), lambda b, hb, s: (0, hb)),
            pl.BlockSpec((ts, Hd), lambda b, hb, s: (s, 0)),
            pl.BlockSpec((ts, Hd), lambda b, hb, s: (s, 0)),
        ],
        out_specs=(pl.BlockSpec((None, ts, wblk), lambda b, hb, s: (b, s, hb)),) * 3,
        compiler_params=pltpu.CompilerParams(
            dimension_semantics=("parallel", "parallel", "arbitrary"),
            vmem_limit_bytes=48 * 1024 * 1024),
        cost_estimate=qkv_cost,
    )(x_c, wq_rh, wk_rh, wv_c, cos_rh, sin_rh)

    # ---- kernel 2: flash attention + output projection (fused) ------------
    def kv_block_idx(b, qi, h, kv):
        # Clamp to the last KV tile at/below the causal diagonal for this q
        # tile: fully-masked tiles repeat the previous block index, so Pallas
        # skips their HBM->VMEM DMA entirely.
        last_kv = (qi * tq + (tq - 1)) // tk
        return (b, jnp.minimum(kv, last_kv), h)

    attn_cost = pl.CostEstimate(
        flops=int(2 * B * H * S * S * Hd + 2 * B * S * D * D),
        transcendentals=int(B * H * S * S // 2),
        bytes_accessed=int(2 * 3 * B * S * D + 2 * B * S * D + 2 * D * D),
    )
    out = pl.pallas_call(
        functools.partial(attn_out_kernel, tq=tq, tk=tk),
        out_shape=jax.ShapeDtypeStruct((B, S, D), compute_dtype),
        grid=(B, S // tq, H, S // tk),
        in_specs=[
            pl.BlockSpec((None, tq, Hd), lambda b, qi, h, kv: (b, qi, h)),
            pl.BlockSpec((None, tk, Hd), kv_block_idx),
            pl.BlockSpec((None, tk, Hd), kv_block_idx),
            pl.BlockSpec((Hd, D), lambda b, qi, h, kv: (h, 0)),
        ],
        out_specs=pl.BlockSpec((None, tq, D), lambda b, qi, h, kv: (b, qi, 0)),
        scratch_shapes=[
            pltpu.VMEM((tq, 1), jnp.float32),      # running max
            pltpu.VMEM((tq, 1), jnp.float32),      # running sum
            pltpu.VMEM((tq, Hd), jnp.float32),     # per-head unnormalized attn acc
            pltpu.VMEM((tq, D), jnp.float32),      # cross-head fused-Wo accumulator
        ],
        compiler_params=pltpu.CompilerParams(
            dimension_semantics=("parallel", "parallel", "arbitrary", "arbitrary"),
            vmem_limit_bytes=48 * 1024 * 1024),
        cost_estimate=attn_cost,
    )(q, k, v, wo_c)
    return out


# ---------------------------------------------------------------------------
# Pure-JAX f32 reference matching the PyTorch forward semantics (causal prefill)
# ---------------------------------------------------------------------------
def reference_attention(x, wq_t, wk_t, wv_t, wo_t, cos, sin, n_heads):
    B, S, D = x.shape
    H = n_heads
    Hd = D // H
    xq = (x @ wq_t).reshape(B, S, H, Hd)
    xk = (x @ wk_t).reshape(B, S, H, Hd)
    xv = (x @ wv_t).reshape(B, S, H, Hd)

    def rope(t):
        tr = t[..., 0::2]
        ti = t[..., 1::2]
        c = cos[None, :, None, :]
        s = sin[None, :, None, :]
        o_r = tr * c - ti * s
        o_i = tr * s + ti * c
        return jnp.stack([o_r, o_i], axis=-1).reshape(B, S, H, Hd)

    xq = rope(xq)
    xk = rope(xk)
    q = xq.transpose(0, 2, 1, 3)
    k = xk.transpose(0, 2, 1, 3)
    v = xv.transpose(0, 2, 1, 3)
    scores = q @ jnp.swapaxes(k, -1, -2) / math.sqrt(Hd)
    row = jnp.arange(S)[:, None]
    col = jnp.arange(S)[None, :]
    mask = jnp.where(col <= row, 0.0, -1e30).astype(jnp.float32)
    p = jax.nn.softmax(scores + mask[None, None], axis=-1)
    out = (p @ v).transpose(0, 2, 1, 3).reshape(B, S, D)
    return out @ wo_t


# ---------------------------------------------------------------------------
if __name__ == "__main__":
    B, S, dim, n_heads = 2, 256, 256, 2
    head_dim = dim // n_heads

    key = jax.random.PRNGKey(0)
    kx, kq, kk, kvk, ko = jax.random.split(key, 5)

    x = jax.random.normal(kx, (B, S, dim), dtype=jnp.float32)

    # nn.Linear(dim, dim, bias=False) weights are (out, in); kernels use W.T
    wq = jax.random.normal(kq, (dim, dim), dtype=jnp.float32) * 0.05
    wk = jax.random.normal(kk, (dim, dim), dtype=jnp.float32) * 0.05
    wv = jax.random.normal(kvk, (dim, dim), dtype=jnp.float32) * 0.05
    wo = jax.random.normal(ko, (dim, dim), dtype=jnp.float32) * 0.05
    wq_t, wk_t, wv_t, wo_t = wq.T, wk.T, wv.T, wo.T

    # freqs_cis (start_pos = 0): standard LLaMA rotary frequencies
    theta = 10000.0
    freqs = 1.0 / (theta ** (jnp.arange(0, head_dim, 2, dtype=jnp.float32) / head_dim))
    t = jnp.arange(S, dtype=jnp.float32)
    angles = jnp.outer(t, freqs)                  # (S, head_dim // 2)
    cos, sin = jnp.cos(angles), jnp.sin(angles)

    out = attention_forward(x, wq_t, wk_t, wv_t, wo_t, cos, sin, n_heads)
    out = jax.block_until_ready(out)

    ref = reference_attention(x, wq_t, wk_t, wv_t, wo_t, cos, sin, n_heads)
    assert out.shape == (B, S, dim)
    # bf16 MXU inputs + bf16 output + approximate reciprocal -> loose f32 compare
    assert jnp.allclose(out.astype(jnp.float32), ref, atol=4e-2, rtol=4e-2), \
        "mismatch vs reference"

    print("KERNEL_OK")
</pallas_src>

<mosaic_0001>
module attributes {stable_mosaic.version = 11 : i64} {
  func.func @qkv_rope_kernel(%arg0: i32, %arg1: i32, %arg2: i32, %arg3: memref<1x256x256xbf16, #tpu.memory_space<vmem>>, %arg4: memref<256x256xbf16, #tpu.memory_space<vmem>>, %arg5: memref<256x256xbf16, #tpu.memory_space<vmem>>, %arg6: memref<256x256xbf16, #tpu.memory_space<vmem>>, %arg7: memref<256x128xf32, #tpu.memory_space<vmem>>, %arg8: memref<256x128xf32, #tpu.memory_space<vmem>>, %arg9: memref<1x256x256xbf16, #tpu.memory_space<vmem>>, %arg10: memref<1x256x256xbf16, #tpu.memory_space<vmem>>, %arg11: memref<1x256x256xbf16, #tpu.memory_space<vmem>>) attributes {dimension_semantics = [#tpu.dimension_semantics<parallel>, #tpu.dimension_semantics<parallel>, #tpu.dimension_semantics<arbitrary>], iteration_bounds = array<i64: 2, 1, 1>, scalar_prefetch = 0 : i64, scratch_operands = 0 : i64, tpu.core_type = #tpu.core_type<tc>, window_params = [{transform_indices = @transform_0, window_bounds = array<i64: 1, 256, 256>}, {transform_indices = @transform_1, window_bounds = array<i64: 256, 256>}, {transform_indices = @transform_2, window_bounds = array<i64: 256, 256>}, {transform_indices = @transform_3, window_bounds = array<i64: 256, 256>}, {transform_indices = @transform_4, window_bounds = array<i64: 256, 128>}, {transform_indices = @transform_5, window_bounds = array<i64: 256, 128>}, {transform_indices = @transform_6, window_bounds = array<i64: 1, 256, 256>}, {transform_indices = @transform_7, window_bounds = array<i64: 1, 256, 256>}, {transform_indices = @transform_8, window_bounds = array<i64: 1, 256, 256>}]} {
    %c0 = arith.constant 0 : index
    %c0_0 = arith.constant 0 : index
    %c0_1 = arith.constant 0 : index
    %0 = vector.load %arg3[%c0, %c0_0, %c0_1] : memref<1x256x256xbf16, #tpu.memory_space<vmem>>, vector<1x256x256xbf16>
    %1 = vector.shape_cast %0 : vector<1x256x256xbf16> to vector<256x256xbf16>
    %c0_2 = arith.constant 0 : index
    %c0_3 = arith.constant 0 : index
    %2 = vector.load %arg4[%c0_2, %c0_3] : memref<256x256xbf16, #tpu.memory_space<vmem>>, vector<256x256xbf16>
    %cst = arith.constant dense<0.000000e+00> : vector<256x256xf32>
    %3 = tpu.matmul %1, %2, %cst {dimension_numbers = #tpu.dot_dimension_numbers<[1], [0], [0], [1], [0, 0, 1, 1], [], []>} : vector<256x256xbf16>, vector<256x256xbf16>, vector<256x256xf32> -> vector<256x256xf32>
    %c0_4 = arith.constant 0 : index
    %c0_5 = arith.constant 0 : index
    %4 = vector.load %arg5[%c0_4, %c0_5] : memref<256x256xbf16, #tpu.memory_space<vmem>>, vector<256x256xbf16>
    %cst_6 = arith.constant dense<0.000000e+00> : vector<256x256xf32>
    %5 = tpu.matmul %1, %4, %cst_6 {dimension_numbers = #tpu.dot_dimension_numbers<[1], [0], [0], [1], [0, 0, 1, 1], [], []>} : vector<256x256xbf16>, vector<256x256xbf16>, vector<256x256xf32> -> vector<256x256xf32>
    %c0_7 = arith.constant 0 : index
    %c0_8 = arith.constant 0 : index
    %6 = vector.load %arg6[%c0_7, %c0_8] : memref<256x256xbf16, #tpu.memory_space<vmem>>, vector<256x256xbf16>
    %cst_9 = arith.constant dense<0.000000e+00> : vector<256x256xf32>
    %7 = tpu.matmul %1, %6, %cst_9 {dimension_numbers = #tpu.dot_dimension_numbers<[1], [0], [0], [1], [0, 0, 1, 1], [], []>} : vector<256x256xbf16>, vector<256x256xbf16>, vector<256x256xf32> -> vector<256x256xf32>
    %c0_10 = arith.constant 0 : index
    %c0_11 = arith.constant 0 : index
    %8 = vector.load %arg7[%c0_10, %c0_11] : memref<256x128xf32, #tpu.memory_space<vmem>>, vector<256x128xf32>
    %c0_12 = arith.constant 0 : index
    %c0_13 = arith.constant 0 : index
    %9 = vector.load %arg8[%c0_12, %c0_13] : memref<256x128xf32, #tpu.memory_space<vmem>>, vector<256x128xf32>
    %10 = vector.extract_strided_slice %3 {offsets = [0, 0], sizes = [256, 128], strides = [1, 1]} : vector<256x256xf32> to vector<256x128xf32>
    %11 = vector.extract_strided_slice %5 {offsets = [0, 0], sizes = [256, 128], strides = [1, 1]} : vector<256x256xf32> to vector<256x128xf32>
    %c64_i32 = arith.constant 64 : i32
    %12 = tpu.dynamic_rotate %10 by %c64_i32 dim 1 : vector<256x128xf32>, i32 -> vector<256x128xf32>
    %c64_i32_14 = arith.constant 64 : i32
    %13 = tpu.dynamic_rotate %11 by %c64_i32_14 dim 1 : vector<256x128xf32>, i32 -> vector<256x128xf32>
    %14 = arith.mulf %10, %8 : vector<256x128xf32>
    %15 = arith.mulf %12, %9 : vector<256x128xf32>
    %16 = arith.addf %14, %15 : vector<256x128xf32>
    %17 = arith.truncf %16 : vector<256x128xf32> to vector<256x128xbf16>
    %c0_15 = arith.constant 0 : index
    %c0_16 = arith.constant 0 : index
    %c0_17 = arith.constant 0 : index
    %18 = vector.load %arg9[%c0_15, %c0_16, %c0_17] : memref<1x256x256xbf16, #tpu.memory_space<vmem>>, vector<1x256x128xbf16>
    %19 = vector.shape_cast %18 : vector<1x256x128xbf16> to vector<256x128xbf16>
    %20 = vector.shape_cast %17 : vector<256x128xbf16> to vector<1x256x128xbf16>
    tpu.vector_store %arg9[%c0_15, %c0_16, %c0_17], %20 {strides = array<i32>} : memref<1x256x256xbf16, #tpu.memory_space<vmem>>, vector<1x256x128xbf16>,
    %21 = arith.mulf %11, %8 : vector<256x128xf32>
    %22 = arith.mulf %13, %9 : vector<256x128xf32>
    %23 = arith.addf %21, %22 : vector<256x128xf32>
    %24 = arith.truncf %23 : vector<256x128xf32> to vector<256x128xbf16>
    %c0_18 = arith.constant 0 : index
    %c0_19 = arith.constant 0 : index
    %c0_20 = arith.constant 0 : index
    %25 = vector.load %arg10[%c0_18, %c0_19, %c0_20] : memref<1x256x256xbf16, #tpu.memory_space<vmem>>, vector<1x256x128xbf16>
    %26 = vector.shape_cast %25 : vector<1x256x128xbf16> to vector<256x128xbf16>
    %27 = vector.shape_cast %24 : vector<256x128xbf16> to vector<1x256x128xbf16>
    tpu.vector_store %arg10[%c0_18, %c0_19, %c0_20], %27 {strides = array<i32>} : memref<1x256x256xbf16, #tpu.memory_space<vmem>>, vector<1x256x128xbf16>,
    %28 = vector.extract_strided_slice %3 {offsets = [0, 128], sizes = [256, 128], strides = [1, 1]} : vector<256x256xf32> to vector<256x128xf32>
    %29 = vector.extract_strided_slice %5 {offsets = [0, 128], sizes = [256, 128], strides = [1, 1]} : vector<256x256xf32> to vector<256x128xf32>
    %c64_i32_21 = arith.constant 64 : i32
    %30 = tpu.dynamic_rotate %28 by %c64_i32_21 dim 1 : vector<256x128xf32>, i32 -> vector<256x128xf32>
    %c64_i32_22 = arith.constant 64 : i32
    %31 = tpu.dynamic_rotate %29 by %c64_i32_22 dim 1 : vector<256x128xf32>, i32 -> vector<256x128xf32>
    %32 = arith.mulf %28, %8 : vector<256x128xf32>
    %33 = arith.mulf %30, %9 : vector<256x128xf32>
    %34 = arith.addf %32, %33 : vector<256x128xf32>
    %35 = arith.truncf %34 : vector<256x128xf32> to vector<256x128xbf16>
    %c0_23 = arith.constant 0 : index
    %c0_24 = arith.constant 0 : index
    %c128 = arith.constant 128 : index
    %36 = vector.load %arg9[%c0_23, %c0_24, %c128] : memref<1x256x256xbf16, #tpu.memory_space<vmem>>, vector<1x256x128xbf16>
    %37 = vector.shape_cast %36 : vector<1x256x128xbf16> to vector<256x128xbf16>
    %38 = vector.shape_cast %35 : vector<256x128xbf16> to vector<1x256x128xbf16>
    tpu.vector_store %arg9[%c0_23, %c0_24, %c128], %38 {strides = array<i32>} : memref<1x256x256xbf16, #tpu.memory_space<vmem>>, vector<1x256x128xbf16>,
    %39 = arith.mulf %29, %8 : vector<256x128xf32>
    %40 = arith.mulf %31, %9 : vector<256x128xf32>
    %41 = arith.addf %39, %40 : vector<256x128xf32>
    %42 = arith.truncf %41 : vector<256x128xf32> to vector<256x128xbf16>
    %c0_25 = arith.constant 0 : index
    %c0_26 = arith.constant 0 : index
    %c128_27 = arith.constant 128 : index
    %43 = vector.load %arg10[%c0_25, %c0_26, %c128_27] : memref<1x256x256xbf16, #tpu.memory_space<vmem>>, vector<1x256x128xbf16>
    %44 = vector.shape_cast %43 : vector<1x256x128xbf16> to vector<256x128xbf16>
    %45 = vector.shape_cast %42 : vector<256x128xbf16> to vector<1x256x128xbf16>
    tpu.vector_store %arg10[%c0_25, %c0_26, %c128_27], %45 {strides = array<i32>} : memref<1x256x256xbf16, #tpu.memory_space<vmem>>, vector<1x256x128xbf16>,
    %46 = arith.truncf %7 : vector<256x256xf32> to vector<256x256xbf16>
    %c0_28 = arith.constant 0 : index
    %c0_29 = arith.constant 0 : index
    %c0_30 = arith.constant 0 : index
    %47 = vector.load %arg11[%c0_28, %c0_29, %c0_30] : memref<1x256x256xbf16, #tpu.memory_space<vmem>>, vector<1x256x256xbf16>
    %48 = vector.shape_cast %47 : vector<1x256x256xbf16> to vector<256x256xbf16>
    %49 = vector.shape_cast %46 : vector<256x256xbf16> to vector<1x256x256xbf16>
    tpu.vector_store %arg11[%c0_28, %c0_29, %c0_30], %49 {strides = array<i32>} : memref<1x256x256xbf16, #tpu.memory_space<vmem>>, vector<1x256x256xbf16>,
    return
  }
  func.func @transform_0(%arg0: i32, %arg1: i32, %arg2: i32) -> (i32, i32, i32) {
    %c0_i32 = arith.constant 0 : i32
    %c0_i32_0 = arith.constant 0 : i32
    return %arg0, %arg2, %c0_i32 : i32, i32, i32
  }
  func.func @transform_1(%arg0: i32, %arg1: i32, %arg2: i32) -> (i32, i32) {
    %c0_i32 = arith.constant 0 : i32
    %c0_i32_0 = arith.constant 0 : i32
    return %c0_i32, %arg1 : i32, i32
  }
  func.func @transform_2(%arg0: i32, %arg1: i32, %arg2: i32) -> (i32, i32) {
    %c0_i32 = arith.constant 0 : i32
    %c0_i32_0 = arith.constant 0 : i32
    return %c0_i32, %arg1 : i32, i32
  }
  func.func @transform_3(%arg0: i32, %arg1: i32, %arg2: i32) -> (i32, i32) {
    %c0_i32 = arith.constant 0 : i32
    %c0_i32_0 = arith.constant 0 : i32
    return %c0_i32, %arg1 : i32, i32
  }
  func.func @transform_4(%arg0: i32, %arg1: i32, %arg2: i32) -> (i32, i32) {
    %c0_i32 = arith.constant 0 : i32
    %c0_i32_0 = arith.constant 0 : i32
    return %arg2, %c0_i32 : i32, i32
  }
  func.func @transform_5(%arg0: i32, %arg1: i32, %arg2: i32) -> (i32, i32) {
    %c0_i32 = arith.constant 0 : i32
    %c0_i32_0 = arith.constant 0 : i32
    return %arg2, %c0_i32 : i32, i32
  }
  func.func @transform_6(%arg0: i32, %arg1: i32, %arg2: i32) -> (i32, i32, i32) {
    %c0_i32 = arith.constant 0 : i32
    return %arg0, %arg2, %arg1 : i32, i32, i32
  }
  func.func @transform_7(%arg0: i32, %arg1: i32, %arg2: i32) -> (i32, i32, i32) {
    %c0_i32 = arith.constant 0 : i32
    return %arg0, %arg2, %arg1 : i32, i32, i32
  }
  func.func @transform_8(%arg0: i32, %arg1: i32, %arg2: i32) -> (i32, i32, i32) {
    %c0_i32 = arith.constant 0 : i32
    return %arg0, %arg2, %arg1 : i32, i32, i32
  }
}

</mosaic_0001>

<llo_original>
// kernel: tpu_custom_call.1
$region0: #{tpu_custom_call.1}
  #allocation0 [shape = 'u32[]', space=smem, size = 0x4, offset = 0x4, fixed_abs, tag = 'smem constant byte address 0x4 - core index']
  #allocation1 [shape = 'u32[144,128]{1,0:T(1,128)}', space=vmem, size = 0x12000, scoped, tag = 'internal scratch']
  %s0 = inlined_call_operand.hbm [shape: bf16[2,256,256], index: 0, kind: input, shape index: {}]
  %s1 = inlined_call_operand.hbm [shape: bf16[256,256], index: 1, kind: input, shape index: {}]
  %s2 = inlined_call_operand.hbm [shape: bf16[256,256], index: 2, kind: input, shape index: {}]
  %s3 = inlined_call_operand.hbm [shape: bf16[256,256], index: 3, kind: input, shape index: {}]
  %s4 = inlined_call_operand.hbm [shape: f32[256,128], index: 4, kind: input, shape index: {}]
  %s5 = inlined_call_operand.hbm [shape: f32[256,128], index: 5, kind: input, shape index: {}]
  %s6 = inlined_call_operand.hbm [shape: bf16[2,256,256], index: 6, kind: output, shape index: {0}]
  %s7 = inlined_call_operand.hbm [shape: bf16[2,256,256], index: 7, kind: output, shape index: {1}]
  %s8 = inlined_call_operand.hbm [shape: bf16[2,256,256], index: 8, kind: output, shape index: {2}]
  %9 = xla_tuple %s6, %s7, %s8
  %s10 = sld [smem:[#allocation0]]
  $region97: #{tpu_custom_call.1} parent=0
    _
  %s12 = ssub.s32 1, %s10
  %s13 = scalar_select 0, %s12, %s10
  $region1: #{tpu_custom_call.1} parent=0
    #allocation2 [shape = 'u8[262144]{0}', space=vmem, size = 0x40000, scoped, tag = 'input window, operand 0']
    #allocation3 [shape = 's32[2]{0}', space=sflag, size = 0x8, scoped, tag = 'scoped memory for tpu_custom_call.1']
    #allocation4 [shape = 's32[2]{0}', space=sflag, size = 0x8, scoped, tag = 'scoped memory for tpu_custom_call.1']
    #allocation5 [shape = 'u8[131072]{0}', space=vmem, size = 0x20000, scoped, tag = 'input window, operand 1, single buffered']
    #allocation6 [shape = 's32[1]{0}', space=sflag, size = 0x4, scoped, tag = 'scoped memory for tpu_custom_call.1']
    #allocation7 [shape = 'u8[131072]{0}', space=vmem, size = 0x20000, scoped, tag = 'input window, operand 2, single buffered']
    #allocation8 [shape = 'u8[131072]{0}', space=vmem, size = 0x20000, scoped, tag = 'input window, operand 3, single buffered']
    #allocation9 [shape = 's32[1]{0}', space=sflag, size = 0x4, scoped, tag = 'scoped memory for tpu_custom_call.1']
    #allocation10 [shape = 'u8[131072]{0}', space=vmem, size = 0x20000, scoped, tag = 'input window, operand 4, single buffered']
    #allocation11 [shape = 'u8[131072]{0}', space=vmem, size = 0x20000, scoped, tag = 'input window, operand 5, single buffered']
    #allocation12 [shape = 's32[1]{0}', space=sflag, size = 0x4, scoped, tag = 'scoped memory for tpu_custom_call.1']
    #allocation13 [shape = 'u8[262144]{0}', space=vmem, size = 0x40000, scoped, tag = 'output window, operand 0']
    #allocation14 [shape = 'u8[262144]{0}', space=vmem, size = 0x40000, scoped, tag = 'output window, operand 1']
    #allocation15 [shape = 's32[2]{0}', space=sflag, size = 0x8, scoped, tag = 'scoped memory for tpu_custom_call.1']
    #allocation16 [shape = 'u8[262144]{0}', space=vmem, size = 0x40000, scoped, tag = 'output window, operand 2']
    %14 = vsyncpa [#allocation3], 0
    %s15 = scalar_lea.sflag [#allocation3], 1
    %16 = vsyncpa %s15, 0
    %17 = vsyncpa [#allocation6], 0
    %18 = vsyncpa [#allocation9], 0
    %19 = vsyncpa [#allocation12], 0
    %20 = vsyncpa [#allocation4], 0
    %s21 = scalar_lea.sflag [#allocation4], 1
    %22 = vsyncpa %s21, 0
    %23 = vsyncpa [#allocation15], 0
    %s24 = scalar_lea.sflag [#allocation15], 1
    %25 = vsyncpa %s24, 0
    loop: start=0, step=1, limit=4
    $region2: #{tpu_custom_call.1} parent=1 // loop_pre_header
      _
    $region3: #{tpu_custom_call.1} parent=1 // loop_header
      %s27 = sphi 0, %s31
      %p28 = scmp.ge.s32.totalorder %s27, 4
      %s34 = sphi 0, %s53
      %s35 = sphi 0, %s49
      %s36 = sphi 0, %s45
      %s37 = sphi 0, %s34
      %s38 = sphi 0, %s35
      %s39 = sphi 0, %s36
      %s40 = sphi 0, %s37
      %s41 = sphi 0, %s38
      %s42 = sphi 0, %s39
      %s58 = sphi 0, %s60
      %s61 = sphi 0, %s58
      %s62 = sphi 0, %s61
      %s78 = sphi 0, %s62
      %s84 = sphi 0, %s86
      %s87 = sphi 0, %s84
      %s88 = sphi 0, %s87
      %s104 = sphi 0, %s88
      %s110 = sphi 0, %s112
      %s113 = sphi 0, %s110
      %s114 = sphi 0, %s113
      %s130 = sphi 0, %s114
      %s136 = sphi 0, %s138
      %s139 = sphi 0, %s136
      %s140 = sphi 0, %s139
      %s156 = sphi 0, %s140
      %s162 = sphi 0, %s164
      %s165 = sphi 0, %s162
      %s166 = sphi 0, %s165
      %s182 = sphi 0, %s166
      %s188 = sphi 0, %s190
      %s191 = sphi 0, %s188
      %s192 = sphi 0, %s191
      %s208 = sphi 0, %s192
      %s218 = sphi 0, %s220
      %s221 = sphi 0, %s218
      %s222 = sphi 0, %s221
      %s238 = sphi 0, %s222
      %s248 = sphi 0, %s250
      %s251 = sphi 0, %s248
      %s252 = sphi 0, %s251
      %s268 = sphi 0, %s252
      %s278 = sphi 0, %s280
      %s281 = sphi 0, %s278
      %s282 = sphi 0, %s281
      %s298 = sphi 0, %s282
    $region4: #{tpu_custom_call.1} parent=1 // loop_header_branch
      %30 = sbr.rel (%p28) target = $region8
    $region5: #{tpu_custom_call.1} parent=1 // loop_body
      %s32 = ssub.s32 %s27, 1
      %s33 = ssub.s32 %s27, 2
      %s43 = sadd.s32 1, %s36
      %p44 = scmp.ge.s32.totalorder %s43, 1
      %s45 = scalar_select %p44, 0, %s43
      %s46 = sadd.s32 1, %s35
      %s47 = scalar_select %p44, %s46, %s35
      %p48 = scmp.ge.s32.totalorder %s47, 1
      %s49 = scalar_select %p48, 0, %s47
      %s50 = sadd.s32 1, %s34
      %s51 = scalar_select %p48, %s50, %s34
      %p52 = scmp.ge.s32.totalorder %s51, 2
      %s53 = scalar_select %p52, 0, %s51
      %s54 = ssub.s32 %s34, %s53
      %s55 = ssub.s32 %s36, %s45
      %s56 = sor.u32 %s54, %s55
      %p57 = scmp.eq.s32.totalorder %s56, 0
      %s59 = sadd.s32 %s58, 1
      %s60 = scalar_select %p57, %s58, %s59
      %p63 = pneg %p57
      %p64 = scmp.eq.s32.totalorder %s27, 1
      %p65 = por %p63, %p64
      %p66 = scmp.ne.s32.totalorder %s58, %s61
      %p67 = scmp.eq.s32.totalorder %s27, 0
      %p68 = por %p66, %p67
      %p69 = scmp.ne.s32.totalorder %s58, %s61
      %p70 = scmp.eq.s32.totalorder %s32, 1
      %p71 = por %p69, %p70
      %p72 = scmp.ne.s32.totalorder %s61, %s62
      %p73 = scmp.eq.s32.totalorder %s32, 0
      %p74 = por %p72, %p73
      %p75 = scmp.ne.s32.totalorder %s61, %s62
      %p76 = scmp.eq.s32.totalorder %s33, 1
      %p77 = por %p75, %p76
      %p79 = scmp.ne.s32.totalorder %s62, %s78
      %p80 = scmp.eq.s32.totalorder %s33, 0
      %p81 = por %p79, %p80
      %s82 = ssub.s32 %s35, %s49
      %p83 = scmp.eq.s32.totalorder %s82, 0
      %s85 = sadd.s32 %s84, 1
      %s86 = scalar_select %p83, %s84, %s85
      %p89 = pneg %p83
      %p90 = scmp.eq.s32.totalorder %s27, 1
      %p91 = por %p89, %p90
      %p92 = scmp.ne.s32.totalorder %s84, %s87
      %p93 = scmp.eq.s32.totalorder %s27, 0
      %p94 = por %p92, %p93
      %p95 = scmp.ne.s32.totalorder %s84, %s87
      %p96 = scmp.eq.s32.totalorder %s32, 1
      %p97 = por %p95, %p96
      %p98 = scmp.ne.s32.totalorder %s87, %s88
      %p99 = scmp.eq.s32.totalorder %s32, 0
      %p100 = por %p98, %p99
      %p101 = scmp.ne.s32.totalorder %s87, %s88
      %p102 = scmp.eq.s32.totalorder %s33, 1
      %p103 = por %p101, %p102
      %p105 = scmp.ne.s32.totalorder %s88, %s104
      %p106 = scmp.eq.s32.totalorder %s33, 0
      %p107 = por %p105, %p106
      %s108 = ssub.s32 %s35, %s49
      %p109 = scmp.eq.s32.totalorder %s108, 0
      %s111 = sadd.s32 %s110, 1
      %s112 = scalar_select %p109, %s110, %s111
      %p115 = pneg %p109
      %p116 = scmp.eq.s32.totalorder %s27, 1
      %p117 = por %p115, %p116
      %p118 = scmp.ne.s32.totalorder %s110, %s113
      %p119 = scmp.eq.s32.totalorder %s27, 0
      %p120 = por %p118, %p119
      %p121 = scmp.ne.s32.totalorder %s110, %s113
      %p122 = scmp.eq.s32.totalorder %s32, 1
      %p123 = por %p121, %p122
      %p124 = scmp.ne.s32.totalorder %s113, %s114
      %p125 = scmp.eq.s32.totalorder %s32, 0
      %p126 = por %p124, %p125
      %p127 = scmp.ne.s32.totalorder %s113, %s114
      %p128 = scmp.eq.s32.totalorder %s33, 1
      %p129 = por %p127, %p128
      %p131 = scmp.ne.s32.totalorder %s114, %s130
      %p132 = scmp.eq.s32.totalorder %s33, 0
      %p133 = por %p131, %p132
      %s134 = ssub.s32 %s35, %s49
      %p135 = scmp.eq.s32.totalorder %s134, 0
      %s137 = sadd.s32 %s136, 1
      %s138 = scalar_select %p135, %s136, %s137
      %p141 = pneg %p135
      %p142 = scmp.eq.s32.totalorder %s27, 1
      %p143 = por %p141, %p142
      %p144 = scmp.ne.s32.totalorder %s136, %s139
      %p145 = scmp.eq.s32.totalorder %s27, 0
      %p146 = por %p144, %p145
      %p147 = scmp.ne.s32.totalorder %s136, %s139
      %p148 = scmp.eq.s32.totalorder %s32, 1
      %p149 = por %p147, %p148
      %p150 = scmp.ne.s32.totalorder %s139, %s140
      %p151 = scmp.eq.s32.totalorder %s32, 0
      %p152 = por %p150, %p151
      %p153 = scmp.ne.s32.totalorder %s139, %s140
      %p154 = scmp.eq.s32.totalorder %s33, 1
      %p155 = por %p153, %p154
      %p157 = scmp.ne.s32.totalorder %s140, %s156
      %p158 = scmp.eq.s32.totalorder %s33, 0
      %p159 = por %p157, %p158
      %s160 = ssub.s32 %s36, %s45
      %p161 = scmp.eq.s32.totalorder %s160, 0
      %s163 = sadd.s32 %s162, 1
      %s164 = scalar_select %p161, %s162, %s163
      %p167 = pneg %p161
      %p168 = scmp.eq.s32.totalorder %s27, 1
      %p169 = por %p167, %p168
      %p170 = scmp.ne.s32.totalorder %s162, %s165
      %p171 = scmp.eq.s32.totalorder %s27, 0
      %p172 = por %p170, %p171
      %p173 = scmp.ne.s32.totalorder %s162, %s165
      %p174 = scmp.eq.s32.totalorder %s32, 1
      %p175 = por %p173, %p174
      %p176 = scmp.ne.s32.totalorder %s165, %s166
      %p177 = scmp.eq.s32.totalorder %s32, 0
      %p178 = por %p176, %p177
      %p179 = scmp.ne.s32.totalorder %s165, %s166
      %p180 = scmp.eq.s32.totalorder %s33, 1
      %p181 = por %p179, %p180
      %p183 = scmp.ne.s32.totalorder %s166, %s182
      %p184 = scmp.eq.s32.totalorder %s33, 0
      %p185 = por %p183, %p184
      %s186 = ssub.s32 %s36, %s45
      %p187 = scmp.eq.s32.totalorder %s186, 0
      %s189 = sadd.s32 %s188, 1
      %s190 = scalar_select %p187, %s188, %s189
      %p193 = pneg %p187
      %p194 = scmp.eq.s32.totalorder %s27, 1
      %p195 = por %p193, %p194
      %p196 = scmp.ne.s32.totalorder %s188, %s191
      %p197 = scmp.eq.s32.totalorder %s27, 0
      %p198 = por %p196, %p197
      %p199 = scmp.ne.s32.totalorder %s188, %s191
      %p200 = scmp.eq.s32.totalorder %s32, 1
      %p201 = por %p199, %p200
      %p202 = scmp.ne.s32.totalorder %s191, %s192
      %p203 = scmp.eq.s32.totalorder %s32, 0
      %p204 = por %p202, %p203
      %p205 = scmp.ne.s32.totalorder %s191, %s192
      %p206 = scmp.eq.s32.totalorder %s33, 1
      %p207 = por %p205, %p206
      %p209 = scmp.ne.s32.totalorder %s192, %s208
      %p210 = scmp.eq.s32.totalorder %s33, 0
      %p211 = por %p209, %p210
      %s212 = ssub.s32 %s34, %s53
      %s213 = ssub.s32 %s36, %s45
      %s214 = sor.u32 %s212, %s213
      %s215 = ssub.s32 %s35, %s49
      %s216 = sor.u32 %s214, %s215
      %p217 = scmp.eq.s32.totalorder %s216, 0
      %s219 = sadd.s32 %s218, 1
      %s220 = scalar_select %p217, %s218, %s219
      %p223 = pneg %p217
      %p224 = scmp.eq.s32.totalorder %s27, 1
      %p225 = por %p223, %p224
      %p226 = scmp.ne.s32.totalorder %s218, %s221
      %p227 = scmp.eq.s32.totalorder %s27, 0
      %p228 = por %p226, %p227
      %p229 = scmp.ne.s32.totalorder %s218, %s221
      %p230 = scmp.eq.s32.totalorder %s32, 1
      %p231 = por %p229, %p230
      %p232 = scmp.ne.s32.totalorder %s221, %s222
      %p233 = scmp.eq.s32.totalorder %s32, 0
      %p234 = por %p232, %p233
      %p235 = scmp.ne.s32.totalorder %s221, %s222
      %p236 = scmp.eq.s32.totalorder %s33, 1
      %p237 = por %p235, %p236
      %p239 = scmp.ne.s32.totalorder %s222, %s238
      %p240 = scmp.eq.s32.totalorder %s33, 0
      %p241 = por %p239, %p240
      %s242 = ssub.s32 %s34, %s53
      %s243 = ssub.s32 %s36, %s45
      %s244 = sor.u32 %s242, %s243
      %s245 = ssub.s32 %s35, %s49
      %s246 = sor.u32 %s244, %s245
      %p247 = scmp.eq.s32.totalorder %s246, 0
      %s249 = sadd.s32 %s248, 1
      %s250 = scalar_select %p247, %s248, %s249
      %p253 = pneg %p247
      %p254 = scmp.eq.s32.totalorder %s27, 1
      %p255 = por %p253, %p254
      %p256 = scmp.ne.s32.totalorder %s248, %s251
      %p257 = scmp.eq.s32.totalorder %s27, 0
      %p258 = por %p256, %p257
      %p259 = scmp.ne.s32.totalorder %s248, %s251
      %p260 = scmp.eq.s32.totalorder %s32, 1
      %p261 = por %p259, %p260
      %p262 = scmp.ne.s32.totalorder %s251, %s252
      %p263 = scmp.eq.s32.totalorder %s32, 0
      %p264 = por %p262, %p263
      %p265 = scmp.ne.s32.totalorder %s251, %s252
      %p266 = scmp.eq.s32.totalorder %s33, 1
      %p267 = por %p265, %p266
      %p269 = scmp.ne.s32.totalorder %s252, %s268
      %p270 = scmp.eq.s32.totalorder %s33, 0
      %p271 = por %p269, %p270
      %s272 = ssub.s32 %s34, %s53
      %s273 = ssub.s32 %s36, %s45
      %s274 = sor.u32 %s272, %s273
      %s275 = ssub.s32 %s35, %s49
      %s276 = sor.u32 %s274, %s275
      %p277 = scmp.eq.s32.totalorder %s276, 0
      %s279 = sadd.s32 %s278, 1
      %s280 = scalar_select %p277, %s278, %s279
      %p283 = pneg %p277
      %p284 = scmp.eq.s32.totalorder %s27, 1
      %p285 = por %p283, %p284
      %p286 = scmp.ne.s32.totalorder %s278, %s281
      %p287 = scmp.eq.s32.totalorder %s27, 0
      %p288 = por %p286, %p287
      %p289 = scmp.ne.s32.totalorder %s278, %s281
      %p290 = scmp.eq.s32.totalorder %s32, 1
      %p291 = por %p289, %p290
      %p292 = scmp.ne.s32.totalorder %s281, %s282
      %p293 = scmp.eq.s32.totalorder %s32, 0
      %p294 = por %p292, %p293
      %p295 = scmp.ne.s32.totalorder %s281, %s282
      %p296 = scmp.eq.s32.totalorder %s33, 1
      %p297 = por %p295, %p296
      %p299 = scmp.ne.s32.totalorder %s282, %s298
      %p300 = scmp.eq.s32.totalorder %s33, 0
      %p301 = por %p299, %p300
      %p302 = scmp.le.s32.totalorder 1, %s27
      %p303 = scmp.lt.s32.totalorder %s27, 3
      %p304 = pnand %p302, %p303
      %p305 = pneg %p304
      // Predicated region
      $region9: #{tpu_custom_call.1} parent=5 // pred_check
        _
      $region10: #{tpu_custom_call.1} parent=5 // pred_check_branch
        %307 = sbr.rel (%p304) target = $region12
      $region11: #{tpu_custom_call.1} parent=5 // pred_region
        %s308 = ssub.s32 %s27, 1
        // Predicated region
        $region13: #{tpu_custom_call.1} parent=11 // pred_check
          %p309 = pneg %p100
        $region14: #{tpu_custom_call.1} parent=11 // pred_check_branch
          %311 = sbr.rel (%p309) target = $region16
        $region15: #{tpu_custom_call.1} parent=11 // pred_region
          %s312 = smul.u32 2, %s38
          %s314 = ssub.s32 4096, 4096
          %315 = vsyncadd [#allocation6], %s314
          %s316 = smul.addr %s312, 64
          %s317 = scalar_lea.hbm %s1, %s316
          %s318 = sshll.u32 [#allocation5], 4
          %s319 = int_to_ptr.vmem [resolvable:$true] %s318
          %324 = dma.hbm_to_vmem [thread:$0]  %s317, 4096, %s319, [#allocation6], 128, 128, 8
        $region16: #{tpu_custom_call.1} parent=11 // pred_fallthru
          _
        // Predicated region
        $region17: #{tpu_custom_call.1} parent=11 // pred_check
          %p325 = pneg %p126
        $region18: #{tpu_custom_call.1} parent=11 // pred_check_branch
          %327 = sbr.rel (%p325) target = $region20
        $region19: #{tpu_custom_call.1} parent=11 // pred_region
          %s328 = smul.u32 2, %s38
          %s330 = ssub.s32 4096, 4096
          %331 = vsyncadd [#allocation6], %s330
          %s332 = smul.addr %s328, 64
          %s333 = scalar_lea.hbm %s2, %s332
          %s334 = sshll.u32 [#allocation7], 4
          %s335 = int_to_ptr.vmem [resolvable:$true] %s334
          %340 = dma.hbm_to_vmem [thread:$0]  %s333, 4096, %s335, [#allocation6], 128, 128, 8
        $region20: #{tpu_custom_call.1} parent=11 // pred_fallthru
          _
        // Predicated region
        $region21: #{tpu_custom_call.1} parent=11 // pred_check
          %p341 = pneg %p152
        $region22: #{tpu_custom_call.1} parent=11 // pred_check_branch
          %343 = sbr.rel (%p341) target = $region24
        $region23: #{tpu_custom_call.1} parent=11 // pred_region
          %s344 = smul.u32 2, %s38
          %s346 = ssub.s32 4096, 4096
          %347 = vsyncadd [#allocation9], %s346
          %s348 = smul.addr %s344, 64
          %s349 = scalar_lea.hbm %s3, %s348
          %s350 = sshll.u32 [#allocation8], 4
          %s351 = int_to_ptr.vmem [resolvable:$true] %s350
          %356 = dma.hbm_to_vmem [thread:$0]  %s349, 4096, %s351, [#allocation9], 128, 128, 8
        $region24: #{tpu_custom_call.1} parent=11 // pred_fallthru
          _
        // Predicated region
        $region25: #{tpu_custom_call.1} parent=11 // pred_check
          %p357 = pneg %p178
        $region26: #{tpu_custom_call.1} parent=11 // pred_check_branch
          %359 = sbr.rel (%p357) target = $region28
        $region27: #{tpu_custom_call.1} parent=11 // pred_region
          %s360 = smul.u32 32, %s39
          %s362 = ssub.s32 4096, 4096
          %363 = vsyncadd [#allocation9], %s362
          %s364 = smul.addr %s360, 128
          %s365 = scalar_lea.hbm %s4, %s364
          %s366 = sshll.u32 [#allocation10], 4
          %s367 = int_to_ptr.vmem [resolvable:$true] %s366
          %372 = dma.hbm_to_vmem [thread:$0]  %s365, 4096, %s367, [#allocation9], 128, 128, 8
        $region28: #{tpu_custom_call.1} parent=11 // pred_fallthru
          _
        // Predicated region
        $region29: #{tpu_custom_call.1} parent=11 // pred_check
          %p373 = pneg %p204
        $region30: #{tpu_custom_call.1} parent=11 // pred_check_branch
          %375 = sbr.rel (%p373) target = $region32
        $region31: #{tpu_custom_call.1} parent=11 // pred_region
          %s376 = smul.u32 32, %s39
          %s378 = ssub.s32 4096, 4096
          %379 = vsyncadd [#allocation12], %s378
          %s380 = smul.addr %s376, 128
          %s381 = scalar_lea.hbm %s5, %s380
          %s382 = sshll.u32 [#allocation11], 4
          %s383 = int_to_ptr.vmem [resolvable:$true] %s382
          %388 = dma.hbm_to_vmem [thread:$0]  %s381, 4096, %s383, [#allocation12], 128, 128, 8
        $region32: #{tpu_custom_call.1} parent=11 // pred_fallthru
          _
      $region12: #{tpu_custom_call.1} parent=5 // pred_fallthru
        _
      %p389 = scmp.lt.s32.totalorder %s27, 2
      // Predicated region
      $region33: #{tpu_custom_call.1} parent=5 // pred_check
        %p390 = pneg %p389
      $region34: #{tpu_custom_call.1} parent=5 // pred_check_branch
        %392 = sbr.rel (%p390) target = $region36
      $region35: #{tpu_custom_call.1} parent=5 // pred_region
        // Predicated region
        $region37: #{tpu_custom_call.1} parent=35 // pred_check
          %p393 = pneg %p68
        $region38: #{tpu_custom_call.1} parent=35 // pred_check_branch
          %395 = sbr.rel (%p393) target = $region40
        $region39: #{tpu_custom_call.1} parent=35 // pred_region
          %s396 = sand.u32 %s58, 1
          %s397 = scalar_lea.sflag [#allocation3], %s396
          %s398 = sand.u32 %s58, 1
          %s399 = smul.addr %s398, 256
          %s400 = scalar_lea.vmem [#allocation2], %s399
          %s401 = smul.u32 32, %s36
          %s403 = ssub.s32 4096, 4096
          %404 = vsyncadd %s397, %s403
          %s405 = smul.addr %s401, 2
          %s406 = smul.addr %s34, 64
          %s407 = sadd.s32 %s405, %s406
          %s408 = smul.addr %s407, 64
          %s409 = scalar_lea.hbm %s0, %s408
          %s410 = sshll.u32 %s400, 4
          %s411 = int_to_ptr.vmem [resolvable:$true] %s410
          %416 = dma.hbm_to_vmem [thread:$0]  %s409, 4096, %s411, %s397, 128, 128, 8
        $region40: #{tpu_custom_call.1} parent=35 // pred_fallthru
          _
      $region36: #{tpu_custom_call.1} parent=5 // pred_fallthru
        _
      %p417 = scmp.le.s32.totalorder 1, %s27
      %p418 = scmp.lt.s32.totalorder %s27, 3
      %p419 = pnand %p417, %p418
      %p420 = pneg %p419
      // Predicated region
      $region41: #{tpu_custom_call.1} parent=5 // pred_check
        _
      $region42: #{tpu_custom_call.1} parent=5 // pred_check_branch
        %422 = sbr.rel (%p419) target = $region44
      $region43: #{tpu_custom_call.1} parent=5 // pred_region
        %s423 = ssub.s32 %s27, 1
        %s424 = sand.u32 %s61, 1
        %s425 = scalar_lea.sflag [#allocation3], %s424
        %s426 = sand.u32 %s61, 1
        %s427 = smul.addr %s426, 256
        %s428 = scalar_lea.vmem [#allocation2], %s427
        // Predicated region
        $region45: #{tpu_custom_call.1} parent=43 // pred_check
          %p429 = pneg %p74
        $region46: #{tpu_custom_call.1} parent=43 // pred_check_branch
          %431 = sbr.rel (%p429) target = $region48
        $region47: #{tpu_custom_call.1} parent=43 // pred_region
          %432 = dma.done %s425, 4096
        $region48: #{tpu_custom_call.1} parent=43 // pred_fallthru
          _
        // Predicated region
        $region49: #{tpu_custom_call.1} parent=43 // pred_check
          %p433 = pneg %p100
        $region50: #{tpu_custom_call.1} parent=43 // pred_check_branch
          %435 = sbr.rel (%p433) target = $region52
        $region51: #{tpu_custom_call.1} parent=43 // pred_region
          %436 = dma.done [#allocation6], 4096
        $region52: #{tpu_custom_call.1} parent=43 // pred_fallthru
          _
        // Predicated region
        $region53: #{tpu_custom_call.1} parent=43 // pred_check
          %p437 = pneg %p126
        $region54: #{tpu_custom_call.1} parent=43 // pred_check_branch
          %439 = sbr.rel (%p437) target = $region56
        $region55: #{tpu_custom_call.1} parent=43 // pred_region
          %440 = dma.done [#allocation6], 4096
        $region56: #{tpu_custom_call.1} parent=43 // pred_fallthru
          _
        // Predicated region
        $region57: #{tpu_custom_call.1} parent=43 // pred_check
          %p441 = pneg %p152
        $region58: #{tpu_custom_call.1} parent=43 // pred_check_branch
          %443 = sbr.rel (%p441) target = $region60
        $region59: #{tpu_custom_call.1} parent=43 // pred_region
          %444 = dma.done [#allocation9], 4096
        $region60: #{tpu_custom_call.1} parent=43 // pred_fallthru
          _
        // Predicated region
        $region61: #{tpu_custom_call.1} parent=43 // pred_check
          %p445 = pneg %p178
        $region62: #{tpu_custom_call.1} parent=43 // pred_check_branch
          %447 = sbr.rel (%p445) target = $region64
        $region63: #{tpu_custom_call.1} parent=43 // pred_region
          %448 = dma.done [#allocation9], 4096
        $region64: #{tpu_custom_call.1} parent=43 // pred_fallthru
          _
        // Predicated region
        $region65: #{tpu_custom_call.1} parent=43 // pred_check
          %p449 = pneg %p204
        $region66: #{tpu_custom_call.1} parent=43 // pred_check_branch
          %451 = sbr.rel (%p449) target = $region68
        $region67: #{tpu_custom_call.1} parent=43 // pred_region
          %452 = dma.done [#allocation12], 4096
        $region68: #{tpu_custom_call.1} parent=43 // pred_fallthru
          _
        %s453 = sand.u32 %s61, 1
        %s454 = scalar_lea.sflag [#allocation3], %s453
        %s455 = sand.u32 %s61, 1
        %s456 = smul.addr %s455, 256
        %s457 = scalar_lea.vmem [#allocation2], %s456
        %p458 = pneg %p74
        %p459 = pneg %p71
        %p460 = pneg %p100
        %p461 = pneg %p97
        %p462 = pneg %p126
        %p463 = pneg %p123
        %p464 = pneg %p152
        %p465 = pneg %p149
        %p466 = pneg %p178
        %p467 = pneg %p175
        %p468 = pneg %p204
        %p469 = pneg %p201
        %p470 = pneg %p234
        %p471 = pneg %p231
        %s472 = sand.u32 %s221, 1
        %s473 = scalar_lea.sflag [#allocation4], %s472
        %s474 = sand.u32 %s221, 1
        %s475 = smul.addr %s474, 256
        %s476 = scalar_lea.vmem [#allocation13], %s475
        %p477 = pneg %p264
        %p478 = pneg %p261
        %s479 = sand.u32 %s32, 1
        %s480 = scalar_lea.sflag [#allocation15], %s479
        %s481 = sand.u32 %s251, 1
        %s482 = smul.addr %s481, 256
        %s483 = scalar_lea.vmem [#allocation14], %s482
        %p484 = pneg %p294
        %p485 = pneg %p291
        %s486 = sand.u32 %s32, 1
        %s487 = scalar_lea.sflag [#allocation15], %s486
        %s488 = sand.u32 %s281, 1
        %s489 = smul.addr %s488, 256
        %s490 = scalar_lea.vmem [#allocation16], %s489
        %s491 = smul.u32 32, %s39
        %s492 = smul.u32 2, %s38
        %s493 = smul.u32 2, %s38
        %s494 = smul.u32 2, %s38
        %s495 = smul.u32 32, %s39
        %s496 = smul.u32 32, %s39
        %s497 = smul.u32 32, %s39
        %s498 = smul.u32 2, %s38
        %s499 = smul.u32 32, %s39
        %s500 = smul.u32 2, %s38
        %s501 = smul.u32 32, %s39
        %s502 = smul.u32 2, %s38
        %v503 = vld [vmem:[%s428] sm:$0xff]
        %v504 = vld [vmem:[%s428 + $0x8] sm:$0xff]
        %v505 = vld [vmem:[%s428 + $0x10] sm:$0xff]
        %v506 = vld [vmem:[%s428 + $0x18] sm:$0xff]
        %v507 = vld [vmem:[%s428 + $0x20] sm:$0xff]
        %v508 = vld [vmem:[%s428 + $0x28] sm:$0xff]
        %v509 = vld [vmem:[%s428 + $0x30] sm:$0xff]
        %v510 = vld [vmem:[%s428 + $0x38] sm:$0xff]
        %v511 = vld [vmem:[%s428 + $0x40] sm:$0xff]
        %v512 = vld [vmem:[%s428 + $0x48] sm:$0xff]
        %v513 = vld [vmem:[%s428 + $0x50] sm:$0xff]
        %v514 = vld [vmem:[%s428 + $0x58] sm:$0xff]
        %v515 = vld [vmem:[%s428 + $0x60] sm:$0xff]
        %v516 = vld [vmem:[%s428 + $0x68] sm:$0xff]
        %v517 = vld [vmem:[%s428 + $0x70] sm:$0xff]
        %v518 = vld [vmem:[%s428 + $0x78] sm:$0xff]
        %v519 = vld [vmem:[%s428 + $0x80] sm:$0xff]
        %v520 = vld [vmem:[%s428 + $0x88] sm:$0xff]
        %v521 = vld [vmem:[%s428 + $0x90] sm:$0xff]
        %v522 = vld [vmem:[%s428 + $0x98] sm:$0xff]
        %v523 = vld [vmem:[%s428 + $0xa0] sm:$0xff]
        %v524 = vld [vmem:[%s428 + $0xa8] sm:$0xff]
        %v525 = vld [vmem:[%s428 + $0xb0] sm:$0xff]
        %v526 = vld [vmem:[%s428 + $0xb8] sm:$0xff]
        %v527 = vld [vmem:[%s428 + $0xc0] sm:$0xff]
        %v528 = vld [vmem:[%s428 + $0xc8] sm:$0xff]
        %v529 = vld [vmem:[%s428 + $0xd0] sm:$0xff]
        %v530 = vld [vmem:[%s428 + $0xd8] sm:$0xff]
        %v531 = vld [vmem:[%s428 + $0xe0] sm:$0xff]
        %v532 = vld [vmem:[%s428 + $0xe8] sm:$0xff]
        %v533 = vld [vmem:[%s428 + $0xf0] sm:$0xff]
        %v534 = vld [vmem:[%s428 + $0xf8] sm:$0xff]
        %v535 = vld [vmem:[#allocation5] sm:$0xff]
        %v536 = vld [vmem:[#allocation5 + $0x8] sm:$0xff]
        %v537 = vld [vmem:[#allocation5 + $0x10] sm:$0xff]
        %v538 = vld [vmem:[#allocation5 + $0x18] sm:$0xff]
        %v539 = vld [vmem:[#allocation5 + $0x20] sm:$0xff]
        %v540 = vld [vmem:[#allocation5 + $0x28] sm:$0xff]
        %v541 = vld [vmem:[#allocation5 + $0x30] sm:$0xff]
        %v542 = vld [vmem:[#allocation5 + $0x38] sm:$0xff]
        %v543 = vld [vmem:[#allocation5 + $0x40] sm:$0xff]
        %v544 = vld [vmem:[#allocation5 + $0x48] sm:$0xff]
        %v545 = vld [vmem:[#allocation5 + $0x50] sm:$0xff]
        %v546 = vld [vmem:[#allocation5 + $0x58] sm:$0xff]
        %v547 = vld [vmem:[#allocation5 + $0x60] sm:$0xff]
        %v548 = vld [vmem:[#allocation5 + $0x68] sm:$0xff]
        %v549 = vld [vmem:[#allocation5 + $0x70] sm:$0xff]
        %v550 = vld [vmem:[#allocation5 + $0x78] sm:$0xff]
        %v551 = vld [vmem:[#allocation5 + $0x80] sm:$0xff]
        %v552 = vld [vmem:[#allocation5 + $0x88] sm:$0xff]
        %v553 = vld [vmem:[#allocation5 + $0x90] sm:$0xff]
        %v554 = vld [vmem:[#allocation5 + $0x98] sm:$0xff]
        %v555 = vld [vmem:[#allocation5 + $0xa0] sm:$0xff]
        %v556 = vld [vmem:[#allocation5 + $0xa8] sm:$0xff]
        %v557 = vld [vmem:[#allocation5 + $0xb0] sm:$0xff]
        %v558 = vld [vmem:[#allocation5 + $0xb8] sm:$0xff]
        %v559 = vld [vmem:[#allocation5 + $0xc0] sm:$0xff]
        %v560 = vld [vmem:[#allocation5 + $0xc8] sm:$0xff]
        %v561 = vld [vmem:[#allocation5 + $0xd0] sm:$0xff]
        %v562 = vld [vmem:[#allocation5 + $0xd8] sm:$0xff]
        %v563 = vld [vmem:[#allocation5 + $0xe0] sm:$0xff]
        %v564 = vld [vmem:[#allocation5 + $0xe8] sm:$0xff]
        %v565 = vld [vmem:[#allocation5 + $0xf0] sm:$0xff]
        %v566 = vld [vmem:[#allocation5 + $0xf8] sm:$0xff]
        %v599 = vunpack.c.l.b16 %v503
        %v600 = vunpack.c.h.b16 %v503
        %v601 = vunpack.c.l.b16 %v504
        %v602 = vunpack.c.h.b16 %v504
        %v603 = vunpack.c.l.b16 %v505
        %v604 = vunpack.c.h.b16 %v505
        %v605 = vunpack.c.l.b16 %v506
        %v606 = vunpack.c.h.b16 %v506
        %v607 = vunpack.c.l.b16 %v507
        %v608 = vunpack.c.h.b16 %v507
        %v609 = vunpack.c.l.b16 %v508
        %v610 = vunpack.c.h.b16 %v508
        %v611 = vunpack.c.l.b16 %v509
        %v612 = vunpack.c.h.b16 %v509
        %v613 = vunpack.c.l.b16 %v510
        %v614 = vunpack.c.h.b16 %v510
        %v615 = vunpack.c.l.b16 %v511
        %v616 = vunpack.c.h.b16 %v511
        %v617 = vunpack.c.l.b16 %v512
        %v618 = vunpack.c.h.b16 %v512
        %v619 = vunpack.c.l.b16 %v513
        %v620 = vunpack.c.h.b16 %v513
        %v621 = vunpack.c.l.b16 %v514
        %v622 = vunpack.c.h.b16 %v514
        %v623 = vunpack.c.l.b16 %v515
        %v624 = vunpack.c.h.b16 %v515
        %v625 = vunpack.c.l.b16 %v516
        %v626 = vunpack.c.h.b16 %v516
        %v627 = vunpack.c.l.b16 %v517
        %v628 = vunpack.c.h.b16 %v517
        %v629 = vunpack.c.l.b16 %v518
        %v630 = vunpack.c.h.b16 %v518
        %v631 = vunpack.c.l.b16 %v519
        %v632 = vunpack.c.h.b16 %v519
        %v633 = vunpack.c.l.b16 %v520
        %v634 = vunpack.c.h.b16 %v520
        %v635 = vunpack.c.l.b16 %v521
        %v636 = vunpack.c.h.b16 %v521
        %v637 = vunpack.c.l.b16 %v522
        %v638 = vunpack.c.h.b16 %v522
        %v639 = vunpack.c.l.b16 %v523
        %v640 = vunpack.c.h.b16 %v523
        %v641 = vunpack.c.l.b16 %v524
        %v642 = vunpack.c.h.b16 %v524
        %v643 = vunpack.c.l.b16 %v525
        %v644 = vunpack.c.h.b16 %v525
        %v645 = vunpack.c.l.b16 %v526
        %v646 = vunpack.c.h.b16 %v526
        %v647 = vunpack.c.l.b16 %v527
        %v648 = vunpack.c.h.b16 %v527
        %v649 = vunpack.c.l.b16 %v528
        %v650 = vunpack.c.h.b16 %v528
        %v651 = vunpack.c.l.b16 %v529
        %v652 = vunpack.c.h.b16 %v529
        %v653 = vunpack.c.l.b16 %v530
        %v654 = vunpack.c.h.b16 %v530
        %v655 = vunpack.c.l.b16 %v531
        %v656 = vunpack.c.h.b16 %v531
        %v657 = vunpack.c.l.b16 %v532
        %v658 = vunpack.c.h.b16 %v532
        %v659 = vunpack.c.l.b16 %v533
        %v660 = vunpack.c.h.b16 %v533
        %v661 = vunpack.c.l.b16 %v534
        %v662 = vunpack.c.h.b16 %v534
        %v663 = vpack.c.b16 %v601, %v599
        %v664 = vpack.c.b16 %v602, %v600
        %v665 = vpack.c.b16 %v605, %v603
        %v666 = vpack.c.b16 %v606, %v604
        %v667 = vpack.c.b16 %v609, %v607
        %v668 = vpack.c.b16 %v610, %v608
        %v669 = vpack.c.b16 %v613, %v611
        %v670 = vpack.c.b16 %v614, %v612
        %v671 = vpack.c.b16 %v617, %v615
        %v672 = vpack.c.b16 %v618, %v616
        %v673 = vpack.c.b16 %v621, %v619
        %v674 = vpack.c.b16 %v622, %v620
        %v675 = vpack.c.b16 %v625, %v623
        %v676 = vpack.c.b16 %v626, %v624
        %v677 = vpack.c.b16 %v629, %v627
        %v678 = vpack.c.b16 %v630, %v628
        %v679 = vpack.c.b16 %v633, %v631
        %v680 = vpack.c.b16 %v634, %v632
        %v681 = vpack.c.b16 %v637, %v635
        %v682 = vpack.c.b16 %v638, %v636
        %v683 = vpack.c.b16 %v641, %v639
        %v684 = vpack.c.b16 %v642, %v640
        %v685 = vpack.c.b16 %v645, %v643
        %v686 = vpack.c.b16 %v646, %v644
        %v687 = vpack.c.b16 %v649, %v647
        %v688 = vpack.c.b16 %v650, %v648
        %v689 = vpack.c.b16 %v653, %v651
        %v690 = vpack.c.b16 %v654, %v652
        %v691 = vpack.c.b16 %v657, %v655
        %v692 = vpack.c.b16 %v658, %v656
        %v693 = vpack.c.b16 %v661, %v659
        %v694 = vpack.c.b16 %v662, %v660
        %v759 = vunpack.c.l.b16 %v535
        %v760 = vunpack.c.h.b16 %v535
        %v761 = vunpack.c.l.b16 %v536
        %v762 = vunpack.c.h.b16 %v536
        %v763 = vunpack.c.l.b16 %v537
        %v764 = vunpack.c.h.b16 %v537
        %v765 = vunpack.c.l.b16 %v538
        %v766 = vunpack.c.h.b16 %v538
        %v767 = vunpack.c.l.b16 %v539
        %v768 = vunpack.c.h.b16 %v539
        %v769 = vunpack.c.l.b16 %v540
        %v770 = vunpack.c.h.b16 %v540
        %v771 = vunpack.c.l.b16 %v541
        %v772 = vunpack.c.h.b16 %v541
        %v773 = vunpack.c.l.b16 %v542
        %v774 = vunpack.c.h.b16 %v542
        %v775 = vunpack.c.l.b16 %v543
        %v776 = vunpack.c.h.b16 %v543
        %v777 = vunpack.c.l.b16 %v544
        %v778 = vunpack.c.h.b16 %v544
        %v779 = vunpack.c.l.b16 %v545
        %v780 = vunpack.c.h.b16 %v545
        %v781 = vunpack.c.l.b16 %v546
        %v782 = vunpack.c.h.b16 %v546
        %v783 = vunpack.c.l.b16 %v547
        %v784 = vunpack.c.h.b16 %v547
        %v785 = vunpack.c.l.b16 %v548
        %v786 = vunpack.c.h.b16 %v548
        %v787 = vunpack.c.l.b16 %v549
        %v788 = vunpack.c.h.b16 %v549
        %v789 = vunpack.c.l.b16 %v550
        %v790 = vunpack.c.h.b16 %v550
        %v791 = vunpack.c.l.b16 %v551
        %v792 = vunpack.c.h.b16 %v551
        %v793 = vunpack.c.l.b16 %v552
        %v794 = vunpack.c.h.b16 %v552
        %v795 = vunpack.c.l.b16 %v553
        %v796 = vunpack.c.h.b16 %v553
        %v797 = vunpack.c.l.b16 %v554
        %v798 = vunpack.c.h.b16 %v554
        %v799 = vunpack.c.l.b16 %v555
        %v800 = vunpack.c.h.b16 %v555
        %v801 = vunpack.c.l.b16 %v556
        %v802 = vunpack.c.h.b16 %v556
        %v803 = vunpack.c.l.b16 %v557
        %v804 = vunpack.c.h.b16 %v557
        %v805 = vunpack.c.l.b16 %v558
        %v806 = vunpack.c.h.b16 %v558
        %v807 = vunpack.c.l.b16 %v559
        %v808 = vunpack.c.h.b16 %v559
        %v809 = vunpack.c.l.b16 %v560
        %v810 = vunpack.c.h.b16 %v560
        %v811 = vunpack.c.l.b16 %v561
        %v812 = vunpack.c.h.b16 %v561
        %v813 = vunpack.c.l.b16 %v562
        %v814 = vunpack.c.h.b16 %v562
        %v815 = vunpack.c.l.b16 %v563
        %v816 = vunpack.c.h.b16 %v563
        %v817 = vunpack.c.l.b16 %v564
        %v818 = vunpack.c.h.b16 %v564
        %v819 = vunpack.c.l.b16 %v565
        %v820 = vunpack.c.h.b16 %v565
        %v821 = vunpack.c.l.b16 %v566
        %v822 = vunpack.c.h.b16 %v566
        %v823 = vpack.c.b16 %v761, %v759
        %v824 = vpack.c.b16 %v762, %v760
        %v825 = vpack.c.b16 %v765, %v763
        %v826 = vpack.c.b16 %v766, %v764
        %v827 = vpack.c.b16 %v769, %v767
        %v828 = vpack.c.b16 %v770, %v768
        %v829 = vpack.c.b16 %v773, %v771
        %v830 = vpack.c.b16 %v774, %v772
        %v831 = vpack.c.b16 %v777, %v775
        %v832 = vpack.c.b16 %v778, %v776
        %v833 = vpack.c.b16 %v781, %v779
        %v834 = vpack.c.b16 %v782, %v780
        %v835 = vpack.c.b16 %v785, %v783
        %v836 = vpack.c.b16 %v786, %v784
        %v837 = vpack.c.b16 %v789, %v787
        %v838 = vpack.c.b16 %v790, %v788
        %v839 = vpack.c.b16 %v793, %v791
        %v840 = vpack.c.b16 %v794, %v792
        %v841 = vpack.c.b16 %v797, %v795
        %v842 = vpack.c.b16 %v798, %v796
        %v843 = vpack.c.b16 %v801, %v799
        %v844 = vpack.c.b16 %v802, %v800
        %v845 = vpack.c.b16 %v805, %v803
        %v846 = vpack.c.b16 %v806, %v804
        %v847 = vpack.c.b16 %v809, %v807
        %v848 = vpack.c.b16 %v810, %v808
        %v849 = vpack.c.b16 %v813, %v811
        %v850 = vpack.c.b16 %v814, %v812
        %v851 = vpack.c.b16 %v817, %v815
        %v852 = vpack.c.b16 %v818, %v816
        %v853 = vpack.c.b16 %v821, %v819
        %v854 = vpack.c.b16 %v822, %v820
        %887 = vmatprep.subr.bf16.mxu0 %v838
        %888 = vmatpush1.bf16.msra.mxu0 %v837
        %889 = vmatprep.subr.bf16.mxu0 %v836
        %890 = vmatpush1.bf16.msra.mxu0 %v835
        %891 = vmatprep.subr.bf16.mxu0 %v834
        %892 = vmatpush1.bf16.msra.mxu0 %v833
        %893 = vmatprep.subr.bf16.mxu0 %v832
        %894 = vmatpush1.bf16.msra.mxu0 %v831
        %895 = vmatprep.subr.bf16.mxu0 %v830
        %896 = vmatpush1.bf16.msra.mxu0 %v829
        %897 = vmatprep.subr.bf16.mxu0 %v828
        %898 = vmatpush1.bf16.msra.mxu0 %v827
        %899 = vmatprep.subr.bf16.mxu0 %v826
        %900 = vmatpush1.bf16.msra.mxu0 %v825
        %901 = vmatprep.subr.bf16.mxu0 %v824
        %902 = vmatpush1.bf16.msra.mxu0 %v823
        %903 = vmatprep.subr.bf16.mxu0 %v854
        %904 = vmatpush2.bf16.msra.mxu0 %v853
        %905 = vmatprep.subr.bf16.mxu0 %v852
        %906 = vmatpush2.bf16.msra.mxu0 %v851
        %907 = vmatprep.subr.bf16.mxu0 %v850
        %908 = vmatpush2.bf16.msra.mxu0 %v849
        %909 = vmatprep.subr.bf16.mxu0 %v848
        %910 = vmatpush2.bf16.msra.mxu0 %v847
        %911 = vmatprep.subr.bf16.mxu0 %v846
        %912 = vmatpush2.bf16.msra.mxu0 %v845
        %913 = vmatprep.subr.bf16.mxu0 %v844
        %914 = vmatpush2.bf16.msra.mxu0 %v843
        %915 = vmatprep.subr.bf16.mxu0 %v842
        %916 = vmatpush2.bf16.msra.mxu0 %v841
        %917 = vmatprep.subr.bf16.mxu0 %v840
        %918 = vmatpush2.bf16.msra.mxu0 %v839
        %919 = vmatprep.mubr.bf16.mxu0 %v664
        %920 = vmatmul.mubr.bf16.gmra.mxu0 %v663
        %v921 = vpop.f32.mrf.mxu0
        %v922 = vadd.f32 0.0, %v921
        %v923 = vpop.f32.mrf.mxu0
        %v924 = vadd.f32 0.0, %v923
        %v925 = vpop.f32.mrf.mxu0
        %v926 = vadd.f32 0.0, %v925
        %v927 = vpop.f32.mrf.mxu0
        %v928 = vadd.f32 0.0, %v927
        %929 = vmatprep.mubr.bf16.mxu0 %v666
        %930 = vmatmul.mubr.bf16.gmra.mxu0 %v665
        %v931 = vpop.f32.mrf.mxu0
        %v932 = vadd.f32 0.0, %v931
        %v933 = vpop.f32.mrf.mxu0
        %v934 = vadd.f32 0.0, %v933
        %v935 = vpop.f32.mrf.mxu0
        %v936 = vadd.f32 0.0, %v935
        %v937 = vpop.f32.mrf.mxu0
        %v938 = vadd.f32 0.0, %v937
        %939 = vmatprep.mubr.bf16.mxu0 %v668
        %940 = vmatmul.mubr.bf16.gmra.mxu0 %v667
        %v941 = vpop.f32.mrf.mxu0
        %v942 = vadd.f32 0.0, %v941
        %v943 = vpop.f32.mrf.mxu0
        %v944 = vadd.f32 0.0, %v943
        %v945 = vpop.f32.mrf.mxu0
        %v946 = vadd.f32 0.0, %v945
        %v947 = vpop.f32.mrf.mxu0
        %v948 = vadd.f32 0.0, %v947
        %949 = vmatprep.mubr.bf16.mxu0 %v670
        %950 = vmatmul.mubr.bf16.gmra.mxu0 %v669
        %v951 = vpop.f32.mrf.mxu0
        %v952 = vadd.f32 0.0, %v951
        %v953 = vpop.f32.mrf.mxu0
        %v954 = vadd.f32 0.0, %v953
        %v955 = vpop.f32.mrf.mxu0
        %v956 = vadd.f32 0.0, %v955
        %v957 = vpop.f32.mrf.mxu0
        %v958 = vadd.f32 0.0, %v957
        %959 = vmatprep.mubr.bf16.mxu0 %v672
        %960 = vmatmul.mubr.bf16.gmra.mxu0 %v671
        %v961 = vpop.f32.mrf.mxu0
        %v962 = vadd.f32 0.0, %v961
        %v963 = vpop.f32.mrf.mxu0
        %v964 = vadd.f32 0.0, %v963
        %v965 = vpop.f32.mrf.mxu0
        %v966 = vadd.f32 0.0, %v965
        %v967 = vpop.f32.mrf.mxu0
        %v968 = vadd.f32 0.0, %v967
        %969 = vmatprep.mubr.bf16.mxu0 %v674
        %970 = vmatmul.mubr.bf16.gmra.mxu0 %v673
        %v971 = vpop.f32.mrf.mxu0
        %v972 = vadd.f32 0.0, %v971
        %v973 = vpop.f32.mrf.mxu0
        %v974 = vadd.f32 0.0, %v973
        %v975 = vpop.f32.mrf.mxu0
        %v976 = vadd.f32 0.0, %v975
        %v977 = vpop.f32.mrf.mxu0
        %v978 = vadd.f32 0.0, %v977
        %979 = vmatprep.mubr.bf16.mxu0 %v676
        %980 = vmatmul.mubr.bf16.gmra.mxu0 %v675
        %v981 = vpop.f32.mrf.mxu0
        %v982 = vadd.f32 0.0, %v981
        %v983 = vpop.f32.mrf.mxu0
        %v984 = vadd.f32 0.0, %v983
        %v985 = vpop.f32.mrf.mxu0
        %v986 = vadd.f32 0.0, %v985
        %v987 = vpop.f32.mrf.mxu0
        %v988 = vadd.f32 0.0, %v987
        %989 = vmatprep.mubr.bf16.mxu0 %v678
        %990 = vmatmul.mubr.bf16.gmra.mxu0 %v677
        %v991 = vpop.f32.mrf.mxu0
        %v992 = vadd.f32 0.0, %v991
        %v993 = vpop.f32.mrf.mxu0
        %v994 = vadd.f32 0.0, %v993
        %v995 = vpop.f32.mrf.mxu0
        %v996 = vadd.f32 0.0, %v995
        %v997 = vpop.f32.mrf.mxu0
        %v998 = vadd.f32 0.0, %v997
        %999 = vmatprep.mubr.bf16.mxu0 %v680
        %1000 = vmatmul.mubr.bf16.gmra.mxu0 %v679
        %v1001 = vpop.f32.mrf.mxu0
        %v1002 = vadd.f32 0.0, %v1001
        %v1003 = vpop.f32.mrf.mxu0
        %v1004 = vadd.f32 0.0, %v1003
        %v1005 = vpop.f32.mrf.mxu0
        %v1006 = vadd.f32 0.0, %v1005
        %v1007 = vpop.f32.mrf.mxu0
        %v1008 = vadd.f32 0.0, %v1007
        %1009 = vmatprep.mubr.bf16.mxu0 %v682
        %1010 = vmatmul.mubr.bf16.gmra.mxu0 %v681
        %v1011 = vpop.f32.mrf.mxu0
        %v1012 = vadd.f32 0.0, %v1011
        %v1013 = vpop.f32.mrf.mxu0
        %v1014 = vadd.f32 0.0, %v1013
        %v1015 = vpop.f32.mrf.mxu0
        %v1016 = vadd.f32 0.0, %v1015
        %v1017 = vpop.f32.mrf.mxu0
        %v1018 = vadd.f32 0.0, %v1017
        %1019 = vmatprep.mubr.bf16.mxu0 %v684
        %1020 = vmatmul.mubr.bf16.gmra.mxu0 %v683
        %v1021 = vpop.f32.mrf.mxu0
        %v1022 = vadd.f32 0.0, %v1021
        %v1023 = vpop.f32.mrf.mxu0
        %v1024 = vadd.f32 0.0, %v1023
        %v1025 = vpop.f32.mrf.mxu0
        %v1026 = vadd.f32 0.0, %v1025
        %v1027 = vpop.f32.mrf.mxu0
        %v1028 = vadd.f32 0.0, %v1027
        %1029 = vmatprep.mubr.bf16.mxu0 %v686
        %1030 = vmatmul.mubr.bf16.gmra.mxu0 %v685
        %v1031 = vpop.f32.mrf.mxu0
        %v1032 = vadd.f32 0.0, %v1031
        %v1033 = vpop.f32.mrf.mxu0
        %v1034 = vadd.f32 0.0, %v1033
        %v1035 = vpop.f32.mrf.mxu0
        %v1036 = vadd.f32 0.0, %v1035
        %v1037 = vpop.f32.mrf.mxu0
        %v1038 = vadd.f32 0.0, %v1037
        %1039 = vmatprep.mubr.bf16.mxu0 %v688
        %1040 = vmatmul.mubr.bf16.gmra.mxu0 %v687
        %v1041 = vpop.f32.mrf.mxu0
        %v1042 = vadd.f32 0.0, %v1041
        %v1043 = vpop.f32.mrf.mxu0
        %v1044 = vadd.f32 0.0, %v1043
        %v1045 = vpop.f32.mrf.mxu0
        %v1046 = vadd.f32 0.0, %v1045
        %v1047 = vpop.f32.mrf.mxu0
        %v1048 = vadd.f32 0.0, %v1047
        %1049 = vmatprep.mubr.bf16.mxu0 %v690
        %1050 = vmatmul.mubr.bf16.gmra.mxu0 %v689
        %v1051 = vpop.f32.mrf.mxu0
        %v1052 = vadd.f32 0.0, %v1051
        %v1053 = vpop.f32.mrf.mxu0
        %v1054 = vadd.f32 0.0, %v1053
        %v1055 = vpop.f32.mrf.mxu0
        %v1056 = vadd.f32 0.0, %v1055
        %v1057 = vpop.f32.mrf.mxu0
        %v1058 = vadd.f32 0.0, %v1057
        %1059 = vmatprep.mubr.bf16.mxu0 %v692
        %1060 = vmatmul.mubr.bf16.gmra.mxu0 %v691
        %v1061 = vpop.f32.mrf.mxu0
        %v1062 = vadd.f32 0.0, %v1061
        %v1063 = vpop.f32.mrf.mxu0
        %v1064 = vadd.f32 0.0, %v1063
        %v1065 = vpop.f32.mrf.mxu0
        %v1066 = vadd.f32 0.0, %v1065
        %v1067 = vpop.f32.mrf.mxu0
        %v1068 = vadd.f32 0.0, %v1067
        %1069 = vmatprep.mubr.bf16.mxu0 %v694
        %1070 = vmatmul.mubr.bf16.gmra.mxu0 %v693
        %v1071 = vpop.f32.mrf.mxu0
        %v1072 = vadd.f32 0.0, %v1071
        %v1073 = vpop.f32.mrf.mxu0
        %v1074 = vadd.f32 0.0, %v1073
        %v1075 = vpop.f32.mrf.mxu0
        %v1076 = vadd.f32 0.0, %v1075
        %v1077 = vpop.f32.mrf.mxu0
        %v1078 = vadd.f32 0.0, %v1077
        %1079 = vdwg.mxu0
        %v1080 = vld [vmem:[#allocation7] sm:$0xff]
        %v1081 = vld [vmem:[#allocation7 + $0x8] sm:$0xff]
        %v1082 = vld [vmem:[#allocation7 + $0x10] sm:$0xff]
        %v1083 = vld [vmem:[#allocation7 + $0x18] sm:$0xff]
        %v1084 = vld [vmem:[#allocation7 + $0x20] sm:$0xff]
        %v1085 = vld [vmem:[#allocation7 + $0x28] sm:$0xff]
        %v1086 = vld [vmem:[#allocation7 + $0x30] sm:$0xff]
        %v1087 = vld [vmem:[#allocation7 + $0x38] sm:$0xff]
        %v1088 = vld [vmem:[#allocation7 + $0x40] sm:$0xff]
        %v1089 = vld [vmem:[#allocation7 + $0x48] sm:$0xff]
        %v1090 = vld [vmem:[#allocation7 + $0x50] sm:$0xff]
        %v1091 = vld [vmem:[#allocation7 + $0x58] sm:$0xff]
        %v1092 = vld [vmem:[#allocation7 + $0x60] sm:$0xff]
        %v1093 = vld [vmem:[#allocation7 + $0x68] sm:$0xff]
        %v1094 = vld [vmem:[#allocation7 + $0x70] sm:$0xff]
        %v1095 = vld [vmem:[#allocation7 + $0x78] sm:$0xff]
        %v1096 = vld [vmem:[#allocation7 + $0x80] sm:$0xff]
        %v1097 = vld [vmem:[#allocation7 + $0x88] sm:$0xff]
        %v1098 = vld [vmem:[#allocation7 + $0x90] sm:$0xff]
        %v1099 = vld [vmem:[#allocation7 + $0x98] sm:$0xff]
        %v1100 = vld [vmem:[#allocation7 + $0xa0] sm:$0xff]
        %v1101 = vld [vmem:[#allocation7 + $0xa8] sm:$0xff]
        %v1102 = vld [vmem:[#allocation7 + $0xb0] sm:$0xff]
        %v1103 = vld [vmem:[#allocation7 + $0xb8] sm:$0xff]
        %v1104 = vld [vmem:[#allocation7 + $0xc0] sm:$0xff]
        %v1105 = vld [vmem:[#allocation7 + $0xc8] sm:$0xff]
        %v1106 = vld [vmem:[#allocation7 + $0xd0] sm:$0xff]
        %v1107 = vld [vmem:[#allocation7 + $0xd8] sm:$0xff]
        %v1108 = vld [vmem:[#allocation7 + $0xe0] sm:$0xff]
        %v1109 = vld [vmem:[#allocation7 + $0xe8] sm:$0xff]
        %v1110 = vld [vmem:[#allocation7 + $0xf0] sm:$0xff]
        %v1111 = vld [vmem:[#allocation7 + $0xf8] sm:$0xff]
        %v1144 = vunpack.c.l.b16 %v1080
        %v1145 = vunpack.c.h.b16 %v1080
        %v1146 = vunpack.c.l.b16 %v1081
        %v1147 = vunpack.c.h.b16 %v1081
        %v1148 = vunpack.c.l.b16 %v1082
        %v1149 = vunpack.c.h.b16 %v1082
        %v1150 = vunpack.c.l.b16 %v1083
        %v1151 = vunpack.c.h.b16 %v1083
        %v1152 = vunpack.c.l.b16 %v1084
        %v1153 = vunpack.c.h.b16 %v1084
        %v1154 = vunpack.c.l.b16 %v1085
        %v1155 = vunpack.c.h.b16 %v1085
        %v1156 = vunpack.c.l.b16 %v1086
        %v1157 = vunpack.c.h.b16 %v1086
        %v1158 = vunpack.c.l.b16 %v1087
        %v1159 = vunpack.c.h.b16 %v1087
        %v1160 = vunpack.c.l.b16 %v1088
        %v1161 = vunpack.c.h.b16 %v1088
        %v1162 = vunpack.c.l.b16 %v1089
        %v1163 = vunpack.c.h.b16 %v1089
        %v1164 = vunpack.c.l.b16 %v1090
        %v1165 = vunpack.c.h.b16 %v1090
        %v1166 = vunpack.c.l.b16 %v1091
        %v1167 = vunpack.c.h.b16 %v1091
        %v1168 = vunpack.c.l.b16 %v1092
        %v1169 = vunpack.c.h.b16 %v1092
        %v1170 = vunpack.c.l.b16 %v1093
        %v1171 = vunpack.c.h.b16 %v1093
        %v1172 = vunpack.c.l.b16 %v1094
        %v1173 = vunpack.c.h.b16 %v1094
        %v1174 = vunpack.c.l.b16 %v1095
        %v1175 = vunpack.c.h.b16 %v1095
        %v1176 = vunpack.c.l.b16 %v1096
        %v1177 = vunpack.c.h.b16 %v1096
        %v1178 = vunpack.c.l.b16 %v1097
        %v1179 = vunpack.c.h.b16 %v1097
        %v1180 = vunpack.c.l.b16 %v1098
        %v1181 = vunpack.c.h.b16 %v1098
        %v1182 = vunpack.c.l.b16 %v1099
        %v1183 = vunpack.c.h.b16 %v1099
        %v1184 = vunpack.c.l.b16 %v1100
        %v1185 = vunpack.c.h.b16 %v1100
        %v1186 = vunpack.c.l.b16 %v1101
        %v1187 = vunpack.c.h.b16 %v1101
        %v1188 = vunpack.c.l.b16 %v1102
        %v1189 = vunpack.c.h.b16 %v1102
        %v1190 = vunpack.c.l.b16 %v1103
        %v1191 = vunpack.c.h.b16 %v1103
        %v1192 = vunpack.c.l.b16 %v1104
        %v1193 = vunpack.c.h.b16 %v1104
        %v1194 = vunpack.c.l.b16 %v1105
        %v1195 = vunpack.c.h.b16 %v1105
        %v1196 = vunpack.c.l.b16 %v1106
        %v1197 = vunpack.c.h.b16 %v1106
        %v1198 = vunpack.c.l.b16 %v1107
        %v1199 = vunpack.c.h.b16 %v1107
        %v1200 = vunpack.c.l.b16 %v1108
        %v1201 = vunpack.c.h.b16 %v1108
        %v1202 = vunpack.c.l.b16 %v1109
        %v1203 = vunpack.c.h.b16 %v1109
        %v1204 = vunpack.c.l.b16 %v1110
        %v1205 = vunpack.c.h.b16 %v1110
        %v1206 = vunpack.c.l.b16 %v1111
        %v1207 = vunpack.c.h.b16 %v1111
        %v1208 = vpack.c.b16 %v1146, %v1144
        %v1209 = vpack.c.b16 %v1147, %v1145
        %v1210 = vpack.c.b16 %v1150, %v1148
        %v1211 = vpack.c.b16 %v1151, %v1149
        %v1212 = vpack.c.b16 %v1154, %v1152
        %v1213 = vpack.c.b16 %v1155, %v1153
        %v1214 = vpack.c.b16 %v1158, %v1156
        %v1215 = vpack.c.b16 %v1159, %v1157
        %v1216 = vpack.c.b16 %v1162, %v1160
        %v1217 = vpack.c.b16 %v1163, %v1161
        %v1218 = vpack.c.b16 %v1166, %v1164
        %v1219 = vpack.c.b16 %v1167, %v1165
        %v1220 = vpack.c.b16 %v1170, %v1168
        %v1221 = vpack.c.b16 %v1171, %v1169
        %v1222 = vpack.c.b16 %v1174, %v1172
        %v1223 = vpack.c.b16 %v1175, %v1173
        %v1224 = vpack.c.b16 %v1178, %v1176
        %v1225 = vpack.c.b16 %v1179, %v1177
        %v1226 = vpack.c.b16 %v1182, %v1180
        %v1227 = vpack.c.b16 %v1183, %v1181
        %v1228 = vpack.c.b16 %v1186, %v1184
        %v1229 = vpack.c.b16 %v1187, %v1185
        %v1230 = vpack.c.b16 %v1190, %v1188
        %v1231 = vpack.c.b16 %v1191, %v1189
        %v1232 = vpack.c.b16 %v1194, %v1192
        %v1233 = vpack.c.b16 %v1195, %v1193
        %v1234 = vpack.c.b16 %v1198, %v1196
        %v1235 = vpack.c.b16 %v1199, %v1197
        %v1236 = vpack.c.b16 %v1202, %v1200
        %v1237 = vpack.c.b16 %v1203, %v1201
        %v1238 = vpack.c.b16 %v1206, %v1204
        %v1239 = vpack.c.b16 %v1207, %v1205
        %1272 = vmatprep.subr.bf16.mxu0 %v1223
        %1273 = vmatpush1.bf16.msra.mxu0 %v1222
        %1274 = vmatprep.subr.bf16.mxu0 %v1221
        %1275 = vmatpush1.bf16.msra.mxu0 %v1220
        %1276 = vmatprep.subr.bf16.mxu0 %v1219
        %1277 = vmatpush1.bf16.msra.mxu0 %v1218
        %1278 = vmatprep.subr.bf16.mxu0 %v1217
        %1279 = vmatpush1.bf16.msra.mxu0 %v1216
        %1280 = vmatprep.subr.bf16.mxu0 %v1215
        %1281 = vmatpush1.bf16.msra.mxu0 %v1214
        %1282 = vmatprep.subr.bf16.mxu0 %v1213
        %1283 = vmatpush1.bf16.msra.mxu0 %v1212
        %1284 = vmatprep.subr.bf16.mxu0 %v1211
        %1285 = vmatpush1.bf16.msra.mxu0 %v1210
        %1286 = vmatprep.subr.bf16.mxu0 %v1209
        %1287 = vmatpush1.bf16.msra.mxu0 %v1208
        %1288 = vmatprep.subr.bf16.mxu0 %v1239
        %1289 = vmatpush2.bf16.msra.mxu0 %v1238
        %1290 = vmatprep.subr.bf16.mxu0 %v1237
        %1291 = vmatpush2.bf16.msra.mxu0 %v1236
        %1292 = vmatprep.subr.bf16.mxu0 %v1235
        %1293 = vmatpush2.bf16.msra.mxu0 %v1234
        %1294 = vmatprep.subr.bf16.mxu0 %v1233
        %1295 = vmatpush2.bf16.msra.mxu0 %v1232
        %1296 = vmatprep.subr.bf16.mxu0 %v1231
        %1297 = vmatpush2.bf16.msra.mxu0 %v1230
        %1298 = vmatprep.subr.bf16.mxu0 %v1229
        %1299 = vmatpush2.bf16.msra.mxu0 %v1228
        %1300 = vmatprep.subr.bf16.mxu0 %v1227
        %1301 = vmatpush2.bf16.msra.mxu0 %v1226
        %1302 = vmatprep.subr.bf16.mxu0 %v1225
        %1303 = vmatpush2.bf16.msra.mxu0 %v1224
        %1304 = vmatprep.mubr.bf16.mxu0 %v664
        %1305 = vmatmul.mubr.bf16.gmra.mxu0 %v663
        %v1306 = vpop.f32.mrf.mxu0
        %v1307 = vadd.f32 0.0, %v1306
        %v1308 = vpop.f32.mrf.mxu0
        %v1309 = vadd.f32 0.0, %v1308
        %v1310 = vpop.f32.mrf.mxu0
        %v1311 = vadd.f32 0.0, %v1310
        %v1312 = vpop.f32.mrf.mxu0
        %v1313 = vadd.f32 0.0, %v1312
        %1314 = vmatprep.mubr.bf16.mxu0 %v666
        %1315 = vmatmul.mubr.bf16.gmra.mxu0 %v665
        %v1316 = vpop.f32.mrf.mxu0
        %v1317 = vadd.f32 0.0, %v1316
        %v1318 = vpop.f32.mrf.mxu0
        %v1319 = vadd.f32 0.0, %v1318
        %v1320 = vpop.f32.mrf.mxu0
        %v1321 = vadd.f32 0.0, %v1320
        %v1322 = vpop.f32.mrf.mxu0
        %v1323 = vadd.f32 0.0, %v1322
        %1324 = vmatprep.mubr.bf16.mxu0 %v668
        %1325 = vmatmul.mubr.bf16.gmra.mxu0 %v667
        %v1326 = vpop.f32.mrf.mxu0
        %v1327 = vadd.f32 0.0, %v1326
        %v1328 = vpop.f32.mrf.mxu0
        %v1329 = vadd.f32 0.0, %v1328
        %v1330 = vpop.f32.mrf.mxu0
        %v1331 = vadd.f32 0.0, %v1330
        %v1332 = vpop.f32.mrf.mxu0
        %v1333 = vadd.f32 0.0, %v1332
        %1334 = vmatprep.mubr.bf16.mxu0 %v670
        %1335 = vmatmul.mubr.bf16.gmra.mxu0 %v669
        %v1336 = vpop.f32.mrf.mxu0
        %v1337 = vadd.f32 0.0, %v1336
        %v1338 = vpop.f32.mrf.mxu0
        %v1339 = vadd.f32 0.0, %v1338
        %v1340 = vpop.f32.mrf.mxu0
        %v1341 = vadd.f32 0.0, %v1340
        %v1342 = vpop.f32.mrf.mxu0
        %v1343 = vadd.f32 0.0, %v1342
        %1344 = vmatprep.mubr.bf16.mxu0 %v672
        %1345 = vmatmul.mubr.bf16.gmra.mxu0 %v671
        %v1346 = vpop.f32.mrf.mxu0
        %v1347 = vadd.f32 0.0, %v1346
        %v1348 = vpop.f32.mrf.mxu0
        %v1349 = vadd.f32 0.0, %v1348
        %v1350 = vpop.f32.mrf.mxu0
        %v1351 = vadd.f32 0.0, %v1350
        %v1352 = vpop.f32.mrf.mxu0
        %v1353 = vadd.f32 0.0, %v1352
        %1354 = vmatprep.mubr.bf16.mxu0 %v674
        %1355 = vmatmul.mubr.bf16.gmra.mxu0 %v673
        %v1356 = vpop.f32.mrf.mxu0
        %v1357 = vadd.f32 0.0, %v1356
        %v1358 = vpop.f32.mrf.mxu0
        %v1359 = vadd.f32 0.0, %v1358
        %v1360 = vpop.f32.mrf.mxu0
        %v1361 = vadd.f32 0.0, %v1360
        %v1362 = vpop.f32.mrf.mxu0
        %v1363 = vadd.f32 0.0, %v1362
        %1364 = vmatprep.mubr.bf16.mxu0 %v676
        %1365 = vmatmul.mubr.bf16.gmra.mxu0 %v675
        %v1366 = vpop.f32.mrf.mxu0
        %v1367 = vadd.f32 0.0, %v1366
        %v1368 = vpop.f32.mrf.mxu0
        %v1369 = vadd.f32 0.0, %v1368
        %v1370 = vpop.f32.mrf.mxu0
        %v1371 = vadd.f32 0.0, %v1370
        %v1372 = vpop.f32.mrf.mxu0
        %v1373 = vadd.f32 0.0, %v1372
        %1374 = vmatprep.mubr.bf16.mxu0 %v678
        %1375 = vmatmul.mubr.bf16.gmra.mxu0 %v677
        %v1376 = vpop.f32.mrf.mxu0
        %v1377 = vadd.f32 0.0, %v1376
        %v1378 = vpop.f32.mrf.mxu0
        %v1379 = vadd.f32 0.0, %v1378
        %v1380 = vpop.f32.mrf.mxu0
        %v1381 = vadd.f32 0.0, %v1380
        %v1382 = vpop.f32.mrf.mxu0
        %v1383 = vadd.f32 0.0, %v1382
        %1384 = vmatprep.mubr.bf16.mxu0 %v680
        %1385 = vmatmul.mubr.bf16.gmra.mxu0 %v679
        %v1386 = vpop.f32.mrf.mxu0
        %v1387 = vadd.f32 0.0, %v1386
        %v1388 = vpop.f32.mrf.mxu0
        %v1389 = vadd.f32 0.0, %v1388
        %v1390 = vpop.f32.mrf.mxu0
        %v1391 = vadd.f32 0.0, %v1390
        %v1392 = vpop.f32.mrf.mxu0
        %v1393 = vadd.f32 0.0, %v1392
        %1394 = vmatprep.mubr.bf16.mxu0 %v682
        %1395 = vmatmul.mubr.bf16.gmra.mxu0 %v681
        %v1396 = vpop.f32.mrf.mxu0
        %v1397 = vadd.f32 0.0, %v1396
        %v1398 = vpop.f32.mrf.mxu0
        %v1399 = vadd.f32 0.0, %v1398
        %v1400 = vpop.f32.mrf.mxu0
        %v1401 = vadd.f32 0.0, %v1400
        %v1402 = vpop.f32.mrf.mxu0
        %v1403 = vadd.f32 0.0, %v1402
        %1404 = vmatprep.mubr.bf16.mxu0 %v684
        %1405 = vmatmul.mubr.bf16.gmra.mxu0 %v683
        %v1406 = vpop.f32.mrf.mxu0
        %v1407 = vadd.f32 0.0, %v1406
        %v1408 = vpop.f32.mrf.mxu0
        %v1409 = vadd.f32 0.0, %v1408
        %v1410 = vpop.f32.mrf.mxu0
        %v1411 = vadd.f32 0.0, %v1410
        %v1412 = vpop.f32.mrf.mxu0
        %v1413 = vadd.f32 0.0, %v1412
        %1414 = vmatprep.mubr.bf16.mxu0 %v686
        %1415 = vmatmul.mubr.bf16.gmra.mxu0 %v685
        %v1416 = vpop.f32.mrf.mxu0
        %v1417 = vadd.f32 0.0, %v1416
        %v1418 = vpop.f32.mrf.mxu0
        %v1419 = vadd.f32 0.0, %v1418
        %v1420 = vpop.f32.mrf.mxu0
        %v1421 = vadd.f32 0.0, %v1420
        %v1422 = vpop.f32.mrf.mxu0
        %v1423 = vadd.f32 0.0, %v1422
        %1424 = vmatprep.mubr.bf16.mxu0 %v688
        %1425 = vmatmul.mubr.bf16.gmra.mxu0 %v687
        %v1426 = vpop.f32.mrf.mxu0
        %v1427 = vadd.f32 0.0, %v1426
        %v1428 = vpop.f32.mrf.mxu0
        %v1429 = vadd.f32 0.0, %v1428
        %v1430 = vpop.f32.mrf.mxu0
        %v1431 = vadd.f32 0.0, %v1430
        %v1432 = vpop.f32.mrf.mxu0
        %v1433 = vadd.f32 0.0, %v1432
        %1434 = vmatprep.mubr.bf16.mxu0 %v690
        %1435 = vmatmul.mubr.bf16.gmra.mxu0 %v689
        %v1436 = vpop.f32.mrf.mxu0
        %v1437 = vadd.f32 0.0, %v1436
        %v1438 = vpop.f32.mrf.mxu0
        %v1439 = vadd.f32 0.0, %v1438
        %v1440 = vpop.f32.mrf.mxu0
        %v1441 = vadd.f32 0.0, %v1440
        %v1442 = vpop.f32.mrf.mxu0
        %v1443 = vadd.f32 0.0, %v1442
        %1444 = vmatprep.mubr.bf16.mxu0 %v692
        %1445 = vmatmul.mubr.bf16.gmra.mxu0 %v691
        %v1446 = vpop.f32.mrf.mxu0
        %v1447 = vadd.f32 0.0, %v1446
        %v1448 = vpop.f32.mrf.mxu0
        %v1449 = vadd.f32 0.0, %v1448
        %v1450 = vpop.f32.mrf.mxu0
        %v1451 = vadd.f32 0.0, %v1450
        %v1452 = vpop.f32.mrf.mxu0
        %v1453 = vadd.f32 0.0, %v1452
        %1454 = vmatprep.mubr.bf16.mxu0 %v694
        %1455 = vmatmul.mubr.bf16.gmra.mxu0 %v693
        %v1456 = vpop.f32.mrf.mxu0
        %v1457 = vadd.f32 0.0, %v1456
        %v1458 = vpop.f32.mrf.mxu0
        %v1459 = vadd.f32 0.0, %v1458
        %v1460 = vpop.f32.mrf.mxu0
        %v1461 = vadd.f32 0.0, %v1460
        %v1462 = vpop.f32.mrf.mxu0
        %v1463 = vadd.f32 0.0, %v1462
        %1464 = vdwg.mxu0
        %v1465 = vld [vmem:[#allocation8] sm:$0xff]
        %v1466 = vld [vmem:[#allocation8 + $0x8] sm:$0xff]
        %v1467 = vld [vmem:[#allocation8 + $0x10] sm:$0xff]
        %v1468 = vld [vmem:[#allocation8 + $0x18] sm:$0xff]
        %v1469 = vld [vmem:[#allocation8 + $0x20] sm:$0xff]
        %v1470 = vld [vmem:[#allocation8 + $0x28] sm:$0xff]
        %v1471 = vld [vmem:[#allocation8 + $0x30] sm:$0xff]
        %v1472 = vld [vmem:[#allocation8 + $0x38] sm:$0xff]
        %v1473 = vld [vmem:[#allocation8 + $0x40] sm:$0xff]
        %v1474 = vld [vmem:[#allocation8 + $0x48] sm:$0xff]
        %v1475 = vld [vmem:[#allocation8 + $0x50] sm:$0xff]
        %v1476 = vld [vmem:[#allocation8 + $0x58] sm:$0xff]
        %v1477 = vld [vmem:[#allocation8 + $0x60] sm:$0xff]
        %v1478 = vld [vmem:[#allocation8 + $0x68] sm:$0xff]
        %v1479 = vld [vmem:[#allocation8 + $0x70] sm:$0xff]
        %v1480 = vld [vmem:[#allocation8 + $0x78] sm:$0xff]
        %v1481 = vld [vmem:[#allocation8 + $0x80] sm:$0xff]
        %v1482 = vld [vmem:[#allocation8 + $0x88] sm:$0xff]
        %v1483 = vld [vmem:[#allocation8 + $0x90] sm:$0xff]
        %v1484 = vld [vmem:[#allocation8 + $0x98] sm:$0xff]
        %v1485 = vld [vmem:[#allocation8 + $0xa0] sm:$0xff]
        %v1486 = vld [vmem:[#allocation8 + $0xa8] sm:$0xff]
        %v1487 = vld [vmem:[#allocation8 + $0xb0] sm:$0xff]
        %v1488 = vld [vmem:[#allocation8 + $0xb8] sm:$0xff]
        %v1489 = vld [vmem:[#allocation8 + $0xc0] sm:$0xff]
        %v1490 = vld [vmem:[#allocation8 + $0xc8] sm:$0xff]
        %v1491 = vld [vmem:[#allocation8 + $0xd0] sm:$0xff]
        %v1492 = vld [vmem:[#allocation8 + $0xd8] sm:$0xff]
        %v1493 = vld [vmem:[#allocation8 + $0xe0] sm:$0xff]
        %v1494 = vld [vmem:[#allocation8 + $0xe8] sm:$0xff]
        %v1495 = vld [vmem:[#allocation8 + $0xf0] sm:$0xff]
        %v1496 = vld [vmem:[#allocation8 + $0xf8] sm:$0xff]
        %v1529 = vunpack.c.l.b16 %v1465
        %v1530 = vunpack.c.h.b16 %v1465
        %v1531 = vunpack.c.l.b16 %v1466
        %v1532 = vunpack.c.h.b16 %v1466
        %v1533 = vunpack.c.l.b16 %v1467
        %v1534 = vunpack.c.h.b16 %v1467
        %v1535 = vunpack.c.l.b16 %v1468
        %v1536 = vunpack.c.h.b16 %v1468
        %v1537 = vunpack.c.l.b16 %v1469
        %v1538 = vunpack.c.h.b16 %v1469
        %v1539 = vunpack.c.l.b16 %v1470
        %v1540 = vunpack.c.h.b16 %v1470
        %v1541 = vunpack.c.l.b16 %v1471
        %v1542 = vunpack.c.h.b16 %v1471
        %v1543 = vunpack.c.l.b16 %v1472
        %v1544 = vunpack.c.h.b16 %v1472
        %v1545 = vunpack.c.l.b16 %v1473
        %v1546 = vunpack.c.h.b16 %v1473
        %v1547 = vunpack.c.l.b16 %v1474
        %v1548 = vunpack.c.h.b16 %v1474
        %v1549 = vunpack.c.l.b16 %v1475
        %v1550 = vunpack.c.h.b16 %v1475
        %v1551 = vunpack.c.l.b16 %v1476
        %v1552 = vunpack.c.h.b16 %v1476
        %v1553 = vunpack.c.l.b16 %v1477
        %v1554 = vunpack.c.h.b16 %v1477
        %v1555 = vunpack.c.l.b16 %v1478
        %v1556 = vunpack.c.h.b16 %v1478
        %v1557 = vunpack.c.l.b16 %v1479
        %v1558 = vunpack.c.h.b16 %v1479
        %v1559 = vunpack.c.l.b16 %v1480
        %v1560 = vunpack.c.h.b16 %v1480
        %v1561 = vunpack.c.l.b16 %v1481
        %v1562 = vunpack.c.h.b16 %v1481
        %v1563 = vunpack.c.l.b16 %v1482
        %v1564 = vunpack.c.h.b16 %v1482
        %v1565 = vunpack.c.l.b16 %v1483
        %v1566 = vunpack.c.h.b16 %v1483
        %v1567 = vunpack.c.l.b16 %v1484
        %v1568 = vunpack.c.h.b16 %v1484
        %v1569 = vunpack.c.l.b16 %v1485
        %v1570 = vunpack.c.h.b16 %v1485
        %v1571 = vunpack.c.l.b16 %v1486
        %v1572 = vunpack.c.h.b16 %v1486
        %v1573 = vunpack.c.l.b16 %v1487
        %v1574 = vunpack.c.h.b16 %v1487
        %v1575 = vunpack.c.l.b16 %v1488
        %v1576 = vunpack.c.h.b16 %v1488
        %v1577 = vunpack.c.l.b16 %v1489
        %v1578 = vunpack.c.h.b16 %v1489
        %v1579 = vunpack.c.l.b16 %v1490
        %v1580 = vunpack.c.h.b16 %v1490
        %v1581 = vunpack.c.l.b16 %v1491
        %v1582 = vunpack.c.h.b16 %v1491
        %v1583 = vunpack.c.l.b16 %v1492
        %v1584 = vunpack.c.h.b16 %v1492
        %v1585 = vunpack.c.l.b16 %v1493
        %v1586 = vunpack.c.h.b16 %v1493
        %v1587 = vunpack.c.l.b16 %v1494
        %v1588 = vunpack.c.h.b16 %v1494
        %v1589 = vunpack.c.l.b16 %v1495
        %v1590 = vunpack.c.h.b16 %v1495
        %v1591 = vunpack.c.l.b16 %v1496
        %v1592 = vunpack.c.h.b16 %v1496
        %v1593 = vpack.c.b16 %v1531, %v1529
        %v1594 = vpack.c.b16 %v1532, %v1530
        %v1595 = vpack.c.b16 %v1535, %v1533
        %v1596 = vpack.c.b16 %v1536, %v1534
        %v1597 = vpack.c.b16 %v1539, %v1537
        %v1598 = vpack.c.b16 %v1540, %v1538
        %v1599 = vpack.c.b16 %v1543, %v1541
        %v1600 = vpack.c.b16 %v1544, %v1542
        %v1601 = vpack.c.b16 %v1547, %v1545
        %v1602 = vpack.c.b16 %v1548, %v1546
        %v1603 = vpack.c.b16 %v1551, %v1549
        %v1604 = vpack.c.b16 %v1552, %v1550
        %v1605 = vpack.c.b16 %v1555, %v1553
        %v1606 = vpack.c.b16 %v1556, %v1554
        %v1607 = vpack.c.b16 %v1559, %v1557
        %v1608 = vpack.c.b16 %v1560, %v1558
        %v1609 = vpack.c.b16 %v1563, %v1561
        %v1610 = vpack.c.b16 %v1564, %v1562
        %v1611 = vpack.c.b16 %v1567, %v1565
        %v1612 = vpack.c.b16 %v1568, %v1566
        %v1613 = vpack.c.b16 %v1571, %v1569
        %v1614 = vpack.c.b16 %v1572, %v1570
        %v1615 = vpack.c.b16 %v1575, %v1573
        %v1616 = vpack.c.b16 %v1576, %v1574
        %v1617 = vpack.c.b16 %v1579, %v1577
        %v1618 = vpack.c.b16 %v1580, %v1578
        %v1619 = vpack.c.b16 %v1583, %v1581
        %v1620 = vpack.c.b16 %v1584, %v1582
        %v1621 = vpack.c.b16 %v1587, %v1585
        %v1622 = vpack.c.b16 %v1588, %v1586
        %v1623 = vpack.c.b16 %v1591, %v1589
        %v1624 = vpack.c.b16 %v1592, %v1590
        %1657 = vmatprep.subr.bf16.mxu0 %v1608
        %1658 = vmatpush1.bf16.msra.mxu0 %v1607
        %1659 = vmatprep.subr.bf16.mxu0 %v1606
        %1660 = vmatpush1.bf16.msra.mxu0 %v1605
        %1661 = vmatprep.subr.bf16.mxu0 %v1604
        %1662 = vmatpush1.bf16.msra.mxu0 %v1603
        %1663 = vmatprep.subr.bf16.mxu0 %v1602
        %1664 = vmatpush1.bf16.msra.mxu0 %v1601
        %1665 = vmatprep.subr.bf16.mxu0 %v1600
        %1666 = vmatpush1.bf16.msra.mxu0 %v1599
        %1667 = vmatprep.subr.bf16.mxu0 %v1598
        %1668 = vmatpush1.bf16.msra.mxu0 %v1597
        %1669 = vmatprep.subr.bf16.mxu0 %v1596
        %1670 = vmatpush1.bf16.msra.mxu0 %v1595
        %1671 = vmatprep.subr.bf16.mxu0 %v1594
        %1672 = vmatpush1.bf16.msra.mxu0 %v1593
        %1673 = vmatprep.subr.bf16.mxu0 %v1624
        %1674 = vmatpush2.bf16.msra.mxu0 %v1623
        %1675 = vmatprep.subr.bf16.mxu0 %v1622
        %1676 = vmatpush2.bf16.msra.mxu0 %v1621
        %1677 = vmatprep.subr.bf16.mxu0 %v1620
        %1678 = vmatpush2.bf16.msra.mxu0 %v1619
        %1679 = vmatprep.subr.bf16.mxu0 %v1618
        %1680 = vmatpush2.bf16.msra.mxu0 %v1617
        %1681 = vmatprep.subr.bf16.mxu0 %v1616
        %1682 = vmatpush2.bf16.msra.mxu0 %v1615
        %1683 = vmatprep.subr.bf16.mxu0 %v1614
        %1684 = vmatpush2.bf16.msra.mxu0 %v1613
        %1685 = vmatprep.subr.bf16.mxu0 %v1612
        %1686 = vmatpush2.bf16.msra.mxu0 %v1611
        %1687 = vmatprep.subr.bf16.mxu0 %v1610
        %1688 = vmatpush2.bf16.msra.mxu0 %v1609
        %1689 = vmatprep.mubr.bf16.mxu0 %v664
        %1690 = vmatmul.mubr.bf16.gmra.mxu0 %v663
        %v1691 = vpop.f32.mrf.mxu0
        %v1692 = vadd.f32 0.0, %v1691
        %v1693 = vpop.f32.mrf.mxu0
        %v1694 = vadd.f32 0.0, %v1693
        %v1695 = vpop.f32.mrf.mxu0
        %v1696 = vadd.f32 0.0, %v1695
        %v1697 = vpop.f32.mrf.mxu0
        %v1698 = vadd.f32 0.0, %v1697
        %1699 = vmatprep.mubr.bf16.mxu0 %v666
        %1700 = vmatmul.mubr.bf16.gmra.mxu0 %v665
        %v1701 = vpop.f32.mrf.mxu0
        %v1702 = vadd.f32 0.0, %v1701
        %v1703 = vpop.f32.mrf.mxu0
        %v1704 = vadd.f32 0.0, %v1703
        %v1705 = vpop.f32.mrf.mxu0
        %v1706 = vadd.f32 0.0, %v1705
        %v1707 = vpop.f32.mrf.mxu0
        %v1708 = vadd.f32 0.0, %v1707
        %1709 = vmatprep.mubr.bf16.mxu0 %v668
        %1710 = vmatmul.mubr.bf16.gmra.mxu0 %v667
        %v1711 = vpop.f32.mrf.mxu0
        %v1712 = vadd.f32 0.0, %v1711
        %v1713 = vpop.f32.mrf.mxu0
        %v1714 = vadd.f32 0.0, %v1713
        %v1715 = vpop.f32.mrf.mxu0
        %v1716 = vadd.f32 0.0, %v1715
        %v1717 = vpop.f32.mrf.mxu0
        %v1718 = vadd.f32 0.0, %v1717
        %1719 = vmatprep.mubr.bf16.mxu0 %v670
        %1720 = vmatmul.mubr.bf16.gmra.mxu0 %v669
        %v1721 = vpop.f32.mrf.mxu0
        %v1722 = vadd.f32 0.0, %v1721
        %v1723 = vpop.f32.mrf.mxu0
        %v1724 = vadd.f32 0.0, %v1723
        %v1725 = vpop.f32.mrf.mxu0
        %v1726 = vadd.f32 0.0, %v1725
        %v1727 = vpop.f32.mrf.mxu0
        %v1728 = vadd.f32 0.0, %v1727
        %1729 = vmatprep.mubr.bf16.mxu0 %v672
        %1730 = vmatmul.mubr.bf16.gmra.mxu0 %v671
        %v1731 = vpop.f32.mrf.mxu0
        %v1732 = vadd.f32 0.0, %v1731
        %v1733 = vpop.f32.mrf.mxu0
        %v1734 = vadd.f32 0.0, %v1733
        %v1735 = vpop.f32.mrf.mxu0
        %v1736 = vadd.f32 0.0, %v1735
        %v1737 = vpop.f32.mrf.mxu0
        %v1738 = vadd.f32 0.0, %v1737
        %1739 = vmatprep.mubr.bf16.mxu0 %v674
        %1740 = vmatmul.mubr.bf16.gmra.mxu0 %v673
        %v1741 = vpop.f32.mrf.mxu0
        %v1742 = vadd.f32 0.0, %v1741
        %v1743 = vpop.f32.mrf.mxu0
        %v1744 = vadd.f32 0.0, %v1743
        %v1745 = vpop.f32.mrf.mxu0
        %v1746 = vadd.f32 0.0, %v1745
        %v1747 = vpop.f32.mrf.mxu0
        %v1748 = vadd.f32 0.0, %v1747
        %1749 = vmatprep.mubr.bf16.mxu0 %v676
        %1750 = vmatmul.mubr.bf16.gmra.mxu0 %v675
        %v1751 = vpop.f32.mrf.mxu0
        %v1752 = vadd.f32 0.0, %v1751
        %v1753 = vpop.f32.mrf.mxu0
        %v1754 = vadd.f32 0.0, %v1753
        %v1755 = vpop.f32.mrf.mxu0
        %v1756 = vadd.f32 0.0, %v1755
        %v1757 = vpop.f32.mrf.mxu0
        %v1758 = vadd.f32 0.0, %v1757
        %1759 = vmatprep.mubr.bf16.mxu0 %v678
        %1760 = vmatmul.mubr.bf16.gmra.mxu0 %v677
        %v1761 = vpop.f32.mrf.mxu0
        %v1762 = vadd.f32 0.0, %v1761
        %v1763 = vpop.f32.mrf.mxu0
        %v1764 = vadd.f32 0.0, %v1763
        %v1765 = vpop.f32.mrf.mxu0
        %v1766 = vadd.f32 0.0, %v1765
        %v1767 = vpop.f32.mrf.mxu0
        %v1768 = vadd.f32 0.0, %v1767
        %1769 = vmatprep.mubr.bf16.mxu0 %v680
        %1770 = vmatmul.mubr.bf16.gmra.mxu0 %v679
        %v1771 = vpop.f32.mrf.mxu0
        %v1772 = vadd.f32 0.0, %v1771
        %v1773 = vpop.f32.mrf.mxu0
        %v1774 = vadd.f32 0.0, %v1773
        %v1775 = vpop.f32.mrf.mxu0
        %v1776 = vadd.f32 0.0, %v1775
        %v1777 = vpop.f32.mrf.mxu0
        %v1778 = vadd.f32 0.0, %v1777
        %1779 = vmatprep.mubr.bf16.mxu0 %v682
        %1780 = vmatmul.mubr.bf16.gmra.mxu0 %v681
        %v1781 = vpop.f32.mrf.mxu0
        %v1782 = vadd.f32 0.0, %v1781
        %v1783 = vpop.f32.mrf.mxu0
        %v1784 = vadd.f32 0.0, %v1783
        %v1785 = vpop.f32.mrf.mxu0
        %v1786 = vadd.f32 0.0, %v1785
        %v1787 = vpop.f32.mrf.mxu0
        %v1788 = vadd.f32 0.0, %v1787
        %1789 = vmatprep.mubr.bf16.mxu0 %v684
        %1790 = vmatmul.mubr.bf16.gmra.mxu0 %v683
        %v1791 = vpop.f32.mrf.mxu0
        %v1792 = vadd.f32 0.0, %v1791
        %v1793 = vpop.f32.mrf.mxu0
        %v1794 = vadd.f32 0.0, %v1793
        %v1795 = vpop.f32.mrf.mxu0
        %v1796 = vadd.f32 0.0, %v1795
        %v1797 = vpop.f32.mrf.mxu0
        %v1798 = vadd.f32 0.0, %v1797
        %1799 = vmatprep.mubr.bf16.mxu0 %v686
        %1800 = vmatmul.mubr.bf16.gmra.mxu0 %v685
        %v1801 = vpop.f32.mrf.mxu0
        %v1802 = vadd.f32 0.0, %v1801
        %v1803 = vpop.f32.mrf.mxu0
        %v1804 = vadd.f32 0.0, %v1803
        %v1805 = vpop.f32.mrf.mxu0
        %v1806 = vadd.f32 0.0, %v1805
        %v1807 = vpop.f32.mrf.mxu0
        %v1808 = vadd.f32 0.0, %v1807
        %1809 = vmatprep.mubr.bf16.mxu0 %v688
        %1810 = vmatmul.mubr.bf16.gmra.mxu0 %v687
        %v1811 = vpop.f32.mrf.mxu0
        %v1812 = vadd.f32 0.0, %v1811
        %v1813 = vpop.f32.mrf.mxu0
        %v1814 = vadd.f32 0.0, %v1813
        %v1815 = vpop.f32.mrf.mxu0
        %v1816 = vadd.f32 0.0, %v1815
        %v1817 = vpop.f32.mrf.mxu0
        %v1818 = vadd.f32 0.0, %v1817
        %1819 = vmatprep.mubr.bf16.mxu0 %v690
        %1820 = vmatmul.mubr.bf16.gmra.mxu0 %v689
        %v1821 = vpop.f32.mrf.mxu0
        %v1822 = vadd.f32 0.0, %v1821
        %v1823 = vpop.f32.mrf.mxu0
        %v1824 = vadd.f32 0.0, %v1823
        %v1825 = vpop.f32.mrf.mxu0
        %v1826 = vadd.f32 0.0, %v1825
        %v1827 = vpop.f32.mrf.mxu0
        %v1828 = vadd.f32 0.0, %v1827
        %1829 = vmatprep.mubr.bf16.mxu0 %v692
        %1830 = vmatmul.mubr.bf16.gmra.mxu0 %v691
        %v1831 = vpop.f32.mrf.mxu0
        %v1832 = vadd.f32 0.0, %v1831
        %v1833 = vpop.f32.mrf.mxu0
        %v1834 = vadd.f32 0.0, %v1833
        %v1835 = vpop.f32.mrf.mxu0
        %v1836 = vadd.f32 0.0, %v1835
        %v1837 = vpop.f32.mrf.mxu0
        %v1838 = vadd.f32 0.0, %v1837
        %1839 = vmatprep.mubr.bf16.mxu0 %v694
        %1840 = vmatmul.mubr.bf16.gmra.mxu0 %v693
        %v1841 = vpop.f32.mrf.mxu0
        %v1842 = vadd.f32 0.0, %v1841
        %v1843 = vpop.f32.mrf.mxu0
        %v1844 = vadd.f32 0.0, %v1843
        %v1845 = vpop.f32.mrf.mxu0
        %v1846 = vadd.f32 0.0, %v1845
        %v1847 = vpop.f32.mrf.mxu0
        %v1848 = vadd.f32 0.0, %v1847
        %1849 = vdwg.mxu0
        %v1850 = vld [vmem:[#allocation10] sm:$0xff]
        %v1851 = vld [vmem:[#allocation10 + $0x8] sm:$0xff]
        %v1852 = vld [vmem:[#allocation10 + $0x10] sm:$0xff]
        %v1853 = vld [vmem:[#allocation10 + $0x18] sm:$0xff]
        %v1854 = vld [vmem:[#allocation10 + $0x20] sm:$0xff]
        %v1855 = vld [vmem:[#allocation10 + $0x28] sm:$0xff]
        %v1856 = vld [vmem:[#allocation10 + $0x30] sm:$0xff]
        %v1857 = vld [vmem:[#allocation10 + $0x38] sm:$0xff]
        %v1858 = vld [vmem:[#allocation10 + $0x40] sm:$0xff]
        %v1859 = vld [vmem:[#allocation10 + $0x48] sm:$0xff]
        %v1860 = vld [vmem:[#allocation10 + $0x50] sm:$0xff]
        %v1861 = vld [vmem:[#allocation10 + $0x58] sm:$0xff]
        %v1862 = vld [vmem:[#allocation10 + $0x60] sm:$0xff]
        %v1863 = vld [vmem:[#allocation10 + $0x68] sm:$0xff]
        %v1864 = vld [vmem:[#allocation10 + $0x70] sm:$0xff]
        %v1865 = vld [vmem:[#allocation10 + $0x78] sm:$0xff]
        %v1866 = vld [vmem:[#allocation10 + $0x80] sm:$0xff]
        %v1867 = vld [vmem:[#allocation10 + $0x88] sm:$0xff]
        %v1868 = vld [vmem:[#allocation10 + $0x90] sm:$0xff]
        %v1869 = vld [vmem:[#allocation10 + $0x98] sm:$0xff]
        %v1870 = vld [vmem:[#allocation10 + $0xa0] sm:$0xff]
        %v1871 = vld [vmem:[#allocation10 + $0xa8] sm:$0xff]
        %v1872 = vld [vmem:[#allocation10 + $0xb0] sm:$0xff]
        %v1873 = vld [vmem:[#allocation10 + $0xb8] sm:$0xff]
        %v1874 = vld [vmem:[#allocation10 + $0xc0] sm:$0xff]
        %v1875 = vld [vmem:[#allocation10 + $0xc8] sm:$0xff]
        %v1876 = vld [vmem:[#allocation10 + $0xd0] sm:$0xff]
        %v1877 = vld [vmem:[#allocation10 + $0xd8] sm:$0xff]
        %v1878 = vld [vmem:[#allocation10 + $0xe0] sm:$0xff]
        %v1879 = vld [vmem:[#allocation10 + $0xe8] sm:$0xff]
        %v1880 = vld [vmem:[#allocation10 + $0xf0] sm:$0xff]
        %v1881 = vld [vmem:[#allocation10 + $0xf8] sm:$0xff]
        %v1882 = vld [vmem:[#allocation11] sm:$0xff]
        %v1883 = vld [vmem:[#allocation11 + $0x8] sm:$0xff]
        %v1884 = vld [vmem:[#allocation11 + $0x10] sm:$0xff]
        %v1885 = vld [vmem:[#allocation11 + $0x18] sm:$0xff]
        %v1886 = vld [vmem:[#allocation11 + $0x20] sm:$0xff]
        %v1887 = vld [vmem:[#allocation11 + $0x28] sm:$0xff]
        %v1888 = vld [vmem:[#allocation11 + $0x30] sm:$0xff]
        %v1889 = vld [vmem:[#allocation11 + $0x38] sm:$0xff]
        %v1890 = vld [vmem:[#allocation11 + $0x40] sm:$0xff]
        %v1891 = vld [vmem:[#allocation11 + $0x48] sm:$0xff]
        %v1892 = vld [vmem:[#allocation11 + $0x50] sm:$0xff]
        %v1893 = vld [vmem:[#allocation11 + $0x58] sm:$0xff]
        %v1894 = vld [vmem:[#allocation11 + $0x60] sm:$0xff]
        %v1895 = vld [vmem:[#allocation11 + $0x68] sm:$0xff]
        %v1896 = vld [vmem:[#allocation11 + $0x70] sm:$0xff]
        %v1897 = vld [vmem:[#allocation11 + $0x78] sm:$0xff]
        %v1898 = vld [vmem:[#allocation11 + $0x80] sm:$0xff]
        %v1899 = vld [vmem:[#allocation11 + $0x88] sm:$0xff]
        %v1900 = vld [vmem:[#allocation11 + $0x90] sm:$0xff]
        %v1901 = vld [vmem:[#allocation11 + $0x98] sm:$0xff]
        %v1902 = vld [vmem:[#allocation11 + $0xa0] sm:$0xff]
        %v1903 = vld [vmem:[#allocation11 + $0xa8] sm:$0xff]
        %v1904 = vld [vmem:[#allocation11 + $0xb0] sm:$0xff]
        %v1905 = vld [vmem:[#allocation11 + $0xb8] sm:$0xff]
        %v1906 = vld [vmem:[#allocation11 + $0xc0] sm:$0xff]
        %v1907 = vld [vmem:[#allocation11 + $0xc8] sm:$0xff]
        %v1908 = vld [vmem:[#allocation11 + $0xd0] sm:$0xff]
        %v1909 = vld [vmem:[#allocation11 + $0xd8] sm:$0xff]
        %v1910 = vld [vmem:[#allocation11 + $0xe0] sm:$0xff]
        %v1911 = vld [vmem:[#allocation11 + $0xe8] sm:$0xff]
        %v1912 = vld [vmem:[#allocation11 + $0xf0] sm:$0xff]
        %v1913 = vld [vmem:[#allocation11 + $0xf8] sm:$0xff]
        %1914 = vrot.lane.b32.xlu0 %v922, 64
        %v1915 = vpop.permute.xlu0 %1914
        %1916 = vrot.lane.b32.xlu0 %v926, 64
        %v1917 = vpop.permute.xlu0 %1916
        %1918 = vrot.lane.b32.xlu0 %v932, 64
        %v1919 = vpop.permute.xlu0 %1918
        %1920 = vrot.lane.b32.xlu0 %v936, 64
        %v1921 = vpop.permute.xlu0 %1920
        %1922 = vrot.lane.b32.xlu0 %v942, 64
        %v1923 = vpop.permute.xlu0 %1922
        %1924 = vrot.lane.b32.xlu0 %v946, 64
        %v1925 = vpop.permute.xlu0 %1924
        %1926 = vrot.lane.b32.xlu0 %v952, 64
        %v1927 = vpop.permute.xlu0 %1926
        %1928 = vrot.lane.b32.xlu0 %v956, 64
        %v1929 = vpop.permute.xlu0 %1928
        %1930 = vrot.lane.b32.xlu0 %v962, 64
        %v1931 = vpop.permute.xlu0 %1930
        %1932 = vrot.lane.b32.xlu0 %v966, 64
        %v1933 = vpop.permute.xlu0 %1932
        %1934 = vrot.lane.b32.xlu0 %v972, 64
        %v1935 = vpop.permute.xlu0 %1934
        %1936 = vrot.lane.b32.xlu0 %v976, 64
        %v1937 = vpop.permute.xlu0 %1936
        %1938 = vrot.lane.b32.xlu0 %v982, 64
        %v1939 = vpop.permute.xlu0 %1938
        %1940 = vrot.lane.b32.xlu0 %v986, 64
        %v1941 = vpop.permute.xlu0 %1940
        %1942 = vrot.lane.b32.xlu0 %v992, 64
        %v1943 = vpop.permute.xlu0 %1942
        %1944 = vrot.lane.b32.xlu0 %v996, 64
        %v1945 = vpop.permute.xlu0 %1944
        %1946 = vrot.lane.b32.xlu0 %v1002, 64
        %v1947 = vpop.permute.xlu0 %1946
        %1948 = vrot.lane.b32.xlu0 %v1006, 64
        %v1949 = vpop.permute.xlu0 %1948
        %1950 = vrot.lane.b32.xlu0 %v1012, 64
        %v1951 = vpop.permute.xlu0 %1950
        %1952 = vrot.lane.b32.xlu0 %v1016, 64
        %v1953 = vpop.permute.xlu0 %1952
        %1954 = vrot.lane.b32.xlu0 %v1022, 64
        %v1955 = vpop.permute.xlu0 %1954
        %1956 = vrot.lane.b32.xlu0 %v1026, 64
        %v1957 = vpop.permute.xlu0 %1956
        %1958 = vrot.lane.b32.xlu0 %v1032, 64
        %v1959 = vpop.permute.xlu0 %1958
        %1960 = vrot.lane.b32.xlu0 %v1036, 64
        %v1961 = vpop.permute.xlu0 %1960
        %1962 = vrot.lane.b32.xlu0 %v1042, 64
        %v1963 = vpop.permute.xlu0 %1962
        %1964 = vrot.lane.b32.xlu0 %v1046, 64
        %v1965 = vpop.permute.xlu0 %1964
        %1966 = vrot.lane.b32.xlu0 %v1052, 64
        %v1967 = vpop.permute.xlu0 %1966
        %1968 = vrot.lane.b32.xlu0 %v1056, 64
        %v1969 = vpop.permute.xlu0 %1968
        %1970 = vrot.lane.b32.xlu0 %v1062, 64
        %v1971 = vpop.permute.xlu0 %1970
        %1972 = vrot.lane.b32.xlu0 %v1066, 64
        %v1973 = vpop.permute.xlu0 %1972
        %1974 = vrot.lane.b32.xlu0 %v1072, 64
        %v1975 = vpop.permute.xlu0 %1974
        %1976 = vrot.lane.b32.xlu0 %v1076, 64
        %v1977 = vpop.permute.xlu0 %1976
        %1978 = vrot.lane.b32.xlu0 %v1307, 64
        %v1979 = vpop.permute.xlu0 %1978
        %1980 = vrot.lane.b32.xlu0 %v1311, 64
        %v1981 = vpop.permute.xlu0 %1980
        %1982 = vrot.lane.b32.xlu0 %v1317, 64
        %v1983 = vpop.permute.xlu0 %1982
        %1984 = vrot.lane.b32.xlu0 %v1321, 64
        %v1985 = vpop.permute.xlu0 %1984
        %1986 = vrot.lane.b32.xlu0 %v1327, 64
        %v1987 = vpop.permute.xlu0 %1986
        %1988 = vrot.lane.b32.xlu0 %v1331, 64
        %v1989 = vpop.permute.xlu0 %1988
        %1990 = vrot.lane.b32.xlu0 %v1337, 64
        %v1991 = vpop.permute.xlu0 %1990
        %1992 = vrot.lane.b32.xlu0 %v1341, 64
        %v1993 = vpop.permute.xlu0 %1992
        %1994 = vrot.lane.b32.xlu0 %v1347, 64
        %v1995 = vpop.permute.xlu0 %1994
        %1996 = vrot.lane.b32.xlu0 %v1351, 64
        %v1997 = vpop.permute.xlu0 %1996
        %1998 = vrot.lane.b32.xlu0 %v1357, 64
        %v1999 = vpop.permute.xlu0 %1998
        %2000 = vrot.lane.b32.xlu0 %v1361, 64
        %v2001 = vpop.permute.xlu0 %2000
        %2002 = vrot.lane.b32.xlu0 %v1367, 64
        %v2003 = vpop.permute.xlu0 %2002
        %2004 = vrot.lane.b32.xlu0 %v1371, 64
        %v2005 = vpop.permute.xlu0 %2004
        %2006 = vrot.lane.b32.xlu0 %v1377, 64
        %v2007 = vpop.permute.xlu0 %2006
        %2008 = vrot.lane.b32.xlu0 %v1381, 64
        %v2009 = vpop.permute.xlu0 %2008
        %2010 = vrot.lane.b32.xlu0 %v1387, 64
        %v2011 = vpop.permute.xlu0 %2010
        %2012 = vrot.lane.b32.xlu0 %v1391, 64
        %v2013 = vpop.permute.xlu0 %2012
        %2014 = vrot.lane.b32.xlu0 %v1397, 64
        %v2015 = vpop.permute.xlu0 %2014
        %2016 = vrot.lane.b32.xlu0 %v1401, 64
        %v2017 = vpop.permute.xlu0 %2016
        %2018 = vrot.lane.b32.xlu0 %v1407, 64
        %v2019 = vpop.permute.xlu0 %2018
        %2020 = vrot.lane.b32.xlu0 %v1411, 64
        %v2021 = vpop.permute.xlu0 %2020
        %2022 = vrot.lane.b32.xlu0 %v1417, 64
        %v2023 = vpop.permute.xlu0 %2022
        %2024 = vrot.lane.b32.xlu0 %v1421, 64
        %v2025 = vpop.permute.xlu0 %2024
        %2026 = vrot.lane.b32.xlu0 %v1427, 64
        %v2027 = vpop.permute.xlu0 %2026
        %2028 = vrot.lane.b32.xlu0 %v1431, 64
        %v2029 = vpop.permute.xlu0 %2028
        %2030 = vrot.lane.b32.xlu0 %v1437, 64
        %v2031 = vpop.permute.xlu0 %2030
        %2032 = vrot.lane.b32.xlu0 %v1441, 64
        %v2033 = vpop.permute.xlu0 %2032
        %2034 = vrot.lane.b32.xlu0 %v1447, 64
        %v2035 = vpop.permute.xlu0 %2034
        %2036 = vrot.lane.b32.xlu0 %v1451, 64
        %v2037 = vpop.permute.xlu0 %2036
        %2038 = vrot.lane.b32.xlu0 %v1457, 64
        %v2039 = vpop.permute.xlu0 %2038
        %2040 = vrot.lane.b32.xlu0 %v1461, 64
        %v2041 = vpop.permute.xlu0 %2040
        %v2042 = vmul.f32 %v922, %v1850
        %v2043 = vmul.f32 %v926, %v1851
        %v2044 = vmul.f32 %v932, %v1852
        %v2045 = vmul.f32 %v936, %v1853
        %v2046 = vmul.f32 %v942, %v1854
        %v2047 = vmul.f32 %v946, %v1855
        %v2048 = vmul.f32 %v952, %v1856
        %v2049 = vmul.f32 %v956, %v1857
        %v2050 = vmul.f32 %v962, %v1858
        %v2051 = vmul.f32 %v966, %v1859
        %v2052 = vmul.f32 %v972, %v1860
        %v2053 = vmul.f32 %v976, %v1861
        %v2054 = vmul.f32 %v982, %v1862
        %v2055 = vmul.f32 %v986, %v1863
        %v2056 = vmul.f32 %v992, %v1864
        %v2057 = vmul.f32 %v996, %v1865
        %v2058 = vmul.f32 %v1002, %v1866
        %v2059 = vmul.f32 %v1006, %v1867
        %v2060 = vmul.f32 %v1012, %v1868
        %v2061 = vmul.f32 %v1016, %v1869
        %v2062 = vmul.f32 %v1022, %v1870
        %v2063 = vmul.f32 %v1026, %v1871
        %v2064 = vmul.f32 %v1032, %v1872
        %v2065 = vmul.f32 %v1036, %v1873
        %v2066 = vmul.f32 %v1042, %v1874
        %v2067 = vmul.f32 %v1046, %v1875
        %v2068 = vmul.f32 %v1052, %v1876
        %v2069 = vmul.f32 %v1056, %v1877
        %v2070 = vmul.f32 %v1062, %v1878
        %v2071 = vmul.f32 %v1066, %v1879
        %v2072 = vmul.f32 %v1072, %v1880
        %v2073 = vmul.f32 %v1076, %v1881
        %v2074 = vmul.f32 %v1915, %v1882
        %v2075 = vmul.f32 %v1917, %v1883
        %v2076 = vmul.f32 %v1919, %v1884
        %v2077 = vmul.f32 %v1921, %v1885
        %v2078 = vmul.f32 %v1923, %v1886
        %v2079 = vmul.f32 %v1925, %v1887
        %v2080 = vmul.f32 %v1927, %v1888
        %v2081 = vmul.f32 %v1929, %v1889
        %v2082 = vmul.f32 %v1931, %v1890
        %v2083 = vmul.f32 %v1933, %v1891
        %v2084 = vmul.f32 %v1935, %v1892
        %v2085 = vmul.f32 %v1937, %v1893
        %v2086 = vmul.f32 %v1939, %v1894
        %v2087 = vmul.f32 %v1941, %v1895
        %v2088 = vmul.f32 %v1943, %v1896
        %v2089 = vmul.f32 %v1945, %v1897
        %v2090 = vmul.f32 %v1947, %v1898
        %v2091 = vmul.f32 %v1949, %v1899
        %v2092 = vmul.f32 %v1951, %v1900
        %v2093 = vmul.f32 %v1953, %v1901
        %v2094 = vmul.f32 %v1955, %v1902
        %v2095 = vmul.f32 %v1957, %v1903
        %v2096 = vmul.f32 %v1959, %v1904
        %v2097 = vmul.f32 %v1961, %v1905
        %v2098 = vmul.f32 %v1963, %v1906
        %v2099 = vmul.f32 %v1965, %v1907
        %v2100 = vmul.f32 %v1967, %v1908
        %v2101 = vmul.f32 %v1969, %v1909
        %v2102 = vmul.f32 %v1971, %v1910
        %v2103 = vmul.f32 %v1973, %v1911
        %v2104 = vmul.f32 %v1975, %v1912
        %v2105 = vmul.f32 %v1977, %v1913
        %v2106 = vadd.f32 %v2042, %v2074
        %v2107 = vadd.f32 %v2043, %v2075
        %v2108 = vadd.f32 %v2044, %v2076
        %v2109 = vadd.f32 %v2045, %v2077
        %v2110 = vadd.f32 %v2046, %v2078
        %v2111 = vadd.f32 %v2047, %v2079
        %v2112 = vadd.f32 %v2048, %v2080
        %v2113 = vadd.f32 %v2049, %v2081
        %v2114 = vadd.f32 %v2050, %v2082
        %v2115 = vadd.f32 %v2051, %v2083
        %v2116 = vadd.f32 %v2052, %v2084
        %v2117 = vadd.f32 %v2053, %v2085
        %v2118 = vadd.f32 %v2054, %v2086
        %v2119 = vadd.f32 %v2055, %v2087
        %v2120 = vadd.f32 %v2056, %v2088
        %v2121 = vadd.f32 %v2057, %v2089
        %v2122 = vadd.f32 %v2058, %v2090
        %v2123 = vadd.f32 %v2059, %v2091
        %v2124 = vadd.f32 %v2060, %v2092
        %v2125 = vadd.f32 %v2061, %v2093
        %v2126 = vadd.f32 %v2062, %v2094
        %v2127 = vadd.f32 %v2063, %v2095
        %v2128 = vadd.f32 %v2064, %v2096
        %v2129 = vadd.f32 %v2065, %v2097
        %v2130 = vadd.f32 %v2066, %v2098
        %v2131 = vadd.f32 %v2067, %v2099
        %v2132 = vadd.f32 %v2068, %v2100
        %v2133 = vadd.f32 %v2069, %v2101
        %v2134 = vadd.f32 %v2070, %v2102
        %v2135 = vadd.f32 %v2071, %v2103
        %v2136 = vadd.f32 %v2072, %v2104
        %v2137 = vadd.f32 %v2073, %v2105
        %v2138 = vpack.c.bf16 %v2107, %v2106
        %v2139 = vpack.c.bf16 %v2109, %v2108
        %v2140 = vpack.c.bf16 %v2111, %v2110
        %v2141 = vpack.c.bf16 %v2113, %v2112
        %v2142 = vpack.c.bf16 %v2115, %v2114
        %v2143 = vpack.c.bf16 %v2117, %v2116
        %v2144 = vpack.c.bf16 %v2119, %v2118
        %v2145 = vpack.c.bf16 %v2121, %v2120
        %v2146 = vpack.c.bf16 %v2123, %v2122
        %v2147 = vpack.c.bf16 %v2125, %v2124
        %v2148 = vpack.c.bf16 %v2127, %v2126
        %v2149 = vpack.c.bf16 %v2129, %v2128
        %v2150 = vpack.c.bf16 %v2131, %v2130
        %v2151 = vpack.c.bf16 %v2133, %v2132
        %v2152 = vpack.c.bf16 %v2135, %v2134
        %v2153 = vpack.c.bf16 %v2137, %v2136
        %v2170 = vunpack.c.l.b16 %v2138
        %v2171 = vunpack.c.h.b16 %v2138
        %v2172 = vunpack.c.l.b16 %v2139
        %v2173 = vunpack.c.h.b16 %v2139
        %v2174 = vunpack.c.l.b16 %v2140
        %v2175 = vunpack.c.h.b16 %v2140
        %v2176 = vunpack.c.l.b16 %v2141
        %v2177 = vunpack.c.h.b16 %v2141
        %v2178 = vunpack.c.l.b16 %v2142
        %v2179 = vunpack.c.h.b16 %v2142
        %v2180 = vunpack.c.l.b16 %v2143
        %v2181 = vunpack.c.h.b16 %v2143
        %v2182 = vunpack.c.l.b16 %v2144
        %v2183 = vunpack.c.h.b16 %v2144
        %v2184 = vunpack.c.l.b16 %v2145
        %v2185 = vunpack.c.h.b16 %v2145
        %v2186 = vunpack.c.l.b16 %v2146
        %v2187 = vunpack.c.h.b16 %v2146
        %v2188 = vunpack.c.l.b16 %v2147
        %v2189 = vunpack.c.h.b16 %v2147
        %v2190 = vunpack.c.l.b16 %v2148
        %v2191 = vunpack.c.h.b16 %v2148
        %v2192 = vunpack.c.l.b16 %v2149
        %v2193 = vunpack.c.h.b16 %v2149
        %v2194 = vunpack.c.l.b16 %v2150
        %v2195 = vunpack.c.h.b16 %v2150
        %v2196 = vunpack.c.l.b16 %v2151
        %v2197 = vunpack.c.h.b16 %v2151
        %v2198 = vunpack.c.l.b16 %v2152
        %v2199 = vunpack.c.h.b16 %v2152
        %v2200 = vunpack.c.l.b16 %v2153
        %v2201 = vunpack.c.h.b16 %v2153
        %v2202 = vpack.c.b16 %v2170, %v2170
        %v2203 = vpack.c.b16 %v2171, %v2171
        %v2204 = vpack.c.b16 %v2172, %v2172
        %v2205 = vpack.c.b16 %v2173, %v2173
        %v2206 = vpack.c.b16 %v2174, %v2174
        %v2207 = vpack.c.b16 %v2175, %v2175
        %v2208 = vpack.c.b16 %v2176, %v2176
        %v2209 = vpack.c.b16 %v2177, %v2177
        %v2210 = vpack.c.b16 %v2178, %v2178
        %v2211 = vpack.c.b16 %v2179, %v2179
        %v2212 = vpack.c.b16 %v2180, %v2180
        %v2213 = vpack.c.b16 %v2181, %v2181
        %v2214 = vpack.c.b16 %v2182, %v2182
        %v2215 = vpack.c.b16 %v2183, %v2183
        %v2216 = vpack.c.b16 %v2184, %v2184
        %v2217 = vpack.c.b16 %v2185, %v2185
        %v2218 = vpack.c.b16 %v2186, %v2186
        %v2219 = vpack.c.b16 %v2187, %v2187
        %v2220 = vpack.c.b16 %v2188, %v2188
        %v2221 = vpack.c.b16 %v2189, %v2189
        %v2222 = vpack.c.b16 %v2190, %v2190
        %v2223 = vpack.c.b16 %v2191, %v2191
        %v2224 = vpack.c.b16 %v2192, %v2192
        %v2225 = vpack.c.b16 %v2193, %v2193
        %v2226 = vpack.c.b16 %v2194, %v2194
        %v2227 = vpack.c.b16 %v2195, %v2195
        %v2228 = vpack.c.b16 %v2196, %v2196
        %v2229 = vpack.c.b16 %v2197, %v2197
        %v2230 = vpack.c.b16 %v2198, %v2198
        %v2231 = vpack.c.b16 %v2199, %v2199
        %v2232 = vpack.c.b16 %v2200, %v2200
        %v2233 = vpack.c.b16 %v2201, %v2201
        %2266 = vst [vmem:[%s476] sm:$0xf] %v2202
        %2267 = vst [vmem:[%s476 + $0x8] sm:$0xf] %v2203
        %2268 = vst [vmem:[%s476 + $0x10] sm:$0xf] %v2204
        %2269 = vst [vmem:[%s476 + $0x18] sm:$0xf] %v2205
        %2270 = vst [vmem:[%s476 + $0x20] sm:$0xf] %v2206
        %2271 = vst [vmem:[%s476 + $0x28] sm:$0xf] %v2207
        %2272 = vst [vmem:[%s476 + $0x30] sm:$0xf] %v2208
        %2273 = vst [vmem:[%s476 + $0x38] sm:$0xf] %v2209
        %2274 = vst [vmem:[%s476 + $0x40] sm:$0xf] %v2210
        %2275 = vst [vmem:[%s476 + $0x48] sm:$0xf] %v2211
        %2276 = vst [vmem:[%s476 + $0x50] sm:$0xf] %v2212
        %2277 = vst [vmem:[%s476 + $0x58] sm:$0xf] %v2213
        %2278 = vst [vmem:[%s476 + $0x60] sm:$0xf] %v2214
        %2279 = vst [vmem:[%s476 + $0x68] sm:$0xf] %v2215
        %2280 = vst [vmem:[%s476 + $0x70] sm:$0xf] %v2216
        %2281 = vst [vmem:[%s476 + $0x78] sm:$0xf] %v2217
        %2282 = vst [vmem:[%s476 + $0x80] sm:$0xf] %v2218
        %2283 = vst [vmem:[%s476 + $0x88] sm:$0xf] %v2219
        %2284 = vst [vmem:[%s476 + $0x90] sm:$0xf] %v2220
        %2285 = vst [vmem:[%s476 + $0x98] sm:$0xf] %v2221
        %2286 = vst [vmem:[%s476 + $0xa0] sm:$0xf] %v2222
        %2287 = vst [vmem:[%s476 + $0xa8] sm:$0xf] %v2223
        %2288 = vst [vmem:[%s476 + $0xb0] sm:$0xf] %v2224
        %2289 = vst [vmem:[%s476 + $0xb8] sm:$0xf] %v2225
        %2290 = vst [vmem:[%s476 + $0xc0] sm:$0xf] %v2226
        %2291 = vst [vmem:[%s476 + $0xc8] sm:$0xf] %v2227
        %2292 = vst [vmem:[%s476 + $0xd0] sm:$0xf] %v2228
        %2293 = vst [vmem:[%s476 + $0xd8] sm:$0xf] %v2229
        %2294 = vst [vmem:[%s476 + $0xe0] sm:$0xf] %v2230
        %2295 = vst [vmem:[%s476 + $0xe8] sm:$0xf] %v2231
        %2296 = vst [vmem:[%s476 + $0xf0] sm:$0xf] %v2232
        %2297 = vst [vmem:[%s476 + $0xf8] sm:$0xf] %v2233
        %v2298 = vmul.f32 %v1307, %v1850
        %v2299 = vmul.f32 %v1311, %v1851
        %v2300 = vmul.f32 %v1317, %v1852
        %v2301 = vmul.f32 %v1321, %v1853
        %v2302 = vmul.f32 %v1327, %v1854
        %v2303 = vmul.f32 %v1331, %v1855
        %v2304 = vmul.f32 %v1337, %v1856
        %v2305 = vmul.f32 %v1341, %v1857
        %v2306 = vmul.f32 %v1347, %v1858
        %v2307 = vmul.f32 %v1351, %v1859
        %v2308 = vmul.f32 %v1357, %v1860
        %v2309 = vmul.f32 %v1361, %v1861
        %v2310 = vmul.f32 %v1367, %v1862
        %v2311 = vmul.f32 %v1371, %v1863
        %v2312 = vmul.f32 %v1377, %v1864
        %v2313 = vmul.f32 %v1381, %v1865
        %v2314 = vmul.f32 %v1387, %v1866
        %v2315 = vmul.f32 %v1391, %v1867
        %v2316 = vmul.f32 %v1397, %v1868
        %v2317 = vmul.f32 %v1401, %v1869
        %v2318 = vmul.f32 %v1407, %v1870
        %v2319 = vmul.f32 %v1411, %v1871
        %v2320 = vmul.f32 %v1417, %v1872
        %v2321 = vmul.f32 %v1421, %v1873
        %v2322 = vmul.f32 %v1427, %v1874
        %v2323 = vmul.f32 %v1431, %v1875
        %v2324 = vmul.f32 %v1437, %v1876
        %v2325 = vmul.f32 %v1441, %v1877
        %v2326 = vmul.f32 %v1447, %v1878
        %v2327 = vmul.f32 %v1451, %v1879
        %v2328 = vmul.f32 %v1457, %v1880
        %v2329 = vmul.f32 %v1461, %v1881
        %v2330 = vmul.f32 %v1979, %v1882
        %v2331 = vmul.f32 %v1981, %v1883
        %v2332 = vmul.f32 %v1983, %v1884
        %v2333 = vmul.f32 %v1985, %v1885
        %v2334 = vmul.f32 %v1987, %v1886
        %v2335 = vmul.f32 %v1989, %v1887
        %v2336 = vmul.f32 %v1991, %v1888
        %v2337 = vmul.f32 %v1993, %v1889
        %v2338 = vmul.f32 %v1995, %v1890
        %v2339 = vmul.f32 %v1997, %v1891
        %v2340 = vmul.f32 %v1999, %v1892
        %v2341 = vmul.f32 %v2001, %v1893
        %v2342 = vmul.f32 %v2003, %v1894
        %v2343 = vmul.f32 %v2005, %v1895
        %v2344 = vmul.f32 %v2007, %v1896
        %v2345 = vmul.f32 %v2009, %v1897
        %v2346 = vmul.f32 %v2011, %v1898
        %v2347 = vmul.f32 %v2013, %v1899
        %v2348 = vmul.f32 %v2015, %v1900
        %v2349 = vmul.f32 %v2017, %v1901
        %v2350 = vmul.f32 %v2019, %v1902
        %v2351 = vmul.f32 %v2021, %v1903
        %v2352 = vmul.f32 %v2023, %v1904
        %v2353 = vmul.f32 %v2025, %v1905
        %v2354 = vmul.f32 %v2027, %v1906
        %v2355 = vmul.f32 %v2029, %v1907
        %v2356 = vmul.f32 %v2031, %v1908
        %v2357 = vmul.f32 %v2033, %v1909
        %v2358 = vmul.f32 %v2035, %v1910
        %v2359 = vmul.f32 %v2037, %v1911
        %v2360 = vmul.f32 %v2039, %v1912
        %v2361 = vmul.f32 %v2041, %v1913
        %v2362 = vadd.f32 %v2298, %v2330
        %v2363 = vadd.f32 %v2299, %v2331
        %v2364 = vadd.f32 %v2300, %v2332
        %v2365 = vadd.f32 %v2301, %v2333
        %v2366 = vadd.f32 %v2302, %v2334
        %v2367 = vadd.f32 %v2303, %v2335
        %v2368 = vadd.f32 %v2304, %v2336
        %v2369 = vadd.f32 %v2305, %v2337
        %v2370 = vadd.f32 %v2306, %v2338
        %v2371 = vadd.f32 %v2307, %v2339
        %v2372 = vadd.f32 %v2308, %v2340
        %v2373 = vadd.f32 %v2309, %v2341
        %v2374 = vadd.f32 %v2310, %v2342
        %v2375 = vadd.f32 %v2311, %v2343
        %v2376 = vadd.f32 %v2312, %v2344
        %v2377 = vadd.f32 %v2313, %v2345
        %v2378 = vadd.f32 %v2314, %v2346
        %v2379 = vadd.f32 %v2315, %v2347
        %v2380 = vadd.f32 %v2316, %v2348
        %v2381 = vadd.f32 %v2317, %v2349
        %v2382 = vadd.f32 %v2318, %v2350
        %v2383 = vadd.f32 %v2319, %v2351
        %v2384 = vadd.f32 %v2320, %v2352
        %v2385 = vadd.f32 %v2321, %v2353
        %v2386 = vadd.f32 %v2322, %v2354
        %v2387 = vadd.f32 %v2323, %v2355
        %v2388 = vadd.f32 %v2324, %v2356
        %v2389 = vadd.f32 %v2325, %v2357
        %v2390 = vadd.f32 %v2326, %v2358
        %v2391 = vadd.f32 %v2327, %v2359
        %v2392 = vadd.f32 %v2328, %v2360
        %v2393 = vadd.f32 %v2329, %v2361
        %v2394 = vpack.c.bf16 %v2363, %v2362
        %v2395 = vpack.c.bf16 %v2365, %v2364
        %v2396 = vpack.c.bf16 %v2367, %v2366
        %v2397 = vpack.c.bf16 %v2369, %v2368
        %v2398 = vpack.c.bf16 %v2371, %v2370
        %v2399 = vpack.c.bf16 %v2373, %v2372
        %v2400 = vpack.c.bf16 %v2375, %v2374
        %v2401 = vpack.c.bf16 %v2377, %v2376
        %v2402 = vpack.c.bf16 %v2379, %v2378
        %v2403 = vpack.c.bf16 %v2381, %v2380
        %v2404 = vpack.c.bf16 %v2383, %v2382
        %v2405 = vpack.c.bf16 %v2385, %v2384
        %v2406 = vpack.c.bf16 %v2387, %v2386
        %v2407 = vpack.c.bf16 %v2389, %v2388
        %v2408 = vpack.c.bf16 %v2391, %v2390
        %v2409 = vpack.c.bf16 %v2393, %v2392
        %v2426 = vunpack.c.l.b16 %v2394
        %v2427 = vunpack.c.h.b16 %v2394
        %v2428 = vunpack.c.l.b16 %v2395
        %v2429 = vunpack.c.h.b16 %v2395
        %v2430 = vunpack.c.l.b16 %v2396
        %v2431 = vunpack.c.h.b16 %v2396
        %v2432 = vunpack.c.l.b16 %v2397
        %v2433 = vunpack.c.h.b16 %v2397
        %v2434 = vunpack.c.l.b16 %v2398
        %v2435 = vunpack.c.h.b16 %v2398
        %v2436 = vunpack.c.l.b16 %v2399
        %v2437 = vunpack.c.h.b16 %v2399
        %v2438 = vunpack.c.l.b16 %v2400
        %v2439 = vunpack.c.h.b16 %v2400
        %v2440 = vunpack.c.l.b16 %v2401
        %v2441 = vunpack.c.h.b16 %v2401
        %v2442 = vunpack.c.l.b16 %v2402
        %v2443 = vunpack.c.h.b16 %v2402
        %v2444 = vunpack.c.l.b16 %v2403
        %v2445 = vunpack.c.h.b16 %v2403
        %v2446 = vunpack.c.l.b16 %v2404
        %v2447 = vunpack.c.h.b16 %v2404
        %v2448 = vunpack.c.l.b16 %v2405
        %v2449 = vunpack.c.h.b16 %v2405
        %v2450 = vunpack.c.l.b16 %v2406
        %v2451 = vunpack.c.h.b16 %v2406
        %v2452 = vunpack.c.l.b16 %v2407
        %v2453 = vunpack.c.h.b16 %v2407
        %v2454 = vunpack.c.l.b16 %v2408
        %v2455 = vunpack.c.h.b16 %v2408
        %v2456 = vunpack.c.l.b16 %v2409
        %v2457 = vunpack.c.h.b16 %v2409
        %v2458 = vpack.c.b16 %v2426, %v2426
        %v2459 = vpack.c.b16 %v2427, %v2427
        %v2460 = vpack.c.b16 %v2428, %v2428
        %v2461 = vpack.c.b16 %v2429, %v2429
        %v2462 = vpack.c.b16 %v2430, %v2430
        %v2463 = vpack.c.b16 %v2431, %v2431
        %v2464 = vpack.c.b16 %v2432, %v2432
        %v2465 = vpack.c.b16 %v2433, %v2433
        %v2466 = vpack.c.b16 %v2434, %v2434
        %v2467 = vpack.c.b16 %v2435, %v2435
        %v2468 = vpack.c.b16 %v2436, %v2436
        %v2469 = vpack.c.b16 %v2437, %v2437
        %v2470 = vpack.c.b16 %v2438, %v2438
        %v2471 = vpack.c.b16 %v2439, %v2439
        %v2472 = vpack.c.b16 %v2440, %v2440
        %v2473 = vpack.c.b16 %v2441, %v2441
        %v2474 = vpack.c.b16 %v2442, %v2442
        %v2475 = vpack.c.b16 %v2443, %v2443
        %v2476 = vpack.c.b16 %v2444, %v2444
        %v2477 = vpack.c.b16 %v2445, %v2445
        %v2478 = vpack.c.b16 %v2446, %v2446
        %v2479 = vpack.c.b16 %v2447, %v2447
        %v2480 = vpack.c.b16 %v2448, %v2448
        %v2481 = vpack.c.b16 %v2449, %v2449
        %v2482 = vpack.c.b16 %v2450, %v2450
        %v2483 = vpack.c.b16 %v2451, %v2451
        %v2484 = vpack.c.b16 %v2452, %v2452
        %v2485 = vpack.c.b16 %v2453, %v2453
        %v2486 = vpack.c.b16 %v2454, %v2454
        %v2487 = vpack.c.b16 %v2455, %v2455
        %v2488 = vpack.c.b16 %v2456, %v2456
        %v2489 = vpack.c.b16 %v2457, %v2457
        %2522 = vst [vmem:[%s483] sm:$0xf] %v2458
        %2523 = vst [vmem:[%s483 + $0x8] sm:$0xf] %v2459
        %2524 = vst [vmem:[%s483 + $0x10] sm:$0xf] %v2460
        %2525 = vst [vmem:[%s483 + $0x18] sm:$0xf] %v2461
        %2526 = vst [vmem:[%s483 + $0x20] sm:$0xf] %v2462
        %2527 = vst [vmem:[%s483 + $0x28] sm:$0xf] %v2463
        %2528 = vst [vmem:[%s483 + $0x30] sm:$0xf] %v2464
        %2529 = vst [vmem:[%s483 + $0x38] sm:$0xf] %v2465
        %2530 = vst [vmem:[%s483 + $0x40] sm:$0xf] %v2466
        %2531 = vst [vmem:[%s483 + $0x48] sm:$0xf] %v2467
        %2532 = vst [vmem:[%s483 + $0x50] sm:$0xf] %v2468
        %2533 = vst [vmem:[%s483 + $0x58] sm:$0xf] %v2469
        %2534 = vst [vmem:[%s483 + $0x60] sm:$0xf] %v2470
        %2535 = vst [vmem:[%s483 + $0x68] sm:$0xf] %v2471
        %2536 = vst [vmem:[%s483 + $0x70] sm:$0xf] %v2472
        %2537 = vst [vmem:[%s483 + $0x78] sm:$0xf] %v2473
        %2538 = vst [vmem:[%s483 + $0x80] sm:$0xf] %v2474
        %2539 = vst [vmem:[%s483 + $0x88] sm:$0xf] %v2475
        %2540 = vst [vmem:[%s483 + $0x90] sm:$0xf] %v2476
        %2541 = vst [vmem:[%s483 + $0x98] sm:$0xf] %v2477
        %2542 = vst [vmem:[%s483 + $0xa0] sm:$0xf] %v2478
        %2543 = vst [vmem:[%s483 + $0xa8] sm:$0xf] %v2479
        %2544 = vst [vmem:[%s483 + $0xb0] sm:$0xf] %v2480
        %2545 = vst [vmem:[%s483 + $0xb8] sm:$0xf] %v2481
        %2546 = vst [vmem:[%s483 + $0xc0] sm:$0xf] %v2482
        %2547 = vst [vmem:[%s483 + $0xc8] sm:$0xf] %v2483
        %2548 = vst [vmem:[%s483 + $0xd0] sm:$0xf] %v2484
        %2549 = vst [vmem:[%s483 + $0xd8] sm:$0xf] %v2485
        %2550 = vst [vmem:[%s483 + $0xe0] sm:$0xf] %v2486
        %2551 = vst [vmem:[%s483 + $0xe8] sm:$0xf] %v2487
        %2552 = vst [vmem:[%s483 + $0xf0] sm:$0xf] %v2488
        %2553 = vst [vmem:[%s483 + $0xf8] sm:$0xf] %v2489
        %2554 = vrot.lane.b32.xlu0 %v924, 64
        %v2555 = vpop.permute.xlu0 %2554
        %2556 = vrot.lane.b32.xlu0 %v928, 64
        %v2557 = vpop.permute.xlu0 %2556
        %2558 = vrot.lane.b32.xlu0 %v934, 64
        %v2559 = vpop.permute.xlu0 %2558
        %2560 = vrot.lane.b32.xlu0 %v938, 64
        %v2561 = vpop.permute.xlu0 %2560
        %2562 = vrot.lane.b32.xlu0 %v944, 64
        %v2563 = vpop.permute.xlu0 %2562
        %2564 = vrot.lane.b32.xlu0 %v948, 64
        %v2565 = vpop.permute.xlu0 %2564
        %2566 = vrot.lane.b32.xlu0 %v954, 64
        %v2567 = vpop.permute.xlu0 %2566
        %2568 = vrot.lane.b32.xlu0 %v958, 64
        %v2569 = vpop.permute.xlu0 %2568
        %2570 = vrot.lane.b32.xlu0 %v964, 64
        %v2571 = vpop.permute.xlu0 %2570
        %2572 = vrot.lane.b32.xlu0 %v968, 64
        %v2573 = vpop.permute.xlu0 %2572
        %2574 = vrot.lane.b32.xlu0 %v974, 64
        %v2575 = vpop.permute.xlu0 %2574
        %2576 = vrot.lane.b32.xlu0 %v978, 64
        %v2577 = vpop.permute.xlu0 %2576
        %2578 = vrot.lane.b32.xlu0 %v984, 64
        %v2579 = vpop.permute.xlu0 %2578
        %2580 = vrot.lane.b32.xlu0 %v988, 64
        %v2581 = vpop.permute.xlu0 %2580
        %2582 = vrot.lane.b32.xlu0 %v994, 64
        %v2583 = vpop.permute.xlu0 %2582
        %2584 = vrot.lane.b32.xlu0 %v998, 64
        %v2585 = vpop.permute.xlu0 %2584
        %2586 = vrot.lane.b32.xlu0 %v1004, 64
        %v2587 = vpop.permute.xlu0 %2586
        %2588 = vrot.lane.b32.xlu0 %v1008, 64
        %v2589 = vpop.permute.xlu0 %2588
        %2590 = vrot.lane.b32.xlu0 %v1014, 64
        %v2591 = vpop.permute.xlu0 %2590
        %2592 = vrot.lane.b32.xlu0 %v1018, 64
        %v2593 = vpop.permute.xlu0 %2592
        %2594 = vrot.lane.b32.xlu0 %v1024, 64
        %v2595 = vpop.permute.xlu0 %2594
        %2596 = vrot.lane.b32.xlu0 %v1028, 64
        %v2597 = vpop.permute.xlu0 %2596
        %2598 = vrot.lane.b32.xlu0 %v1034, 64
        %v2599 = vpop.permute.xlu0 %2598
        %2600 = vrot.lane.b32.xlu0 %v1038, 64
        %v2601 = vpop.permute.xlu0 %2600
        %2602 = vrot.lane.b32.xlu0 %v1044, 64
        %v2603 = vpop.permute.xlu0 %2602
        %2604 = vrot.lane.b32.xlu0 %v1048, 64
        %v2605 = vpop.permute.xlu0 %2604
        %2606 = vrot.lane.b32.xlu0 %v1054, 64
        %v2607 = vpop.permute.xlu0 %2606
        %2608 = vrot.lane.b32.xlu0 %v1058, 64
        %v2609 = vpop.permute.xlu0 %2608
        %2610 = vrot.lane.b32.xlu0 %v1064, 64
        %v2611 = vpop.permute.xlu0 %2610
        %2612 = vrot.lane.b32.xlu0 %v1068, 64
        %v2613 = vpop.permute.xlu0 %2612
        %2614 = vrot.lane.b32.xlu0 %v1074, 64
        %v2615 = vpop.permute.xlu0 %2614
        %2616 = vrot.lane.b32.xlu0 %v1078, 64
        %v2617 = vpop.permute.xlu0 %2616
        %2618 = vrot.lane.b32.xlu0 %v1309, 64
        %v2619 = vpop.permute.xlu0 %2618
        %2620 = vrot.lane.b32.xlu0 %v1313, 64
        %v2621 = vpop.permute.xlu0 %2620
        %2622 = vrot.lane.b32.xlu0 %v1319, 64
        %v2623 = vpop.permute.xlu0 %2622
        %2624 = vrot.lane.b32.xlu0 %v1323, 64
        %v2625 = vpop.permute.xlu0 %2624
        %2626 = vrot.lane.b32.xlu0 %v1329, 64
        %v2627 = vpop.permute.xlu0 %2626
        %2628 = vrot.lane.b32.xlu0 %v1333, 64
        %v2629 = vpop.permute.xlu0 %2628
        %2630 = vrot.lane.b32.xlu0 %v1339, 64
        %v2631 = vpop.permute.xlu0 %2630
        %2632 = vrot.lane.b32.xlu0 %v1343, 64
        %v2633 = vpop.permute.xlu0 %2632
        %2634 = vrot.lane.b32.xlu0 %v1349, 64
        %v2635 = vpop.permute.xlu0 %2634
        %2636 = vrot.lane.b32.xlu0 %v1353, 64
        %v2637 = vpop.permute.xlu0 %2636
        %2638 = vrot.lane.b32.xlu0 %v1359, 64
        %v2639 = vpop.permute.xlu0 %2638
        %2640 = vrot.lane.b32.xlu0 %v1363, 64
        %v2641 = vpop.permute.xlu0 %2640
        %2642 = vrot.lane.b32.xlu0 %v1369, 64
        %v2643 = vpop.permute.xlu0 %2642
        %2644 = vrot.lane.b32.xlu0 %v1373, 64
        %v2645 = vpop.permute.xlu0 %2644
        %2646 = vrot.lane.b32.xlu0 %v1379, 64
        %v2647 = vpop.permute.xlu0 %2646
        %2648 = vrot.lane.b32.xlu0 %v1383, 64
        %v2649 = vpop.permute.xlu0 %2648
        %2650 = vrot.lane.b32.xlu0 %v1389, 64
        %v2651 = vpop.permute.xlu0 %2650
        %2652 = vrot.lane.b32.xlu0 %v1393, 64
        %v2653 = vpop.permute.xlu0 %2652
        %2654 = vrot.lane.b32.xlu0 %v1399, 64
        %v2655 = vpop.permute.xlu0 %2654
        %2656 = vrot.lane.b32.xlu0 %v1403, 64
        %v2657 = vpop.permute.xlu0 %2656
        %2658 = vrot.lane.b32.xlu0 %v1409, 64
        %v2659 = vpop.permute.xlu0 %2658
        %2660 = vrot.lane.b32.xlu0 %v1413, 64
        %v2661 = vpop.permute.xlu0 %2660
        %2662 = vrot.lane.b32.xlu0 %v1419, 64
        %v2663 = vpop.permute.xlu0 %2662
        %2664 = vrot.lane.b32.xlu0 %v1423, 64
        %v2665 = vpop.permute.xlu0 %2664
        %2666 = vrot.lane.b32.xlu0 %v1429, 64
        %v2667 = vpop.permute.xlu0 %2666
        %2668 = vrot.lane.b32.xlu0 %v1433, 64
        %v2669 = vpop.permute.xlu0 %2668
        %2670 = vrot.lane.b32.xlu0 %v1439, 64
        %v2671 = vpop.permute.xlu0 %2670
        %2672 = vrot.lane.b32.xlu0 %v1443, 64
        %v2673 = vpop.permute.xlu0 %2672
        %2674 = vrot.lane.b32.xlu0 %v1449, 64
        %v2675 = vpop.permute.xlu0 %2674
        %2676 = vrot.lane.b32.xlu0 %v1453, 64
        %v2677 = vpop.permute.xlu0 %2676
        %2678 = vrot.lane.b32.xlu0 %v1459, 64
        %v2679 = vpop.permute.xlu0 %2678
        %2680 = vrot.lane.b32.xlu0 %v1463, 64
        %v2681 = vpop.permute.xlu0 %2680
        %v2682 = vmul.f32 %v924, %v1850
        %v2683 = vmul.f32 %v928, %v1851
        %v2684 = vmul.f32 %v934, %v1852
        %v2685 = vmul.f32 %v938, %v1853
        %v2686 = vmul.f32 %v944, %v1854
        %v2687 = vmul.f32 %v948, %v1855
        %v2688 = vmul.f32 %v954, %v1856
        %v2689 = vmul.f32 %v958, %v1857
        %v2690 = vmul.f32 %v964, %v1858
        %v2691 = vmul.f32 %v968, %v1859
        %v2692 = vmul.f32 %v974, %v1860
        %v2693 = vmul.f32 %v978, %v1861
        %v2694 = vmul.f32 %v984, %v1862
        %v2695 = vmul.f32 %v988, %v1863
        %v2696 = vmul.f32 %v994, %v1864
        %v2697 = vmul.f32 %v998, %v1865
        %v2698 = vmul.f32 %v1004, %v1866
        %v2699 = vmul.f32 %v1008, %v1867
        %v2700 = vmul.f32 %v1014, %v1868
        %v2701 = vmul.f32 %v1018, %v1869
        %v2702 = vmul.f32 %v1024, %v1870
        %v2703 = vmul.f32 %v1028, %v1871
        %v2704 = vmul.f32 %v1034, %v1872
        %v2705 = vmul.f32 %v1038, %v1873
        %v2706 = vmul.f32 %v1044, %v1874
        %v2707 = vmul.f32 %v1048, %v1875
        %v2708 = vmul.f32 %v1054, %v1876
        %v2709 = vmul.f32 %v1058, %v1877
        %v2710 = vmul.f32 %v1064, %v1878
        %v2711 = vmul.f32 %v1068, %v1879
        %v2712 = vmul.f32 %v1074, %v1880
        %v2713 = vmul.f32 %v1078, %v1881
        %v2714 = vmul.f32 %v2555, %v1882
        %v2715 = vmul.f32 %v2557, %v1883
        %v2716 = vmul.f32 %v2559, %v1884
        %v2717 = vmul.f32 %v2561, %v1885
        %v2718 = vmul.f32 %v2563, %v1886
        %v2719 = vmul.f32 %v2565, %v1887
        %v2720 = vmul.f32 %v2567, %v1888
        %v2721 = vmul.f32 %v2569, %v1889
        %v2722 = vmul.f32 %v2571, %v1890
        %v2723 = vmul.f32 %v2573, %v1891
        %v2724 = vmul.f32 %v2575, %v1892
        %v2725 = vmul.f32 %v2577, %v1893
        %v2726 = vmul.f32 %v2579, %v1894
        %v2727 = vmul.f32 %v2581, %v1895
        %v2728 = vmul.f32 %v2583, %v1896
        %v2729 = vmul.f32 %v2585, %v1897
        %v2730 = vmul.f32 %v2587, %v1898
        %v2731 = vmul.f32 %v2589, %v1899
        %v2732 = vmul.f32 %v2591, %v1900
        %v2733 = vmul.f32 %v2593, %v1901
        %v2734 = vmul.f32 %v2595, %v1902
        %v2735 = vmul.f32 %v2597, %v1903
        %v2736 = vmul.f32 %v2599, %v1904
        %v2737 = vmul.f32 %v2601, %v1905
        %v2738 = vmul.f32 %v2603, %v1906
        %v2739 = vmul.f32 %v2605, %v1907
        %v2740 = vmul.f32 %v2607, %v1908
        %v2741 = vmul.f32 %v2609, %v1909
        %v2742 = vmul.f32 %v2611, %v1910
        %v2743 = vmul.f32 %v2613, %v1911
        %v2744 = vmul.f32 %v2615, %v1912
        %v2745 = vmul.f32 %v2617, %v1913
        %v2746 = vadd.f32 %v2682, %v2714
        %v2747 = vadd.f32 %v2683, %v2715
        %v2748 = vadd.f32 %v2684, %v2716
        %v2749 = vadd.f32 %v2685, %v2717
        %v2750 = vadd.f32 %v2686, %v2718
        %v2751 = vadd.f32 %v2687, %v2719
        %v2752 = vadd.f32 %v2688, %v2720
        %v2753 = vadd.f32 %v2689, %v2721
        %v2754 = vadd.f32 %v2690, %v2722
        %v2755 = vadd.f32 %v2691, %v2723
        %v2756 = vadd.f32 %v2692, %v2724
        %v2757 = vadd.f32 %v2693, %v2725
        %v2758 = vadd.f32 %v2694, %v2726
        %v2759 = vadd.f32 %v2695, %v2727
        %v2760 = vadd.f32 %v2696, %v2728
        %v2761 = vadd.f32 %v2697, %v2729
        %v2762 = vadd.f32 %v2698, %v2730
        %v2763 = vadd.f32 %v2699, %v2731
        %v2764 = vadd.f32 %v2700, %v2732
        %v2765 = vadd.f32 %v2701, %v2733
        %v2766 = vadd.f32 %v2702, %v2734
        %v2767 = vadd.f32 %v2703, %v2735
        %v2768 = vadd.f32 %v2704, %v2736
        %v2769 = vadd.f32 %v2705, %v2737
        %v2770 = vadd.f32 %v2706, %v2738
        %v2771 = vadd.f32 %v2707, %v2739
        %v2772 = vadd.f32 %v2708, %v2740
        %v2773 = vadd.f32 %v2709, %v2741
        %v2774 = vadd.f32 %v2710, %v2742
        %v2775 = vadd.f32 %v2711, %v2743
        %v2776 = vadd.f32 %v2712, %v2744
        %v2777 = vadd.f32 %v2713, %v2745
        %v2778 = vpack.c.bf16 %v2747, %v2746
        %v2779 = vpack.c.bf16 %v2749, %v2748
        %v2780 = vpack.c.bf16 %v2751, %v2750
        %v2781 = vpack.c.bf16 %v2753, %v2752
        %v2782 = vpack.c.bf16 %v2755, %v2754
        %v2783 = vpack.c.bf16 %v2757, %v2756
        %v2784 = vpack.c.bf16 %v2759, %v2758
        %v2785 = vpack.c.bf16 %v2761, %v2760
        %v2786 = vpack.c.bf16 %v2763, %v2762
        %v2787 = vpack.c.bf16 %v2765, %v2764
        %v2788 = vpack.c.bf16 %v2767, %v2766
        %v2789 = vpack.c.bf16 %v2769, %v2768
        %v2790 = vpack.c.bf16 %v2771, %v2770
        %v2791 = vpack.c.bf16 %v2773, %v2772
        %v2792 = vpack.c.bf16 %v2775, %v2774
        %v2793 = vpack.c.bf16 %v2777, %v2776
        %v2810 = vunpack.c.l.b16 %v2778
        %v2811 = vunpack.c.h.b16 %v2778
        %v2812 = vunpack.c.l.b16 %v2779
        %v2813 = vunpack.c.h.b16 %v2779
        %v2814 = vunpack.c.l.b16 %v2780
        %v2815 = vunpack.c.h.b16 %v2780
        %v2816 = vunpack.c.l.b16 %v2781
        %v2817 = vunpack.c.h.b16 %v2781
        %v2818 = vunpack.c.l.b16 %v2782
        %v2819 = vunpack.c.h.b16 %v2782
        %v2820 = vunpack.c.l.b16 %v2783
        %v2821 = vunpack.c.h.b16 %v2783
        %v2822 = vunpack.c.l.b16 %v2784
        %v2823 = vunpack.c.h.b16 %v2784
        %v2824 = vunpack.c.l.b16 %v2785
        %v2825 = vunpack.c.h.b16 %v2785
        %v2826 = vunpack.c.l.b16 %v2786
        %v2827 = vunpack.c.h.b16 %v2786
        %v2828 = vunpack.c.l.b16 %v2787
        %v2829 = vunpack.c.h.b16 %v2787
        %v2830 = vunpack.c.l.b16 %v2788
        %v2831 = vunpack.c.h.b16 %v2788
        %v2832 = vunpack.c.l.b16 %v2789
        %v2833 = vunpack.c.h.b16 %v2789
        %v2834 = vunpack.c.l.b16 %v2790
        %v2835 = vunpack.c.h.b16 %v2790
        %v2836 = vunpack.c.l.b16 %v2791
        %v2837 = vunpack.c.h.b16 %v2791
        %v2838 = vunpack.c.l.b16 %v2792
        %v2839 = vunpack.c.h.b16 %v2792
        %v2840 = vunpack.c.l.b16 %v2793
        %v2841 = vunpack.c.h.b16 %v2793
        %v2842 = vpack.c.b16 %v2810, %v2810
        %v2843 = vpack.c.b16 %v2811, %v2811
        %v2844 = vpack.c.b16 %v2812, %v2812
        %v2845 = vpack.c.b16 %v2813, %v2813
        %v2846 = vpack.c.b16 %v2814, %v2814
        %v2847 = vpack.c.b16 %v2815, %v2815
        %v2848 = vpack.c.b16 %v2816, %v2816
        %v2849 = vpack.c.b16 %v2817, %v2817
        %v2850 = vpack.c.b16 %v2818, %v2818
        %v2851 = vpack.c.b16 %v2819, %v2819
        %v2852 = vpack.c.b16 %v2820, %v2820
        %v2853 = vpack.c.b16 %v2821, %v2821
        %v2854 = vpack.c.b16 %v2822, %v2822
        %v2855 = vpack.c.b16 %v2823, %v2823
        %v2856 = vpack.c.b16 %v2824, %v2824
        %v2857 = vpack.c.b16 %v2825, %v2825
        %v2858 = vpack.c.b16 %v2826, %v2826
        %v2859 = vpack.c.b16 %v2827, %v2827
        %v2860 = vpack.c.b16 %v2828, %v2828
        %v2861 = vpack.c.b16 %v2829, %v2829
        %v2862 = vpack.c.b16 %v2830, %v2830
        %v2863 = vpack.c.b16 %v2831, %v2831
        %v2864 = vpack.c.b16 %v2832, %v2832
        %v2865 = vpack.c.b16 %v2833, %v2833
        %v2866 = vpack.c.b16 %v2834, %v2834
        %v2867 = vpack.c.b16 %v2835, %v2835
        %v2868 = vpack.c.b16 %v2836, %v2836
        %v2869 = vpack.c.b16 %v2837, %v2837
        %v2870 = vpack.c.b16 %v2838, %v2838
        %v2871 = vpack.c.b16 %v2839, %v2839
        %v2872 = vpack.c.b16 %v2840, %v2840
        %v2873 = vpack.c.b16 %v2841, %v2841
        %2906 = vst [vmem:[%s476 + $0x4] sm:$0xf] %v2842
        %2907 = vst [vmem:[%s476 + $0xc] sm:$0xf] %v2843
        %2908 = vst [vmem:[%s476 + $0x14] sm:$0xf] %v2844
        %2909 = vst [vmem:[%s476 + $0x1c] sm:$0xf] %v2845
        %2910 = vst [vmem:[%s476 + $0x24] sm:$0xf] %v2846
        %2911 = vst [vmem:[%s476 + $0x2c] sm:$0xf] %v2847
        %2912 = vst [vmem:[%s476 + $0x34] sm:$0xf] %v2848
        %2913 = vst [vmem:[%s476 + $0x3c] sm:$0xf] %v2849
        %2914 = vst [vmem:[%s476 + $0x44] sm:$0xf] %v2850
        %2915 = vst [vmem:[%s476 + $0x4c] sm:$0xf] %v2851
        %2916 = vst [vmem:[%s476 + $0x54] sm:$0xf] %v2852
        %2917 = vst [vmem:[%s476 + $0x5c] sm:$0xf] %v2853
        %2918 = vst [vmem:[%s476 + $0x64] sm:$0xf] %v2854
        %2919 = vst [vmem:[%s476 + $0x6c] sm:$0xf] %v2855
        %2920 = vst [vmem:[%s476 + $0x74] sm:$0xf] %v2856
        %2921 = vst [vmem:[%s476 + $0x7c] sm:$0xf] %v2857
        %2922 = vst [vmem:[%s476 + $0x84] sm:$0xf] %v2858
        %2923 = vst [vmem:[%s476 + $0x8c] sm:$0xf] %v2859
        %2924 = vst [vmem:[%s476 + $0x94] sm:$0xf] %v2860
        %2925 = vst [vmem:[%s476 + $0x9c] sm:$0xf] %v2861
        %2926 = vst [vmem:[%s476 + $0xa4] sm:$0xf] %v2862
        %2927 = vst [vmem:[%s476 + $0xac] sm:$0xf] %v2863
        %2928 = vst [vmem:[%s476 + $0xb4] sm:$0xf] %v2864
        %2929 = vst [vmem:[%s476 + $0xbc] sm:$0xf] %v2865
        %2930 = vst [vmem:[%s476 + $0xc4] sm:$0xf] %v2866
        %2931 = vst [vmem:[%s476 + $0xcc] sm:$0xf] %v2867
        %2932 = vst [vmem:[%s476 + $0xd4] sm:$0xf] %v2868
        %2933 = vst [vmem:[%s476 + $0xdc] sm:$0xf] %v2869
        %2934 = vst [vmem:[%s476 + $0xe4] sm:$0xf] %v2870
        %2935 = vst [vmem:[%s476 + $0xec] sm:$0xf] %v2871
        %2936 = vst [vmem:[%s476 + $0xf4] sm:$0xf] %v2872
        %2937 = vst [vmem:[%s476 + $0xfc] sm:$0xf] %v2873
        %v2938 = vmul.f32 %v1309, %v1850
        %v2939 = vmul.f32 %v1313, %v1851
        %v2940 = vmul.f32 %v1319, %v1852
        %v2941 = vmul.f32 %v1323, %v1853
        %v2942 = vmul.f32 %v1329, %v1854
        %v2943 = vmul.f32 %v1333, %v1855
        %v2944 = vmul.f32 %v1339, %v1856
        %v2945 = vmul.f32 %v1343, %v1857
        %v2946 = vmul.f32 %v1349, %v1858
        %v2947 = vmul.f32 %v1353, %v1859
        %v2948 = vmul.f32 %v1359, %v1860
        %v2949 = vmul.f32 %v1363, %v1861
        %v2950 = vmul.f32 %v1369, %v1862
        %v2951 = vmul.f32 %v1373, %v1863
        %v2952 = vmul.f32 %v1379, %v1864
        %v2953 = vmul.f32 %v1383, %v1865
        %v2954 = vmul.f32 %v1389, %v1866
        %v2955 = vmul.f32 %v1393, %v1867
        %v2956 = vmul.f32 %v1399, %v1868
        %v2957 = vmul.f32 %v1403, %v1869
        %v2958 = vmul.f32 %v1409, %v1870
        %v2959 = vmul.f32 %v1413, %v1871
        %v2960 = vmul.f32 %v1419, %v1872
        %v2961 = vmul.f32 %v1423, %v1873
        %v2962 = vmul.f32 %v1429, %v1874
        %v2963 = vmul.f32 %v1433, %v1875
        %v2964 = vmul.f32 %v1439, %v1876
        %v2965 = vmul.f32 %v1443, %v1877
        %v2966 = vmul.f32 %v1449, %v1878
        %v2967 = vmul.f32 %v1453, %v1879
        %v2968 = vmul.f32 %v1459, %v1880
        %v2969 = vmul.f32 %v1463, %v1881
        %v2970 = vmul.f32 %v2619, %v1882
        %v2971 = vmul.f32 %v2621, %v1883
        %v2972 = vmul.f32 %v2623, %v1884
        %v2973 = vmul.f32 %v2625, %v1885
        %v2974 = vmul.f32 %v2627, %v1886
        %v2975 = vmul.f32 %v2629, %v1887
        %v2976 = vmul.f32 %v2631, %v1888
        %v2977 = vmul.f32 %v2633, %v1889
        %v2978 = vmul.f32 %v2635, %v1890
        %v2979 = vmul.f32 %v2637, %v1891
        %v2980 = vmul.f32 %v2639, %v1892
        %v2981 = vmul.f32 %v2641, %v1893
        %v2982 = vmul.f32 %v2643, %v1894
        %v2983 = vmul.f32 %v2645, %v1895
        %v2984 = vmul.f32 %v2647, %v1896
        %v2985 = vmul.f32 %v2649, %v1897
        %v2986 = vmul.f32 %v2651, %v1898
        %v2987 = vmul.f32 %v2653, %v1899
        %v2988 = vmul.f32 %v2655, %v1900
        %v2989 = vmul.f32 %v2657, %v1901
        %v2990 = vmul.f32 %v2659, %v1902
        %v2991 = vmul.f32 %v2661, %v1903
        %v2992 = vmul.f32 %v2663, %v1904
        %v2993 = vmul.f32 %v2665, %v1905
        %v2994 = vmul.f32 %v2667, %v1906
        %v2995 = vmul.f32 %v2669, %v1907
        %v2996 = vmul.f32 %v2671, %v1908
        %v2997 = vmul.f32 %v2673, %v1909
        %v2998 = vmul.f32 %v2675, %v1910
        %v2999 = vmul.f32 %v2677, %v1911
        %v3000 = vmul.f32 %v2679, %v1912
        %v3001 = vmul.f32 %v2681, %v1913
        %v3002 = vadd.f32 %v2938, %v2970
        %v3003 = vadd.f32 %v2939, %v2971
        %v3004 = vadd.f32 %v2940, %v2972
        %v3005 = vadd.f32 %v2941, %v2973
        %v3006 = vadd.f32 %v2942, %v2974
        %v3007 = vadd.f32 %v2943, %v2975
        %v3008 = vadd.f32 %v2944, %v2976
        %v3009 = vadd.f32 %v2945, %v2977
        %v3010 = vadd.f32 %v2946, %v2978
        %v3011 = vadd.f32 %v2947, %v2979
        %v3012 = vadd.f32 %v2948, %v2980
        %v3013 = vadd.f32 %v2949, %v2981
        %v3014 = vadd.f32 %v2950, %v2982
        %v3015 = vadd.f32 %v2951, %v2983
        %v3016 = vadd.f32 %v2952, %v2984
        %v3017 = vadd.f32 %v2953, %v2985
        %v3018 = vadd.f32 %v2954, %v2986
        %v3019 = vadd.f32 %v2955, %v2987
        %v3020 = vadd.f32 %v2956, %v2988
        %v3021 = vadd.f32 %v2957, %v2989
        %v3022 = vadd.f32 %v2958, %v2990
        %v3023 = vadd.f32 %v2959, %v2991
        %v3024 = vadd.f32 %v2960, %v2992
        %v3025 = vadd.f32 %v2961, %v2993
        %v3026 = vadd.f32 %v2962, %v2994
        %v3027 = vadd.f32 %v2963, %v2995
        %v3028 = vadd.f32 %v2964, %v2996
        %v3029 = vadd.f32 %v2965, %v2997
        %v3030 = vadd.f32 %v2966, %v2998
        %v3031 = vadd.f32 %v2967, %v2999
        %v3032 = vadd.f32 %v2968, %v3000
        %v3033 = vadd.f32 %v2969, %v3001
        %v3034 = vpack.c.bf16 %v3003, %v3002
        %v3035 = vpack.c.bf16 %v3005, %v3004
        %v3036 = vpack.c.bf16 %v3007, %v3006
        %v3037 = vpack.c.bf16 %v3009, %v3008
        %v3038 = vpack.c.bf16 %v3011, %v3010
        %v3039 = vpack.c.bf16 %v3013, %v3012
        %v3040 = vpack.c.bf16 %v3015, %v3014
        %v3041 = vpack.c.bf16 %v3017, %v3016
        %v3042 = vpack.c.bf16 %v3019, %v3018
        %v3043 = vpack.c.bf16 %v3021, %v3020
        %v3044 = vpack.c.bf16 %v3023, %v3022
        %v3045 = vpack.c.bf16 %v3025, %v3024
        %v3046 = vpack.c.bf16 %v3027, %v3026
        %v3047 = vpack.c.bf16 %v3029, %v3028
        %v3048 = vpack.c.bf16 %v3031, %v3030
        %v3049 = vpack.c.bf16 %v3033, %v3032
        %v3066 = vunpack.c.l.b16 %v3034
        %v3067 = vunpack.c.h.b16 %v3034
        %v3068 = vunpack.c.l.b16 %v3035
        %v3069 = vunpack.c.h.b16 %v3035
        %v3070 = vunpack.c.l.b16 %v3036
        %v3071 = vunpack.c.h.b16 %v3036
        %v3072 = vunpack.c.l.b16 %v3037
        %v3073 = vunpack.c.h.b16 %v3037
        %v3074 = vunpack.c.l.b16 %v3038
        %v3075 = vunpack.c.h.b16 %v3038
        %v3076 = vunpack.c.l.b16 %v3039
        %v3077 = vunpack.c.h.b16 %v3039
        %v3078 = vunpack.c.l.b16 %v3040
        %v3079 = vunpack.c.h.b16 %v3040
        %v3080 = vunpack.c.l.b16 %v3041
        %v3081 = vunpack.c.h.b16 %v3041
        %v3082 = vunpack.c.l.b16 %v3042
        %v3083 = vunpack.c.h.b16 %v3042
        %v3084 = vunpack.c.l.b16 %v3043
        %v3085 = vunpack.c.h.b16 %v3043
        %v3086 = vunpack.c.l.b16 %v3044
        %v3087 = vunpack.c.h.b16 %v3044
        %v3088 = vunpack.c.l.b16 %v3045
        %v3089 = vunpack.c.h.b16 %v3045
        %v3090 = vunpack.c.l.b16 %v3046
        %v3091 = vunpack.c.h.b16 %v3046
        %v3092 = vunpack.c.l.b16 %v3047
        %v3093 = vunpack.c.h.b16 %v3047
        %v3094 = vunpack.c.l.b16 %v3048
        %v3095 = vunpack.c.h.b16 %v3048
        %v3096 = vunpack.c.l.b16 %v3049
        %v3097 = vunpack.c.h.b16 %v3049
        %v3098 = vpack.c.b16 %v3066, %v3066
        %v3099 = vpack.c.b16 %v3067, %v3067
        %v3100 = vpack.c.b16 %v3068, %v3068
        %v3101 = vpack.c.b16 %v3069, %v3069
        %v3102 = vpack.c.b16 %v3070, %v3070
        %v3103 = vpack.c.b16 %v3071, %v3071
        %v3104 = vpack.c.b16 %v3072, %v3072
        %v3105 = vpack.c.b16 %v3073, %v3073
        %v3106 = vpack.c.b16 %v3074, %v3074
        %v3107 = vpack.c.b16 %v3075, %v3075
        %v3108 = vpack.c.b16 %v3076, %v3076
        %v3109 = vpack.c.b16 %v3077, %v3077
        %v3110 = vpack.c.b16 %v3078, %v3078
        %v3111 = vpack.c.b16 %v3079, %v3079
        %v3112 = vpack.c.b16 %v3080, %v3080
        %v3113 = vpack.c.b16 %v3081, %v3081
        %v3114 = vpack.c.b16 %v3082, %v3082
        %v3115 = vpack.c.b16 %v3083, %v3083
        %v3116 = vpack.c.b16 %v3084, %v3084
        %v3117 = vpack.c.b16 %v3085, %v3085
        %v3118 = vpack.c.b16 %v3086, %v3086
        %v3119 = vpack.c.b16 %v3087, %v3087
        %v3120 = vpack.c.b16 %v3088, %v3088
        %v3121 = vpack.c.b16 %v3089, %v3089
        %v3122 = vpack.c.b16 %v3090, %v3090
        %v3123 = vpack.c.b16 %v3091, %v3091
        %v3124 = vpack.c.b16 %v3092, %v3092
        %v3125 = vpack.c.b16 %v3093, %v3093
        %v3126 = vpack.c.b16 %v3094, %v3094
        %v3127 = vpack.c.b16 %v3095, %v3095
        %v3128 = vpack.c.b16 %v3096, %v3096
        %v3129 = vpack.c.b16 %v3097, %v3097
        %3162 = vst [vmem:[%s483 + $0x4] sm:$0xf] %v3098
        %3163 = vst [vmem:[%s483 + $0xc] sm:$0xf] %v3099
        %3164 = vst [vmem:[%s483 + $0x14] sm:$0xf] %v3100
        %3165 = vst [vmem:[%s483 + $0x1c] sm:$0xf] %v3101
        %3166 = vst [vmem:[%s483 + $0x24] sm:$0xf] %v3102
        %3167 = vst [vmem:[%s483 + $0x2c] sm:$0xf] %v3103
        %3168 = vst [vmem:[%s483 + $0x34] sm:$0xf] %v3104
        %3169 = vst [vmem:[%s483 + $0x3c] sm:$0xf] %v3105
        %3170 = vst [vmem:[%s483 + $0x44] sm:$0xf] %v3106
        %3171 = vst [vmem:[%s483 + $0x4c] sm:$0xf] %v3107
        %3172 = vst [vmem:[%s483 + $0x54] sm:$0xf] %v3108
        %3173 = vst [vmem:[%s483 + $0x5c] sm:$0xf] %v3109
        %3174 = vst [vmem:[%s483 + $0x64] sm:$0xf] %v3110
        %3175 = vst [vmem:[%s483 + $0x6c] sm:$0xf] %v3111
        %3176 = vst [vmem:[%s483 + $0x74] sm:$0xf] %v3112
        %3177 = vst [vmem:[%s483 + $0x7c] sm:$0xf] %v3113
        %3178 = vst [vmem:[%s483 + $0x84] sm:$0xf] %v3114
        %3179 = vst [vmem:[%s483 + $0x8c] sm:$0xf] %v3115
        %3180 = vst [vmem:[%s483 + $0x94] sm:$0xf] %v3116
        %3181 = vst [vmem:[%s483 + $0x9c] sm:$0xf] %v3117
        %3182 = vst [vmem:[%s483 + $0xa4] sm:$0xf] %v3118
        %3183 = vst [vmem:[%s483 + $0xac] sm:$0xf] %v3119
        %3184 = vst [vmem:[%s483 + $0xb4] sm:$0xf] %v3120
        %3185 = vst [vmem:[%s483 + $0xbc] sm:$0xf] %v3121
        %3186 = vst [vmem:[%s483 + $0xc4] sm:$0xf] %v3122
        %3187 = vst [vmem:[%s483 + $0xcc] sm:$0xf] %v3123
        %3188 = vst [vmem:[%s483 + $0xd4] sm:$0xf] %v3124
        %3189 = vst [vmem:[%s483 + $0xdc] sm:$0xf] %v3125
        %3190 = vst [vmem:[%s483 + $0xe4] sm:$0xf] %v3126
        %3191 = vst [vmem:[%s483 + $0xec] sm:$0xf] %v3127
        %3192 = vst [vmem:[%s483 + $0xf4] sm:$0xf] %v3128
        %3193 = vst [vmem:[%s483 + $0xfc] sm:$0xf] %v3129
        %v3194 = vpack.c.bf16 %v1696, %v1692
        %v3195 = vpack.c.bf16 %v1698, %v1694
        %v3196 = vpack.c.bf16 %v1706, %v1702
        %v3197 = vpack.c.bf16 %v1708, %v1704
        %v3198 = vpack.c.bf16 %v1716, %v1712
        %v3199 = vpack.c.bf16 %v1718, %v1714
        %v3200 = vpack.c.bf16 %v1726, %v1722
        %v3201 = vpack.c.bf16 %v1728, %v1724
        %v3202 = vpack.c.bf16 %v1736, %v1732
        %v3203 = vpack.c.bf16 %v1738, %v1734
        %v3204 = vpack.c.bf16 %v1746, %v1742
        %v3205 = vpack.c.bf16 %v1748, %v1744
        %v3206 = vpack.c.bf16 %v1756, %v1752
        %v3207 = vpack.c.bf16 %v1758, %v1754
        %v3208 = vpack.c.bf16 %v1766, %v1762
        %v3209 = vpack.c.bf16 %v1768, %v1764
        %v3210 = vpack.c.bf16 %v1776, %v1772
        %v3211 = vpack.c.bf16 %v1778, %v1774
        %v3212 = vpack.c.bf16 %v1786, %v1782
        %v3213 = vpack.c.bf16 %v1788, %v1784
        %v3214 = vpack.c.bf16 %v1796, %v1792
        %v3215 = vpack.c.bf16 %v1798, %v1794
        %v3216 = vpack.c.bf16 %v1806, %v1802
        %v3217 = vpack.c.bf16 %v1808, %v1804
        %v3218 = vpack.c.bf16 %v1816, %v1812
        %v3219 = vpack.c.bf16 %v1818, %v1814
        %v3220 = vpack.c.bf16 %v1826, %v1822
        %v3221 = vpack.c.bf16 %v1828, %v1824
        %v3222 = vpack.c.bf16 %v1836, %v1832
        %v3223 = vpack.c.bf16 %v1838, %v1834
        %v3224 = vpack.c.bf16 %v1846, %v1842
        %v3225 = vpack.c.bf16 %v1848, %v1844
        %v3258 = vunpack.c.l.b16 %v3194
        %v3259 = vunpack.c.l.b16 %v3195
        %v3260 = vunpack.c.h.b16 %v3194
        %v3261 = vunpack.c.h.b16 %v3195
        %v3262 = vunpack.c.l.b16 %v3196
        %v3263 = vunpack.c.l.b16 %v3197
        %v3264 = vunpack.c.h.b16 %v3196
        %v3265 = vunpack.c.h.b16 %v3197
        %v3266 = vunpack.c.l.b16 %v3198
        %v3267 = vunpack.c.l.b16 %v3199
        %v3268 = vunpack.c.h.b16 %v3198
        %v3269 = vunpack.c.h.b16 %v3199
        %v3270 = vunpack.c.l.b16 %v3200
        %v3271 = vunpack.c.l.b16 %v3201
        %v3272 = vunpack.c.h.b16 %v3200
        %v3273 = vunpack.c.h.b16 %v3201
        %v3274 = vunpack.c.l.b16 %v3202
        %v3275 = vunpack.c.l.b16 %v3203
        %v3276 = vunpack.c.h.b16 %v3202
        %v3277 = vunpack.c.h.b16 %v3203
        %v3278 = vunpack.c.l.b16 %v3204
        %v3279 = vunpack.c.l.b16 %v3205
        %v3280 = vunpack.c.h.b16 %v3204
        %v3281 = vunpack.c.h.b16 %v3205
        %v3282 = vunpack.c.l.b16 %v3206
        %v3283 = vunpack.c.l.b16 %v3207
        %v3284 = vunpack.c.h.b16 %v3206
        %v3285 = vunpack.c.h.b16 %v3207
        %v3286 = vunpack.c.l.b16 %v3208
        %v3287 = vunpack.c.l.b16 %v3209
        %v3288 = vunpack.c.h.b16 %v3208
        %v3289 = vunpack.c.h.b16 %v3209
        %v3290 = vunpack.c.l.b16 %v3210
        %v3291 = vunpack.c.l.b16 %v3211
        %v3292 = vunpack.c.h.b16 %v3210
        %v3293 = vunpack.c.h.b16 %v3211
        %v3294 = vunpack.c.l.b16 %v3212
        %v3295 = vunpack.c.l.b16 %v3213
        %v3296 = vunpack.c.h.b16 %v3212
        %v3297 = vunpack.c.h.b16 %v3213
        %v3298 = vunpack.c.l.b16 %v3214
        %v3299 = vunpack.c.l.b16 %v3215
        %v3300 = vunpack.c.h.b16 %v3214
        %v3301 = vunpack.c.h.b16 %v3215
        %v3302 = vunpack.c.l.b16 %v3216
        %v3303 = vunpack.c.l.b16 %v3217
        %v3304 = vunpack.c.h.b16 %v3216
        %v3305 = vunpack.c.h.b16 %v3217
        %v3306 = vunpack.c.l.b16 %v3218
        %v3307 = vunpack.c.l.b16 %v3219
        %v3308 = vunpack.c.h.b16 %v3218
        %v3309 = vunpack.c.h.b16 %v3219
        %v3310 = vunpack.c.l.b16 %v3220
        %v3311 = vunpack.c.l.b16 %v3221
        %v3312 = vunpack.c.h.b16 %v3220
        %v3313 = vunpack.c.h.b16 %v3221
        %v3314 = vunpack.c.l.b16 %v3222
        %v3315 = vunpack.c.l.b16 %v3223
        %v3316 = vunpack.c.h.b16 %v3222
        %v3317 = vunpack.c.h.b16 %v3223
        %v3318 = vunpack.c.l.b16 %v3224
        %v3319 = vunpack.c.l.b16 %v3225
        %v3320 = vunpack.c.h.b16 %v3224
        %v3321 = vunpack.c.h.b16 %v3225
        %v3322 = vpack.c.b16 %v3259, %v3258
        %v3323 = vpack.c.b16 %v3261, %v3260
        %v3324 = vpack.c.b16 %v3263, %v3262
        %v3325 = vpack.c.b16 %v3265, %v3264
        %v3326 = vpack.c.b16 %v3267, %v3266
        %v3327 = vpack.c.b16 %v3269, %v3268
        %v3328 = vpack.c.b16 %v3271, %v3270
        %v3329 = vpack.c.b16 %v3273, %v3272
        %v3330 = vpack.c.b16 %v3275, %v3274
        %v3331 = vpack.c.b16 %v3277, %v3276
        %v3332 = vpack.c.b16 %v3279, %v3278
        %v3333 = vpack.c.b16 %v3281, %v3280
        %v3334 = vpack.c.b16 %v3283, %v3282
        %v3335 = vpack.c.b16 %v3285, %v3284
        %v3336 = vpack.c.b16 %v3287, %v3286
        %v3337 = vpack.c.b16 %v3289, %v3288
        %v3338 = vpack.c.b16 %v3291, %v3290
        %v3339 = vpack.c.b16 %v3293, %v3292
        %v3340 = vpack.c.b16 %v3295, %v3294
        %v3341 = vpack.c.b16 %v3297, %v3296
        %v3342 = vpack.c.b16 %v3299, %v3298
        %v3343 = vpack.c.b16 %v3301, %v3300
        %v3344 = vpack.c.b16 %v3303, %v3302
        %v3345 = vpack.c.b16 %v3305, %v3304
        %v3346 = vpack.c.b16 %v3307, %v3306
        %v3347 = vpack.c.b16 %v3309, %v3308
        %v3348 = vpack.c.b16 %v3311, %v3310
        %v3349 = vpack.c.b16 %v3313, %v3312
        %v3350 = vpack.c.b16 %v3315, %v3314
        %v3351 = vpack.c.b16 %v3317, %v3316
        %v3352 = vpack.c.b16 %v3319, %v3318
        %v3353 = vpack.c.b16 %v3321, %v3320
        %3386 = vst [vmem:[%s490] sm:$0xff] %v3322
        %3387 = vst [vmem:[%s490 + $0x8] sm:$0xff] %v3323
        %3388 = vst [vmem:[%s490 + $0x10] sm:$0xff] %v3324
        %3389 = vst [vmem:[%s490 + $0x18] sm:$0xff] %v3325
        %3390 = vst [vmem:[%s490 + $0x20] sm:$0xff] %v3326
        %3391 = vst [vmem:[%s490 + $0x28] sm:$0xff] %v3327
        %3392 = vst [vmem:[%s490 + $0x30] sm:$0xff] %v3328
        %3393 = vst [vmem:[%s490 + $0x38] sm:$0xff] %v3329
        %3394 = vst [vmem:[%s490 + $0x40] sm:$0xff] %v3330
        %3395 = vst [vmem:[%s490 + $0x48] sm:$0xff] %v3331
        %3396 = vst [vmem:[%s490 + $0x50] sm:$0xff] %v3332
        %3397 = vst [vmem:[%s490 + $0x58] sm:$0xff] %v3333
        %3398 = vst [vmem:[%s490 + $0x60] sm:$0xff] %v3334
        %3399 = vst [vmem:[%s490 + $0x68] sm:$0xff] %v3335
        %3400 = vst [vmem:[%s490 + $0x70] sm:$0xff] %v3336
        %3401 = vst [vmem:[%s490 + $0x78] sm:$0xff] %v3337
        %3402 = vst [vmem:[%s490 + $0x80] sm:$0xff] %v3338
        %3403 = vst [vmem:[%s490 + $0x88] sm:$0xff] %v3339
        %3404 = vst [vmem:[%s490 + $0x90] sm:$0xff] %v3340
        %3405 = vst [vmem:[%s490 + $0x98] sm:$0xff] %v3341
        %3406 = vst [vmem:[%s490 + $0xa0] sm:$0xff] %v3342
        %3407 = vst [vmem:[%s490 + $0xa8] sm:$0xff] %v3343
        %3408 = vst [vmem:[%s490 + $0xb0] sm:$0xff] %v3344
        %3409 = vst [vmem:[%s490 + $0xb8] sm:$0xff] %v3345
        %3410 = vst [vmem:[%s490 + $0xc0] sm:$0xff] %v3346
        %3411 = vst [vmem:[%s490 + $0xc8] sm:$0xff] %v3347
        %3412 = vst [vmem:[%s490 + $0xd0] sm:$0xff] %v3348
        %3413 = vst [vmem:[%s490 + $0xd8] sm:$0xff] %v3349
        %3414 = vst [vmem:[%s490 + $0xe0] sm:$0xff] %v3350
        %3415 = vst [vmem:[%s490 + $0xe8] sm:$0xff] %v3351
        %3416 = vst [vmem:[%s490 + $0xf0] sm:$0xff] %v3352
        %3417 = vst [vmem:[%s490 + $0xf8] sm:$0xff] %v3353
        %s3418 = sand.u32 %s221, 1
        %s3419 = scalar_lea.sflag [#allocation4], %s3418
        %s3420 = sand.u32 %s221, 1
        %s3421 = smul.addr %s3420, 256
        %s3422 = scalar_lea.vmem [#allocation13], %s3421
        %s3423 = sand.u32 %s32, 1
        %s3424 = scalar_lea.sflag [#allocation15], %s3423
        %s3425 = sand.u32 %s251, 1
        %s3426 = smul.addr %s3425, 256
        %s3427 = scalar_lea.vmem [#allocation14], %s3426
        %s3428 = sand.u32 %s32, 1
        %s3429 = scalar_lea.sflag [#allocation15], %s3428
        %s3430 = sand.u32 %s281, 1
        %s3431 = smul.addr %s3430, 256
        %s3432 = scalar_lea.vmem [#allocation16], %s3431
        // Predicated region
        $region69: #{tpu_custom_call.1} parent=43 // pred_check
          %p3433 = pneg %p231
        $region70: #{tpu_custom_call.1} parent=43 // pred_check_branch
          %3435 = sbr.rel (%p3433) target = $region72
        $region71: #{tpu_custom_call.1} parent=43 // pred_region
          %s3436 = smul.u32 32, %s39
          %s3437 = smul.u32 2, %s38
          %s3439 = ssub.s32 4096, 4096
          %3440 = vsyncadd %s3419, %s3439
          %s3441 = smul.addr %s3436, 2
          %s3442 = sadd.s32 %s3437, %s3441
          %s3443 = smul.addr %s37, 64
          %s3444 = sadd.s32 %s3442, %s3443
          %s3445 = smul.addr %s3444, 64
          %s3446 = scalar_lea.hbm %s6, %s3445
          %s3447 = sshll.u32 %s3422, 4
          %s3448 = int_to_ptr.vmem [resolvable:$true] %s3447
          %3453 = dma.vmem_to_hbm [thread:$0]  %s3448, 4096, %s3446, %s3419, 128, 128, 8
        $region72: #{tpu_custom_call.1} parent=43 // pred_fallthru
          _
        // Predicated region
        $region73: #{tpu_custom_call.1} parent=43 // pred_check
          %p3454 = pneg %p261
        $region74: #{tpu_custom_call.1} parent=43 // pred_check_branch
          %3456 = sbr.rel (%p3454) target = $region76
        $region75: #{tpu_custom_call.1} parent=43 // pred_region
          %s3457 = smul.u32 32, %s39
          %s3458 = smul.u32 2, %s38
          %s3460 = ssub.s32 4096, 4096
          %3461 = vsyncadd %s3424, %s3460
          %s3462 = smul.addr %s3457, 2
          %s3463 = sadd.s32 %s3458, %s3462
          %s3464 = smul.addr %s37, 64
          %s3465 = sadd.s32 %s3463, %s3464
          %s3466 = smul.addr %s3465, 64
          %s3467 = scalar_lea.hbm %s7, %s3466
          %s3468 = sshll.u32 %s3427, 4
          %s3469 = int_to_ptr.vmem [resolvable:$true] %s3468
          %3474 = dma.vmem_to_hbm [thread:$0]  %s3469, 4096, %s3467, %s3424, 128, 128, 8
        $region76: #{tpu_custom_call.1} parent=43 // pred_fallthru
          _
        // Predicated region
        $region77: #{tpu_custom_call.1} parent=43 // pred_check
          %p3475 = pneg %p291
        $region78: #{tpu_custom_call.1} parent=43 // pred_check_branch
          %3477 = sbr.rel (%p3475) target = $region80
        $region79: #{tpu_custom_call.1} parent=43 // pred_region
          %s3478 = smul.u32 32, %s39
          %s3479 = smul.u32 2, %s38
          %s3481 = ssub.s32 4096, 4096
          %3482 = vsyncadd %s3429, %s3481
          %s3483 = smul.addr %s3478, 2
          %s3484 = sadd.s32 %s3479, %s3483
          %s3485 = smul.addr %s37, 64
          %s3486 = sadd.s32 %s3484, %s3485
          %s3487 = smul.addr %s3486, 64
          %s3488 = scalar_lea.hbm %s8, %s3487
          %s3489 = sshll.u32 %s3432, 4
          %s3490 = int_to_ptr.vmem [resolvable:$true] %s3489
          %3495 = dma.vmem_to_hbm [thread:$0]  %s3490, 4096, %s3488, %s3429, 128, 128, 8
        $region80: #{tpu_custom_call.1} parent=43 // pred_fallthru
          _
      $region44: #{tpu_custom_call.1} parent=5 // pred_fallthru
        _
      %p3496 = scmp.le.s32.totalorder 2, %s27
      // Predicated region
      $region81: #{tpu_custom_call.1} parent=5 // pred_check
        %p3497 = pneg %p3496
      $region82: #{tpu_custom_call.1} parent=5 // pred_check_branch
        %3499 = sbr.rel (%p3497) target = $region84
      $region83: #{tpu_custom_call.1} parent=5 // pred_region
        %s3500 = ssub.s32 %s27, 2
        // Predicated region
        $region85: #{tpu_custom_call.1} parent=83 // pred_check
          %p3501 = pneg %p237
        $region86: #{tpu_custom_call.1} parent=83 // pred_check_branch
          %3503 = sbr.rel (%p3501) target = $region88
        $region87: #{tpu_custom_call.1} parent=83 // pred_region
          %s3504 = sand.u32 %s222, 1
          %s3505 = scalar_lea.sflag [#allocation4], %s3504
          %s3506 = sand.u32 %s222, 1
          %s3507 = smul.addr %s3506, 256
          %s3508 = scalar_lea.vmem [#allocation13], %s3507
          %3509 = dma.done %s3505, 4096
        $region88: #{tpu_custom_call.1} parent=83 // pred_fallthru
          _
        // Predicated region
        $region89: #{tpu_custom_call.1} parent=83 // pred_check
          %p3510 = pneg %p267
        $region90: #{tpu_custom_call.1} parent=83 // pred_check_branch
          %3512 = sbr.rel (%p3510) target = $region92
        $region91: #{tpu_custom_call.1} parent=83 // pred_region
          %s3513 = sand.u32 %s33, 1
          %s3514 = scalar_lea.sflag [#allocation15], %s3513
          %s3515 = sand.u32 %s252, 1
          %s3516 = smul.addr %s3515, 256
          %s3517 = scalar_lea.vmem [#allocation14], %s3516
          %3518 = dma.done %s3514, 4096
        $region92: #{tpu_custom_call.1} parent=83 // pred_fallthru
          _
        // Predicated region
        $region93: #{tpu_custom_call.1} parent=83 // pred_check
          %p3519 = pneg %p297
        $region94: #{tpu_custom_call.1} parent=83 // pred_check_branch
          %3521 = sbr.rel (%p3519) target = $region96
        $region95: #{tpu_custom_call.1} parent=83 // pred_region
          %s3522 = sand.u32 %s33, 1
          %s3523 = scalar_lea.sflag [#allocation15], %s3522
          %s3524 = sand.u32 %s282, 1
          %s3525 = smul.addr %s3524, 256
          %s3526 = scalar_lea.vmem [#allocation16], %s3525
          %3527 = dma.done %s3523, 4096
        $region96: #{tpu_custom_call.1} parent=83 // pred_fallthru
          _
      $region84: #{tpu_custom_call.1} parent=5 // pred_fallthru
        _
    $region6: #{tpu_custom_call.1} parent=1 // loop_footer
      %s31 = sadd.s32 1, %s27
    $region7: #{tpu_custom_call.1} parent=1 // loop_footer_branch
      %26 = sbr.rel target = $region3
    $region8: #{tpu_custom_call.1} parent=1 // loop_exit
      _
    %3528 = vsyncpa [#allocation3], 1
    %s3529 = scalar_lea.sflag [#allocation3], 1
    %3530 = vsyncpa %s3529, 1
    %3531 = vsyncpa [#allocation6], 1
    %3532 = vsyncpa [#allocation9], 1
    %3533 = vsyncpa [#allocation12], 1
    %3534 = vsyncpa [#allocation4], 1
    %s3535 = scalar_lea.sflag [#allocation4], 1
    %3536 = vsyncpa %s3535, 1
    %3537 = vsyncpa [#allocation15], 1
    %s3538 = scalar_lea.sflag [#allocation15], 1
    %3539 = vsyncpa %s3538, 1

</llo_original>
